<compile_context>
chip_gen: v5e
topology: v5e:2x2
jax: 0.10.0
libtpu: 0.0.40
codegen_flags: <defaults>
</compile_context>

<pallas_src>
import functools

import jax
import jax.numpy as jnp
from jax import lax
from jax.experimental import pallas as pl
from jax.experimental.pallas import tpu as pltpu


def _silu(v):
    return v * jax.nn.sigmoid(v)


def _round_up(n, m):
    return ((n + m - 1) // m) * m


def _vmem_limit_bytes(default=48 << 20):
    """Per-generation VMEM budget, leaving 16 MiB headroom for Mosaic internal
    scratch, semaphores and the double-buffered BlockSpec windows."""
    try:
        cap = int(pltpu.get_tpu_info().vmem_capacity_bytes)
    except Exception:
        return default
    return int(max(cap - (16 << 20), 32 << 20))


def _select_tile_e(n_pad, n_edges, vmem_limit):
    """Edge-tile size derived from the chip's VMEM capacity (v5e/v6e get a ~2x
    larger tile than v7x).  Per-tile incidence footprint is roughly
    g_both (tile*2N bf16) + g_srcT (N*tile bf16) + int32 iota transients
    ~= 14 bytes per (edge, node) pair."""
    budget = max(vmem_limit // 3, 8 << 20)
    tile = budget // (14 * max(n_pad, 1))
    tile = max((tile // 128) * 128, 128)
    tile = min(tile, max(_round_up(n_edges, 128), 128), 8192)
    return int(tile)


def dimes_kernel(
    # data
    x_ref, eattr_ref, esrc_c_ref, edst_c_ref, esrc_r_ref,
    # EmbNet weights
    v_lin0_w_ref, v_lin0_b_ref, e_lin0_w_ref, e_lin0_b_ref,
    vproj_w_ref, vproj_b_ref, e0_w_ref, e0_b_ref,
    vbn_s_ref, vbn_b_ref, ebn_s_ref, ebn_b_ref,
    # ParNet weights
    par_w_ref, par_b_ref, par_wl_ref, par_bl_ref,
    # output
    out_ref,
    # scratch (persists across the whole (layer, edge-tile) grid)
    x_scr, w_scr, agg_scr, x1_scr, rhs_scr,
    *, n_pad, tile_e, units, depth, par_depth,
):
    f32 = jnp.float32
    bf16 = jnp.bfloat16
    U = units
    layer = pl.program_id(0)          # EmbNet layer index
    t = pl.program_id(1)              # edge-tile index
    n_tiles = pl.num_programs(1)

    # ---------------- layer-0 initial embeddings --------------------------
    @pl.when(jnp.logical_and(layer == 0, t == 0))
    def _():
        xin = x_ref[...].astype(bf16)                                  # (N, F)
        x_scr[...] = _silu(
            jnp.dot(xin, v_lin0_w_ref[...], preferred_element_type=f32)
            + v_lin0_b_ref[...])

    @pl.when(layer == 0)
    def _():
        # e_lin0 is a 1 -> U linear: contraction over a size-1 axis == bcast mul
        w_scr[t] = _silu(eattr_ref[...] * e_lin0_w_ref[...] + e_lin0_b_ref[...])

    # -------- per-layer node-side projections (once per layer, tile 0) ----
    # Fused weight column order is [W1 | W3 | 0 | W4 | W2] (U, 5U), so the
    # matmul output can be copied straight into the gather RHS halves without
    # any lane-axis concatenate or a per-layer zero-block build.
    @pl.when(t == 0)
    def _():
        x0 = x_scr[...].astype(bf16)                                   # (N, U)
        xproj = jnp.dot(x0, vproj_w_ref[0],
                        preferred_element_type=f32) + vproj_b_ref[0]   # (N, 5U)
        x1_scr[...] = xproj[:, 0:U]                                    # x1
        rhs_scr[0:n_pad, :] = xproj[:, U:3 * U].astype(bf16)           # [x3 | 0]
        rhs_scr[n_pad:2 * n_pad, :] = xproj[:, 3 * U:5 * U].astype(bf16)  # [x4 | x2]
        agg_scr[...] = jnp.zeros_like(agg_scr)

    # ---------------- per-edge-tile message passing ------------------------
    esrc_c = esrc_c_ref[...]                      # (tile_e, 1) int32 (sublane)
    edst_c = edst_c_ref[...]

    # Gather incidence [one_hot(src) | one_hot(dst)]  (tile_e, 2N) bf16.
    # Padded edges carry an out-of-range negative index -> all-zero row.
    col2 = lax.broadcasted_iota(jnp.int32, (tile_e, 2 * n_pad), 1)
    g_both = jnp.logical_or(col2 == esrc_c,
                            col2 == edst_c + n_pad).astype(bf16)
    # Scatter incidence, built pre-transposed (N, tile_e) from the lane-dense
    # (1, tile_e) index so the scatter-add is a plain MXU matmul
    # (no per-layer XLU transpose).
    row = lax.broadcasted_iota(jnp.int32, (n_pad, tile_e), 0)
    g_srcT = (row == esrc_r_ref[...]).astype(bf16)

    w0 = w_scr[t]                                                  # (tile_e, U)
    w1 = jnp.dot(w0.astype(bf16), e0_w_ref[0],
                 preferred_element_type=f32) + e0_b_ref[0]
    w2 = jax.nn.sigmoid(w0)

    # ONE fused gather matmul (tile_e, 2N) @ (2N, 2U):
    #   lanes [0, U)  = x3[src] + x4[dst]     lanes [U, 2U) = x2[dst]
    gath = jnp.dot(g_both, rhs_scr[...], preferred_element_type=f32)
    x3s_x4d = gath[:, 0:U]
    x2_dst = gath[:, U:2 * U]

    msg = w2 * x2_dst
    # scatter-sum onto edge_index[0]:
    agg_scr[...] += jnp.dot(g_srcT, msg.astype(bf16),
                            preferred_element_type=f32)                # (N, U)

    he = (w1 + x3s_x4d) * ebn_s_ref[0] + ebn_b_ref[0]   # eval-mode BN (folded)
    w_new = w0 + _silu(he)
    w_scr[t] = w_new

    # -------- node update: finalize after the last edge tile of the layer --
    @pl.when(t == n_tiles - 1)
    def _():
        hv = (x1_scr[...] + agg_scr[...]) * vbn_s_ref[0] + vbn_b_ref[0]
        x_scr[...] = x_scr[...] + _silu(hv)

    # -------- ParNet head on the final edge embeddings ----------------------
    @pl.when(layer == depth - 1)
    def _():
        h = w_new
        for j in range(par_depth - 1):
            h = _silu(jnp.dot(h.astype(bf16), par_w_ref[j],
                              preferred_element_type=f32) + par_b_ref[j])
        # final U -> 1 linear, emitted lane-dense as (1, tile_e)
        out = lax.dot_general(par_wl_ref[...], h.astype(bf16),
                              dimension_numbers=(((1,), (1,)), ((), ())),
                              preferred_element_type=f32) + par_bl_ref[...]
        out_ref[...] = out.astype(out_ref.dtype)

    @pl.when(layer < depth - 1)
    def _():
        out_ref[...] = jnp.zeros_like(out_ref)


def init_params(key, feats, units, depth, par_depth):
    """Raw, unfused f32 parameters (mirrors the PyTorch module layout)."""
    keys = iter(jax.random.split(key, 256))

    def lin(kin, kout):
        bound = 1.0 / float(kin) ** 0.5
        wgt = jax.random.uniform(next(keys), (kin, kout), jnp.float32, -bound, bound)
        bias = jax.random.uniform(next(keys), (1, kout), jnp.float32, -bound, bound)
        return wgt, bias

    def lin_stack(n, kin, kout):
        ws, bs = zip(*(lin(kin, kout) for _ in range(n)))
        return jnp.stack(ws), jnp.stack(bs)          # (n,kin,kout), (n,1,kout)

    def bn_stack(n, u, eps=1e-5):
        gamma = 1.0 + 0.1 * jax.random.normal(next(keys), (n, 1, u), jnp.float32)
        beta = 0.05 * jax.random.normal(next(keys), (n, 1, u), jnp.float32)
        mean = 0.05 * jax.random.normal(next(keys), (n, 1, u), jnp.float32)
        var = 1.0 + 0.1 * jnp.abs(jax.random.normal(next(keys), (n, 1, u), jnp.float32))
        scale = gamma * lax.rsqrt(var + eps)
        bias = beta - mean * scale
        return scale, bias

    p = {}
    p['v_lin0_w'], p['v_lin0_b'] = lin(feats, units)
    p['e_lin0_w'], p['e_lin0_b'] = lin(1, units)
    for name in ('v1', 'v2', 'v3', 'v4', 'e0'):
        p[name + '_w'], p[name + '_b'] = lin_stack(depth, units, units)
    p['vbn_s'], p['vbn_b'] = bn_stack(depth, units)
    p['ebn_s'], p['ebn_b'] = bn_stack(depth, units)
    p['par_w'], p['par_b'] = lin_stack(par_depth - 1, units, units)
    wl, bl = lin(units, 1)
    p['par_wl'] = wl.reshape(1, units)               # stored lane-major (1, U)
    p['par_bl'] = bl                                 # (1, 1)
    return p


def prepare_kernel_params(p):
    """Fuse the node projections as [W1 | W3 | 0 | W4 | W2] (gather-RHS layout
    baked in, including the zero block), cast MXU weights to bf16."""
    bf16 = jnp.bfloat16
    zero_w = jnp.zeros_like(p['v1_w'])               # (depth, U, U)
    zero_b = jnp.zeros_like(p['v1_b'])               # (depth, 1, U)
    vproj_w = jnp.concatenate(
        [p['v1_w'], p['v3_w'], zero_w, p['v4_w'], p['v2_w']], axis=-1).astype(bf16)
    vproj_b = jnp.concatenate(
        [p['v1_b'], p['v3_b'], zero_b, p['v4_b'], p['v2_b']], axis=-1)
    return dict(
        v_lin0_w=p['v_lin0_w'].astype(bf16), v_lin0_b=p['v_lin0_b'],
        e_lin0_w=p['e_lin0_w'], e_lin0_b=p['e_lin0_b'],
        vproj_w=vproj_w, vproj_b=vproj_b,
        e0_w=p['e0_w'].astype(bf16), e0_b=p['e0_b'],
        vbn_s=p['vbn_s'], vbn_b=p['vbn_b'], ebn_s=p['ebn_s'], ebn_b=p['ebn_b'],
        par_w=p['par_w'].astype(bf16), par_b=p['par_b'],
        par_wl=p['par_wl'].astype(bf16), par_bl=p['par_bl'],
    )


def dimes_net_forward(x, edge_index, edge_attr, kp,
                      *, depth, par_depth, units, tile_e=None):
    n_nodes, feats = int(x.shape[0]), int(x.shape[1])
    n_edges = int(edge_index.shape[1])
    assert par_depth >= 2

    # pad so 2N is a multiple of 128 and E is a multiple of the edge tile
    n_pad = _round_up(max(n_nodes, 8), 64)
    vmem_limit = _vmem_limit_bytes()
    if tile_e is None:
        tile_e = _select_tile_e(n_pad, n_edges, vmem_limit)
    e_pad = _round_up(max(n_edges, 1), tile_e)
    num_tiles = e_pad // tile_e
    U = units

    # padded edges get an out-of-range negative index: they gather zeros and
    # scatter nothing, and their outputs are sliced off below.
    invalid = -(n_pad + 1)
    x_p = jnp.zeros((n_pad, feats), jnp.float32).at[:n_nodes].set(
        x.astype(jnp.float32))
    eattr_p = jnp.zeros((e_pad, 1), jnp.float32).at[:n_edges].set(
        edge_attr.astype(jnp.float32))
    esrc = jnp.full((e_pad,), invalid, jnp.int32).at[:n_edges].set(
        edge_index[0].astype(jnp.int32))
    edst = jnp.full((e_pad,), invalid, jnp.int32).at[:n_edges].set(
        edge_index[1].astype(jnp.int32))
    esrc_c = esrc.reshape(e_pad, 1)       # sublane-major: needed by g_both
    edst_c = edst.reshape(e_pad, 1)
    esrc_r = esrc.reshape(1, e_pad)       # lane-dense: needed by g_srcT

    kernel = functools.partial(
        dimes_kernel, n_pad=n_pad, tile_e=tile_e, units=U,
        depth=depth, par_depth=par_depth)

    def full(a):
        return pl.BlockSpec(a.shape, lambda i, t, nd=a.ndim: (0,) * nd)

    def per_layer(a):
        return pl.BlockSpec((1,) + a.shape[1:],
                            lambda i, t, nd=a.ndim: (i,) + (0,) * (nd - 1))

    in_specs = [
        full(x_p),                                          # x
        pl.BlockSpec((tile_e, 1), lambda i, t: (t, 0)),     # edge_attr
        pl.BlockSpec((tile_e, 1), lambda i, t: (t, 0)),     # esrc (col)
        pl.BlockSpec((tile_e, 1), lambda i, t: (t, 0)),     # edst (col)
        pl.BlockSpec((1, tile_e), lambda i, t: (0, t)),     # esrc (row)
        full(kp['v_lin0_w']), full(kp['v_lin0_b']),
        full(kp['e_lin0_w']), full(kp['e_lin0_b']),
        per_layer(kp['vproj_w']), per_layer(kp['vproj_b']),
        per_layer(kp['e0_w']), per_layer(kp['e0_b']),
        per_layer(kp['vbn_s']), per_layer(kp['vbn_b']),
        per_layer(kp['ebn_s']), per_layer(kp['ebn_b']),
        full(kp['par_w']), full(kp['par_b']),
        full(kp['par_wl']), full(kp['par_bl']),
    ]

    out = pl.pallas_call(
        kernel,
        grid=(depth, num_tiles),
        out_shape=jax.ShapeDtypeStruct((1, e_pad), jnp.float32),  # lane-dense
        in_specs=in_specs,
        out_specs=pl.BlockSpec((1, tile_e), lambda i, t: (0, t)),
        scratch_shapes=[
            pltpu.VMEM((n_pad, U), jnp.float32),              # x_scr
            pltpu.VMEM((num_tiles, tile_e, U), jnp.float32),  # w_scr
            pltpu.VMEM((n_pad, U), jnp.float32),              # agg_scr
            pltpu.VMEM((n_pad, U), jnp.float32),              # x1_scr
            pltpu.VMEM((2 * n_pad, 2 * U), jnp.bfloat16),     # rhs_scr
        ],
        compiler_params=pltpu.CompilerParams(
            dimension_semantics=("arbitrary", "arbitrary"),
            vmem_limit_bytes=vmem_limit),
    )(x_p, eattr_p, esrc_c, edst_c, esrc_r,
      kp['v_lin0_w'], kp['v_lin0_b'], kp['e_lin0_w'], kp['e_lin0_b'],
      kp['vproj_w'], kp['vproj_b'], kp['e0_w'], kp['e0_b'],
      kp['vbn_s'], kp['vbn_b'], kp['ebn_s'], kp['ebn_b'],
      kp['par_w'], kp['par_b'], kp['par_wl'], kp['par_bl'])
    return out[0, :n_edges]                          # squeeze(dim=-1) -> (E,)


def reference_forward(x, edge_index, edge_attr, p, *, depth, par_depth):
    """Pure-JAX f32 reference matching the PyTorch forward (eval-mode BN)."""
    src, dst = edge_index[0], edge_index[1]
    n = x.shape[0]
    x = _silu(x @ p['v_lin0_w'] + p['v_lin0_b'])
    w = _silu(edge_attr @ p['e_lin0_w'] + p['e_lin0_b'])
    for i in range(depth):
        x0, w0 = x, w
        x1 = x0 @ p['v1_w'][i] + p['v1_b'][i]
        x2 = x0 @ p['v2_w'][i] + p['v2_b'][i]
        x3 = x0 @ p['v3_w'][i] + p['v3_b'][i]
        x4 = x0 @ p['v4_w'][i] + p['v4_b'][i]
        w1 = w0 @ p['e0_w'][i] + p['e0_b'][i]
        w2 = jax.nn.sigmoid(w0)
        msg = w2 * x2[dst]
        agg = jnp.zeros((n, msg.shape[-1]), msg.dtype).at[src].add(msg)
        x = x0 + _silu((x1 + agg) * p['vbn_s'][i] + p['vbn_b'][i])
        w = w0 + _silu((w1 + x3[src] + x4[dst]) * p['ebn_s'][i] + p['ebn_b'][i])
    h = w
    for i in range(par_depth - 1):
        h = _silu(h @ p['par_w'][i] + p['par_b'][i])
    return (h @ p['par_wl'].T + p['par_bl'])[:, 0]


if __name__ == "__main__":
    # small deterministic graph: N nodes, 2-D coords, k neighbours per node
    N, K_NN = 24, 8
    FEATS, UNITS, EMB_DEPTH, PAR_DEPTH = 2, 32, 3, 3
    E = N * K_NN

    key = jax.random.PRNGKey(0)
    k_x, k_p = jax.random.split(key)

    x = jax.random.normal(k_x, (N, FEATS), dtype=jnp.float32)     # node coords
    src = jnp.repeat(jnp.arange(N, dtype=jnp.int32), K_NN)        # (E,)
    offs = jnp.tile(jnp.arange(1, K_NN + 1, dtype=jnp.int32), N)  # (E,)
    dst = (src + offs) % N
    edge_index = jnp.stack([src, dst])                            # (2, E)
    edge_attr = jnp.linalg.norm(
        x[dst] - x[src], axis=-1, keepdims=True)                  # (E, 1)

    raw_params = init_params(k_p, FEATS, UNITS, EMB_DEPTH, PAR_DEPTH)
    kernel_params = prepare_kernel_params(raw_params)

    ref = reference_forward(x, edge_index, edge_attr, raw_params,
                            depth=EMB_DEPTH, par_depth=PAR_DEPTH)

    # multi-tile path (tile_e=128 -> 2 edge tiles): exercises the cross-tile
    # scatter accumulator and edge-embedding persistence across layers.
    par = dimes_net_forward(x, edge_index, edge_attr, kernel_params,
                            depth=EMB_DEPTH, par_depth=PAR_DEPTH,
                            units=UNITS, tile_e=128)
    par = jax.block_until_ready(par)
    assert par.shape == (E,), par.shape
    assert bool(jnp.all(jnp.isfinite(par)))
    # bf16 MXU operands with f32 accumulation: loose tolerance vs f32 reference
    assert bool(jnp.allclose(par, ref, rtol=5e-2, atol=7e-2)), (
        float(jnp.max(jnp.abs(par - ref))))

    # auto (per-generation) tile size: single-tile path
    par2 = jax.block_until_ready(
        dimes_net_forward(x, edge_index, edge_attr, kernel_params,
                          depth=EMB_DEPTH, par_depth=PAR_DEPTH, units=UNITS))
    assert bool(jnp.allclose(par2, ref, rtol=5e-2, atol=7e-2)), (
        float(jnp.max(jnp.abs(par2 - ref))))

    print("KERNEL_OK")
</pallas_src>

<mosaic_0001>
module attributes {stable_mosaic.version = 11 : i64} {
  func.func @dimes_kernel(%arg0: i32, %arg1: i32, %arg2: memref<64x2xf32, #tpu.memory_space<vmem>>, %arg3: memref<128x1xf32, #tpu.memory_space<vmem>>, %arg4: memref<128x1xi32, #tpu.memory_space<vmem>>, %arg5: memref<128x1xi32, #tpu.memory_space<vmem>>, %arg6: memref<1x128xi32, #tpu.memory_space<vmem>>, %arg7: memref<2x32xbf16, #tpu.memory_space<vmem>>, %arg8: memref<1x32xf32, #tpu.memory_space<vmem>>, %arg9: memref<1x32xf32, #tpu.memory_space<vmem>>, %arg10: memref<1x32xf32, #tpu.memory_space<vmem>>, %arg11: memref<1x32x160xbf16, #tpu.memory_space<vmem>>, %arg12: memref<1x1x160xf32, #tpu.memory_space<vmem>>, %arg13: memref<1x32x32xbf16, #tpu.memory_space<vmem>>, %arg14: memref<1x1x32xf32, #tpu.memory_space<vmem>>, %arg15: memref<1x1x32xf32, #tpu.memory_space<vmem>>, %arg16: memref<1x1x32xf32, #tpu.memory_space<vmem>>, %arg17: memref<1x1x32xf32, #tpu.memory_space<vmem>>, %arg18: memref<1x1x32xf32, #tpu.memory_space<vmem>>, %arg19: memref<2x32x32xbf16, #tpu.memory_space<vmem>>, %arg20: memref<2x1x32xf32, #tpu.memory_space<vmem>>, %arg21: memref<1x32xbf16, #tpu.memory_space<vmem>>, %arg22: memref<1x1xf32, #tpu.memory_space<vmem>>, %arg23: memref<1x128xf32, #tpu.memory_space<vmem>>, %arg24: memref<64x32xf32, #tpu.memory_space<vmem>>, %arg25: memref<2x128x32xf32, #tpu.memory_space<vmem>>, %arg26: memref<64x32xf32, #tpu.memory_space<vmem>>, %arg27: memref<64x32xf32, #tpu.memory_space<vmem>>, %arg28: memref<128x64xbf16, #tpu.memory_space<vmem>>) attributes {dimension_semantics = [#tpu.dimension_semantics<arbitrary>, #tpu.dimension_semantics<arbitrary>], iteration_bounds = array<i64: 3, 2>, scalar_prefetch = 0 : i64, scratch_operands = 5 : i64, tpu.core_type = #tpu.core_type<tc>, window_params = [{pipeline_mode = #tpu.pipeline_mode<synchronous>, transform_indices = @transform_0, window_bounds = array<i64: 64, 2>}, {transform_indices = @transform_1, window_bounds = array<i64: 128, 1>}, {transform_indices = @transform_2, window_bounds = array<i64: 128, 1>}, {transform_indices = @transform_3, window_bounds = array<i64: 128, 1>}, {transform_indices = @transform_4, window_bounds = array<i64: 1, 128>}, {pipeline_mode = #tpu.pipeline_mode<synchronous>, transform_indices = @transform_5, window_bounds = array<i64: 2, 32>}, {pipeline_mode = #tpu.pipeline_mode<synchronous>, transform_indices = @transform_6, window_bounds = array<i64: 1, 32>}, {pipeline_mode = #tpu.pipeline_mode<synchronous>, transform_indices = @transform_7, window_bounds = array<i64: 1, 32>}, {pipeline_mode = #tpu.pipeline_mode<synchronous>, transform_indices = @transform_8, window_bounds = array<i64: 1, 32>}, {transform_indices = @transform_9, window_bounds = array<i64: 1, 32, 160>}, {transform_indices = @transform_10, window_bounds = array<i64: 1, 1, 160>}, {transform_indices = @transform_11, window_bounds = array<i64: 1, 32, 32>}, {transform_indices = @transform_12, window_bounds = array<i64: 1, 1, 32>}, {transform_indices = @transform_13, window_bounds = array<i64: 1, 1, 32>}, {transform_indices = @transform_14, window_bounds = array<i64: 1, 1, 32>}, {transform_indices = @transform_15, window_bounds = array<i64: 1, 1, 32>}, {transform_indices = @transform_16, window_bounds = array<i64: 1, 1, 32>}, {pipeline_mode = #tpu.pipeline_mode<synchronous>, transform_indices = @transform_17, window_bounds = array<i64: 2, 32, 32>}, {pipeline_mode = #tpu.pipeline_mode<synchronous>, transform_indices = @transform_18, window_bounds = array<i64: 2, 1, 32>}, {pipeline_mode = #tpu.pipeline_mode<synchronous>, transform_indices = @transform_19, window_bounds = array<i64: 1, 32>}, {pipeline_mode = #tpu.pipeline_mode<synchronous>, transform_indices = @transform_20, window_bounds = array<i64: 1, 1>}, {transform_indices = @transform_21, window_bounds = array<i64: 1, 128>}]} {
    %c0_i32 = arith.constant 0 : i32
    %0 = arith.cmpi eq, %arg0, %c0_i32 : i32
    %c0_i32_0 = arith.constant 0 : i32
    %1 = arith.cmpi eq, %arg1, %c0_i32_0 : i32
    %2 = arith.andi %0, %1 : i1
    %3 = arith.extui %2 : i1 to i32
    %c0_i32_1 = arith.constant 0 : i32
    %4 = arith.cmpi ne, %3, %c0_i32_1 : i32
    scf.if %4 {
      %c0_41 = arith.constant 0 : index
      %c0_42 = arith.constant 0 : index
      %86 = vector.load %arg2[%c0_41, %c0_42] : memref<64x2xf32, #tpu.memory_space<vmem>>, vector<64x2xf32>
      %87 = arith.truncf %86 : vector<64x2xf32> to vector<64x2xbf16>
      %c0_43 = arith.constant 0 : index
      %c0_44 = arith.constant 0 : index
      %88 = vector.load %arg7[%c0_43, %c0_44] : memref<2x32xbf16, #tpu.memory_space<vmem>>, vector<2x32xbf16>
      %cst_45 = arith.constant dense<0.000000e+00> : vector<64x32xf32>
      %89 = tpu.matmul %87, %88, %cst_45 {dimension_numbers = #tpu.dot_dimension_numbers<[1], [0], [0], [1], [0, 0, 1, 1], [], []>} : vector<64x2xbf16>, vector<2x32xbf16>, vector<64x32xf32> -> vector<64x32xf32>
      %c0_46 = arith.constant 0 : index
      %c0_47 = arith.constant 0 : index
      %90 = vector.load %arg8[%c0_46, %c0_47] : memref<1x32xf32, #tpu.memory_space<vmem>>, vector<1x32xf32>
      %91 = vector.broadcast %90 : vector<1x32xf32> to vector<64x32xf32>
      %92 = arith.addf %89, %91 : vector<64x32xf32>
      %93 = arith.negf %92 : vector<64x32xf32>
      %94 = math.exp %93 : vector<64x32xf32>
      %cst_48 = arith.constant 1.000000e+00 : f32
      %95 = vector.broadcast %cst_48 : f32 to vector<64x32xf32>
      %96 = arith.addf %95, %94 : vector<64x32xf32>
      %97 = arith.divf %95, %96 : vector<64x32xf32>
      %98 = arith.mulf %92, %97 : vector<64x32xf32>
      %c0_49 = arith.constant 0 : index
      %c0_50 = arith.constant 0 : index
      %99 = vector.load %arg24[%c0_49, %c0_50] : memref<64x32xf32, #tpu.memory_space<vmem>>, vector<64x32xf32>
      tpu.vector_store %arg24[%c0_49, %c0_50], %98 {strides = array<i32>} : memref<64x32xf32, #tpu.memory_space<vmem>>, vector<64x32xf32>,
    } else {
    }
    %c0_i32_2 = arith.constant 0 : i32
    %5 = arith.cmpi eq, %arg0, %c0_i32_2 : i32
    %6 = arith.extui %5 : i1 to i32
    %c0_i32_3 = arith.constant 0 : i32
    %7 = arith.cmpi ne, %6, %c0_i32_3 : i32
    scf.if %7 {
      %c0_41 = arith.constant 0 : index
      %c0_42 = arith.constant 0 : index
      %86 = vector.load %arg3[%c0_41, %c0_42] : memref<128x1xf32, #tpu.memory_space<vmem>>, vector<128x1xf32>
      %c0_43 = arith.constant 0 : index
      %c0_44 = arith.constant 0 : index
      %87 = vector.load %arg9[%c0_43, %c0_44] : memref<1x32xf32, #tpu.memory_space<vmem>>, vector<1x32xf32>
      %88 = vector.broadcast %86 : vector<128x1xf32> to vector<128x32xf32>
      %89 = vector.broadcast %87 : vector<1x32xf32> to vector<128x32xf32>
      %90 = arith.mulf %88, %89 : vector<128x32xf32>
      %c0_45 = arith.constant 0 : index
      %c0_46 = arith.constant 0 : index
      %91 = vector.load %arg10[%c0_45, %c0_46] : memref<1x32xf32, #tpu.memory_space<vmem>>, vector<1x32xf32>
      %92 = vector.broadcast %91 : vector<1x32xf32> to vector<128x32xf32>
      %93 = arith.addf %90, %92 : vector<128x32xf32>
      %94 = arith.negf %93 : vector<128x32xf32>
      %95 = math.exp %94 : vector<128x32xf32>
      %cst_47 = arith.constant 1.000000e+00 : f32
      %96 = vector.broadcast %cst_47 : f32 to vector<128x32xf32>
      %97 = arith.addf %96, %95 : vector<128x32xf32>
      %98 = arith.divf %96, %97 : vector<128x32xf32>
      %99 = arith.mulf %93, %98 : vector<128x32xf32>
      %100 = arith.index_cast %arg1 : i32 to index
      %c0_48 = arith.constant 0 : index
      %c0_49 = arith.constant 0 : index
      %101 = vector.load %arg25[%100, %c0_48, %c0_49] : memref<2x128x32xf32, #tpu.memory_space<vmem>>, vector<1x128x32xf32>
      %102 = vector.shape_cast %101 : vector<1x128x32xf32> to vector<128x32xf32>
      %103 = vector.shape_cast %99 : vector<128x32xf32> to vector<1x128x32xf32>
      tpu.vector_store %arg25[%100, %c0_48, %c0_49], %103 {strides = array<i32>} : memref<2x128x32xf32, #tpu.memory_space<vmem>>, vector<1x128x32xf32>,
    } else {
    }
    %c0_i32_4 = arith.constant 0 : i32
    %8 = arith.cmpi eq, %arg1, %c0_i32_4 : i32
    %9 = arith.extui %8 : i1 to i32
    %c0_i32_5 = arith.constant 0 : i32
    %10 = arith.cmpi ne, %9, %c0_i32_5 : i32
    scf.if %10 {
      %c0_41 = arith.constant 0 : index
      %c0_42 = arith.constant 0 : index
      %86 = vector.load %arg24[%c0_41, %c0_42] : memref<64x32xf32, #tpu.memory_space<vmem>>, vector<64x32xf32>
      %87 = arith.truncf %86 : vector<64x32xf32> to vector<64x32xbf16>
      %c0_43 = arith.constant 0 : index
      %c0_44 = arith.constant 0 : index
      %c0_45 = arith.constant 0 : index
      %88 = vector.load %arg11[%c0_43, %c0_44, %c0_45] : memref<1x32x160xbf16, #tpu.memory_space<vmem>>, vector<1x32x160xbf16>
      %89 = vector.shape_cast %88 : vector<1x32x160xbf16> to vector<32x160xbf16>
      %cst_46 = arith.constant dense<0.000000e+00> : vector<64x160xf32>
      %90 = tpu.matmul %87, %89, %cst_46 {dimension_numbers = #tpu.dot_dimension_numbers<[1], [0], [0], [1], [0, 0, 1, 1], [], []>} : vector<64x32xbf16>, vector<32x160xbf16>, vector<64x160xf32> -> vector<64x160xf32>
      %c0_47 = arith.constant 0 : index
      %c0_48 = arith.constant 0 : index
      %c0_49 = arith.constant 0 : index
      %91 = vector.load %arg12[%c0_47, %c0_48, %c0_49] : memref<1x1x160xf32, #tpu.memory_space<vmem>>, vector<1x1x160xf32>
      %92 = vector.shape_cast %91 : vector<1x1x160xf32> to vector<1x160xf32>
      %93 = vector.broadcast %92 : vector<1x160xf32> to vector<64x160xf32>
      %94 = arith.addf %90, %93 : vector<64x160xf32>
      %95 = vector.extract_strided_slice %94 {offsets = [0, 0], sizes = [64, 32], strides = [1, 1]} : vector<64x160xf32> to vector<64x32xf32>
      %c0_50 = arith.constant 0 : index
      %c0_51 = arith.constant 0 : index
      %96 = vector.load %arg27[%c0_50, %c0_51] : memref<64x32xf32, #tpu.memory_space<vmem>>, vector<64x32xf32>
      tpu.vector_store %arg27[%c0_50, %c0_51], %95 {strides = array<i32>} : memref<64x32xf32, #tpu.memory_space<vmem>>, vector<64x32xf32>,
      %97 = vector.extract_strided_slice %94 {offsets = [0, 32], sizes = [64, 64], strides = [1, 1]} : vector<64x160xf32> to vector<64x64xf32>
      %98 = arith.truncf %97 : vector<64x64xf32> to vector<64x64xbf16>
      %c0_52 = arith.constant 0 : index
      %c0_53 = arith.constant 0 : index
      %99 = vector.load %arg28[%c0_52, %c0_53] : memref<128x64xbf16, #tpu.memory_space<vmem>>, vector<64x64xbf16>
      tpu.vector_store %arg28[%c0_52, %c0_53], %98 {strides = array<i32>} : memref<128x64xbf16, #tpu.memory_space<vmem>>, vector<64x64xbf16>,
      %100 = vector.extract_strided_slice %94 {offsets = [0, 96], sizes = [64, 64], strides = [1, 1]} : vector<64x160xf32> to vector<64x64xf32>
      %101 = arith.truncf %100 : vector<64x64xf32> to vector<64x64xbf16>
      %c64 = arith.constant 64 : index
      %c0_54 = arith.constant 0 : index
      %102 = vector.load %arg28[%c64, %c0_54] : memref<128x64xbf16, #tpu.memory_space<vmem>>, vector<64x64xbf16>
      tpu.vector_store %arg28[%c64, %c0_54], %101 {strides = array<i32>} : memref<128x64xbf16, #tpu.memory_space<vmem>>, vector<64x64xbf16>,
      %cst_55 = arith.constant 0.000000e+00 : f32
      %103 = vector.broadcast %cst_55 : f32 to vector<64x32xf32>
      %c0_56 = arith.constant 0 : index
      %c0_57 = arith.constant 0 : index
      %104 = vector.load %arg26[%c0_56, %c0_57] : memref<64x32xf32, #tpu.memory_space<vmem>>, vector<64x32xf32>
      tpu.vector_store %arg26[%c0_56, %c0_57], %103 {strides = array<i32>} : memref<64x32xf32, #tpu.memory_space<vmem>>, vector<64x32xf32>,
    } else {
    }
    %c0 = arith.constant 0 : index
    %c0_6 = arith.constant 0 : index
    %11 = vector.load %arg4[%c0, %c0_6] : memref<128x1xi32, #tpu.memory_space<vmem>>, vector<128x1xi32>
    %c0_7 = arith.constant 0 : index
    %c0_8 = arith.constant 0 : index
    %12 = vector.load %arg5[%c0_7, %c0_8] : memref<128x1xi32, #tpu.memory_space<vmem>>, vector<128x1xi32>
    %13 = tpu.iota {dimensions = array<i32: 1>} : vector<128x128xi32>
    %14 = vector.broadcast %11 : vector<128x1xi32> to vector<128x128xi32>
    %15 = arith.cmpi eq, %13, %14 : vector<128x128xi32>
    %c64_i32 = arith.constant 64 : i32
    %16 = vector.broadcast %c64_i32 : i32 to vector<128x1xi32>
    %17 = arith.addi %12, %16 : vector<128x1xi32>
    %18 = vector.broadcast %17 : vector<128x1xi32> to vector<128x128xi32>
    %19 = arith.cmpi eq, %13, %18 : vector<128x128xi32>
    %20 = arith.ori %15, %19 : vector<128x128xi1>
    %21 = arith.extui %20 : vector<128x128xi1> to vector<128x128xi32>
    %22 = arith.sitofp %21 : vector<128x128xi32> to vector<128x128xf32>
    %23 = arith.truncf %22 : vector<128x128xf32> to vector<128x128xbf16>
    %24 = tpu.iota {dimensions = array<i32: 0>} : vector<64x128xi32>
    %c0_9 = arith.constant 0 : index
    %c0_10 = arith.constant 0 : index
    %25 = vector.load %arg6[%c0_9, %c0_10] : memref<1x128xi32, #tpu.memory_space<vmem>>, vector<1x128xi32>
    %26 = vector.broadcast %25 : vector<1x128xi32> to vector<64x128xi32>
    %27 = arith.cmpi eq, %24, %26 : vector<64x128xi32>
    %28 = arith.extui %27 : vector<64x128xi1> to vector<64x128xi32>
    %29 = arith.sitofp %28 : vector<64x128xi32> to vector<64x128xf32>
    %30 = arith.truncf %29 : vector<64x128xf32> to vector<64x128xbf16>
    %31 = arith.index_cast %arg1 : i32 to index
    %c0_11 = arith.constant 0 : index
    %c0_12 = arith.constant 0 : index
    %32 = vector.load %arg25[%31, %c0_11, %c0_12] : memref<2x128x32xf32, #tpu.memory_space<vmem>>, vector<1x128x32xf32>
    %33 = vector.shape_cast %32 : vector<1x128x32xf32> to vector<128x32xf32>
    %34 = arith.truncf %33 : vector<128x32xf32> to vector<128x32xbf16>
    %c0_13 = arith.constant 0 : index
    %c0_14 = arith.constant 0 : index
    %c0_15 = arith.constant 0 : index
    %35 = vector.load %arg13[%c0_13, %c0_14, %c0_15] : memref<1x32x32xbf16, #tpu.memory_space<vmem>>, vector<1x32x32xbf16>
    %36 = vector.shape_cast %35 : vector<1x32x32xbf16> to vector<32x32xbf16>
    %cst = arith.constant dense<0.000000e+00> : vector<128x32xf32>
    %37 = tpu.matmul %34, %36, %cst {dimension_numbers = #tpu.dot_dimension_numbers<[1], [0], [0], [1], [0, 0, 1, 1], [], []>} : vector<128x32xbf16>, vector<32x32xbf16>, vector<128x32xf32> -> vector<128x32xf32>
    %c0_16 = arith.constant 0 : index
    %c0_17 = arith.constant 0 : index
    %c0_18 = arith.constant 0 : index
    %38 = vector.load %arg14[%c0_16, %c0_17, %c0_18] : memref<1x1x32xf32, #tpu.memory_space<vmem>>, vector<1x1x32xf32>
    %39 = vector.shape_cast %38 : vector<1x1x32xf32> to vector<1x32xf32>
    %40 = vector.broadcast %39 : vector<1x32xf32> to vector<128x32xf32>
    %41 = arith.addf %37, %40 : vector<128x32xf32>
    %42 = arith.negf %33 : vector<128x32xf32>
    %43 = math.exp %42 : vector<128x32xf32>
    %cst_19 = arith.constant 1.000000e+00 : f32
    %44 = vector.broadcast %cst_19 : f32 to vector<128x32xf32>
    %45 = arith.addf %44, %43 : vector<128x32xf32>
    %46 = arith.divf %44, %45 : vector<128x32xf32>
    %c0_20 = arith.constant 0 : index
    %c0_21 = arith.constant 0 : index
    %47 = vector.load %arg28[%c0_20, %c0_21] : memref<128x64xbf16, #tpu.memory_space<vmem>>, vector<128x64xbf16>
    %cst_22 = arith.constant dense<0.000000e+00> : vector<128x64xf32>
    %48 = tpu.matmul %23, %47, %cst_22 {dimension_numbers = #tpu.dot_dimension_numbers<[1], [0], [0], [1], [0, 0, 1, 1], [], []>} : vector<128x128xbf16>, vector<128x64xbf16>, vector<128x64xf32> -> vector<128x64xf32>
    %49 = vector.extract_strided_slice %48 {offsets = [0, 0], sizes = [128, 32], strides = [1, 1]} : vector<128x64xf32> to vector<128x32xf32>
    %50 = vector.extract_strided_slice %48 {offsets = [0, 32], sizes = [128, 32], strides = [1, 1]} : vector<128x64xf32> to vector<128x32xf32>
    %51 = arith.mulf %46, %50 : vector<128x32xf32>
    %c0_23 = arith.constant 0 : index
    %c0_24 = arith.constant 0 : index
    %52 = vector.load %arg26[%c0_23, %c0_24] : memref<64x32xf32, #tpu.memory_space<vmem>>, vector<64x32xf32>
    %53 = arith.truncf %51 : vector<128x32xf32> to vector<128x32xbf16>
    %cst_25 = arith.constant dense<0.000000e+00> : vector<64x32xf32>
    %54 = tpu.matmul %30, %53, %cst_25 {dimension_numbers = #tpu.dot_dimension_numbers<[1], [0], [0], [1], [0, 0, 1, 1], [], []>} : vector<64x128xbf16>, vector<128x32xbf16>, vector<64x32xf32> -> vector<64x32xf32>
    %55 = arith.addf %52, %54 : vector<64x32xf32>
    %c0_26 = arith.constant 0 : index
    %c0_27 = arith.constant 0 : index
    %56 = vector.load %arg26[%c0_26, %c0_27] : memref<64x32xf32, #tpu.memory_space<vmem>>, vector<64x32xf32>
    tpu.vector_store %arg26[%c0_26, %c0_27], %55 {strides = array<i32>} : memref<64x32xf32, #tpu.memory_space<vmem>>, vector<64x32xf32>,
    %57 = arith.addf %41, %49 : vector<128x32xf32>
    %c0_28 = arith.constant 0 : index
    %c0_29 = arith.constant 0 : index
    %c0_30 = arith.constant 0 : index
    %58 = vector.load %arg17[%c0_28, %c0_29, %c0_30] : memref<1x1x32xf32, #tpu.memory_space<vmem>>, vector<1x1x32xf32>
    %59 = vector.shape_cast %58 : vector<1x1x32xf32> to vector<1x32xf32>
    %60 = vector.broadcast %59 : vector<1x32xf32> to vector<128x32xf32>
    %61 = arith.mulf %57, %60 : vector<128x32xf32>
    %c0_31 = arith.constant 0 : index
    %c0_32 = arith.constant 0 : index
    %c0_33 = arith.constant 0 : index
    %62 = vector.load %arg18[%c0_31, %c0_32, %c0_33] : memref<1x1x32xf32, #tpu.memory_space<vmem>>, vector<1x1x32xf32>
    %63 = vector.shape_cast %62 : vector<1x1x32xf32> to vector<1x32xf32>
    %64 = vector.broadcast %63 : vector<1x32xf32> to vector<128x32xf32>
    %65 = arith.addf %61, %64 : vector<128x32xf32>
    %66 = arith.negf %65 : vector<128x32xf32>
    %67 = math.exp %66 : vector<128x32xf32>
    %cst_34 = arith.constant 1.000000e+00 : f32
    %68 = vector.broadcast %cst_34 : f32 to vector<128x32xf32>
    %69 = arith.addf %68, %67 : vector<128x32xf32>
    %70 = arith.divf %68, %69 : vector<128x32xf32>
    %71 = arith.mulf %65, %70 : vector<128x32xf32>
    %72 = arith.addf %33, %71 : vector<128x32xf32>
    %73 = arith.index_cast %arg1 : i32 to index
    %c0_35 = arith.constant 0 : index
    %c0_36 = arith.constant 0 : index
    %74 = vector.load %arg25[%73, %c0_35, %c0_36] : memref<2x128x32xf32, #tpu.memory_space<vmem>>, vector<1x128x32xf32>
    %75 = vector.shape_cast %74 : vector<1x128x32xf32> to vector<128x32xf32>
    %76 = vector.shape_cast %72 : vector<128x32xf32> to vector<1x128x32xf32>
    tpu.vector_store %arg25[%73, %c0_35, %c0_36], %76 {strides = array<i32>} : memref<2x128x32xf32, #tpu.memory_space<vmem>>, vector<1x128x32xf32>,
    %c1_i32 = arith.constant 1 : i32
    %77 = arith.cmpi eq, %arg1, %c1_i32 : i32
    %78 = arith.extui %77 : i1 to i32
    %c0_i32_37 = arith.constant 0 : i32
    %79 = arith.cmpi ne, %78, %c0_i32_37 : i32
    scf.if %79 {
      %c0_41 = arith.constant 0 : index
      %c0_42 = arith.constant 0 : index
      %86 = vector.load %arg27[%c0_41, %c0_42] : memref<64x32xf32, #tpu.memory_space<vmem>>, vector<64x32xf32>
      %c0_43 = arith.constant 0 : index
      %c0_44 = arith.constant 0 : index
      %87 = vector.load %arg26[%c0_43, %c0_44] : memref<64x32xf32, #tpu.memory_space<vmem>>, vector<64x32xf32>
      %88 = arith.addf %86, %87 : vector<64x32xf32>
      %c0_45 = arith.constant 0 : index
      %c0_46 = arith.constant 0 : index
      %c0_47 = arith.constant 0 : index
      %89 = vector.load %arg15[%c0_45, %c0_46, %c0_47] : memref<1x1x32xf32, #tpu.memory_space<vmem>>, vector<1x1x32xf32>
      %90 = vector.shape_cast %89 : vector<1x1x32xf32> to vector<1x32xf32>
      %91 = vector.broadcast %90 : vector<1x32xf32> to vector<64x32xf32>
      %92 = arith.mulf %88, %91 : vector<64x32xf32>
      %c0_48 = arith.constant 0 : index
      %c0_49 = arith.constant 0 : index
      %c0_50 = arith.constant 0 : index
      %93 = vector.load %arg16[%c0_48, %c0_49, %c0_50] : memref<1x1x32xf32, #tpu.memory_space<vmem>>, vector<1x1x32xf32>
      %94 = vector.shape_cast %93 : vector<1x1x32xf32> to vector<1x32xf32>
      %95 = vector.broadcast %94 : vector<1x32xf32> to vector<64x32xf32>
      %96 = arith.addf %92, %95 : vector<64x32xf32>
      %c0_51 = arith.constant 0 : index
      %c0_52 = arith.constant 0 : index
      %97 = vector.load %arg24[%c0_51, %c0_52] : memref<64x32xf32, #tpu.memory_space<vmem>>, vector<64x32xf32>
      %98 = arith.negf %96 : vector<64x32xf32>
      %99 = math.exp %98 : vector<64x32xf32>
      %cst_53 = arith.constant 1.000000e+00 : f32
      %100 = vector.broadcast %cst_53 : f32 to vector<64x32xf32>
      %101 = arith.addf %100, %99 : vector<64x32xf32>
      %102 = arith.divf %100, %101 : vector<64x32xf32>
      %103 = arith.mulf %96, %102 : vector<64x32xf32>
      %104 = arith.addf %97, %103 : vector<64x32xf32>
      %c0_54 = arith.constant 0 : index
      %c0_55 = arith.constant 0 : index
      %105 = vector.load %arg24[%c0_54, %c0_55] : memref<64x32xf32, #tpu.memory_space<vmem>>, vector<64x32xf32>
      tpu.vector_store %arg24[%c0_54, %c0_55], %104 {strides = array<i32>} : memref<64x32xf32, #tpu.memory_space<vmem>>, vector<64x32xf32>,
    } else {
    }
    %c2_i32 = arith.constant 2 : i32
    %80 = arith.cmpi eq, %arg0, %c2_i32 : i32
    %81 = arith.extui %80 : i1 to i32
    %c0_i32_38 = arith.constant 0 : i32
    %82 = arith.cmpi ne, %81, %c0_i32_38 : i32
    scf.if %82 {
      %86 = arith.truncf %72 : vector<128x32xf32> to vector<128x32xbf16>
      %c0_41 = arith.constant 0 : index
      %c0_42 = arith.constant 0 : index
      %c0_43 = arith.constant 0 : index
      %87 = vector.load %arg19[%c0_41, %c0_42, %c0_43] : memref<2x32x32xbf16, #tpu.memory_space<vmem>>, vector<1x32x32xbf16>
      %88 = vector.shape_cast %87 : vector<1x32x32xbf16> to vector<32x32xbf16>
      %cst_44 = arith.constant dense<0.000000e+00> : vector<128x32xf32>
      %89 = tpu.matmul %86, %88, %cst_44 {dimension_numbers = #tpu.dot_dimension_numbers<[1], [0], [0], [1], [0, 0, 1, 1], [], []>} : vector<128x32xbf16>, vector<32x32xbf16>, vector<128x32xf32> -> vector<128x32xf32>
      %c0_45 = arith.constant 0 : index
      %c0_46 = arith.constant 0 : index
      %c0_47 = arith.constant 0 : index
      %90 = vector.load %arg20[%c0_45, %c0_46, %c0_47] : memref<2x1x32xf32, #tpu.memory_space<vmem>>, vector<1x1x32xf32>
      %91 = vector.shape_cast %90 : vector<1x1x32xf32> to vector<1x32xf32>
      %92 = vector.broadcast %91 : vector<1x32xf32> to vector<128x32xf32>
      %93 = arith.addf %89, %92 : vector<128x32xf32>
      %94 = arith.negf %93 : vector<128x32xf32>
      %95 = math.exp %94 : vector<128x32xf32>
      %cst_48 = arith.constant 1.000000e+00 : f32
      %96 = vector.broadcast %cst_48 : f32 to vector<128x32xf32>
      %97 = arith.addf %96, %95 : vector<128x32xf32>
      %98 = arith.divf %96, %97 : vector<128x32xf32>
      %99 = arith.mulf %93, %98 : vector<128x32xf32>
      %100 = arith.truncf %99 : vector<128x32xf32> to vector<128x32xbf16>
      %c1 = arith.constant 1 : index
      %c0_49 = arith.constant 0 : index
      %c0_50 = arith.constant 0 : index
      %101 = vector.load %arg19[%c1, %c0_49, %c0_50] : memref<2x32x32xbf16, #tpu.memory_space<vmem>>, vector<1x32x32xbf16>
      %102 = vector.shape_cast %101 : vector<1x32x32xbf16> to vector<32x32xbf16>
      %cst_51 = arith.constant dense<0.000000e+00> : vector<128x32xf32>
      %103 = tpu.matmul %100, %102, %cst_51 {dimension_numbers = #tpu.dot_dimension_numbers<[1], [0], [0], [1], [0, 0, 1, 1], [], []>} : vector<128x32xbf16>, vector<32x32xbf16>, vector<128x32xf32> -> vector<128x32xf32>
      %c1_52 = arith.constant 1 : index
      %c0_53 = arith.constant 0 : index
      %c0_54 = arith.constant 0 : index
      %104 = vector.load %arg20[%c1_52, %c0_53, %c0_54] : memref<2x1x32xf32, #tpu.memory_space<vmem>>, vector<1x1x32xf32>
      %105 = vector.shape_cast %104 : vector<1x1x32xf32> to vector<1x32xf32>
      %106 = vector.broadcast %105 : vector<1x32xf32> to vector<128x32xf32>
      %107 = arith.addf %103, %106 : vector<128x32xf32>
      %108 = arith.negf %107 : vector<128x32xf32>
      %109 = math.exp %108 : vector<128x32xf32>
      %cst_55 = arith.constant 1.000000e+00 : f32
      %110 = vector.broadcast %cst_55 : f32 to vector<128x32xf32>
      %111 = arith.addf %110, %109 : vector<128x32xf32>
      %112 = arith.divf %110, %111 : vector<128x32xf32>
      %113 = arith.mulf %107, %112 : vector<128x32xf32>
      %c0_56 = arith.constant 0 : index
      %c0_57 = arith.constant 0 : index
      %114 = vector.load %arg21[%c0_56, %c0_57] : memref<1x32xbf16, #tpu.memory_space<vmem>>, vector<1x32xbf16>
      %115 = arith.truncf %113 : vector<128x32xf32> to vector<128x32xbf16>
      %cst_58 = arith.constant dense<0.000000e+00> : vector<1x128xf32>
      %116 = tpu.matmul %114, %115, %cst_58 {dimension_numbers = #tpu.dot_dimension_numbers<[1], [1], [0], [0], [0, 0, 1, 0], [], []>} : vector<1x32xbf16>, vector<128x32xbf16>, vector<1x128xf32> -> vector<1x128xf32>
      %c0_59 = arith.constant 0 : index
      %c0_60 = arith.constant 0 : index
      %117 = vector.load %arg22[%c0_59, %c0_60] : memref<1x1xf32, #tpu.memory_space<vmem>>, vector<1x1xf32>
      %118 = vector.broadcast %117 : vector<1x1xf32> to vector<1x128xf32>
      %119 = arith.addf %116, %118 : vector<1x128xf32>
      %c0_61 = arith.constant 0 : index
      %c0_62 = arith.constant 0 : index
      %120 = vector.load %arg23[%c0_61, %c0_62] : memref<1x128xf32, #tpu.memory_space<vmem>>, vector<1x128xf32>
      tpu.vector_store %arg23[%c0_61, %c0_62], %119 {strides = array<i32>} : memref<1x128xf32, #tpu.memory_space<vmem>>, vector<1x128xf32>,
    } else {
    }
    %c2_i32_39 = arith.constant 2 : i32
    %83 = arith.cmpi slt, %arg0, %c2_i32_39 : i32
    %84 = arith.extui %83 : i1 to i32
    %c0_i32_40 = arith.constant 0 : i32
    %85 = arith.cmpi ne, %84, %c0_i32_40 : i32
    scf.if %85 {
      %cst_41 = arith.constant 0.000000e+00 : f32
      %86 = vector.broadcast %cst_41 : f32 to vector<1x128xf32>
      %c0_42 = arith.constant 0 : index
      %c0_43 = arith.constant 0 : index
      %87 = vector.load %arg23[%c0_42, %c0_43] : memref<1x128xf32, #tpu.memory_space<vmem>>, vector<1x128xf32>
      tpu.vector_store %arg23[%c0_42, %c0_43], %86 {strides = array<i32>} : memref<1x128xf32, #tpu.memory_space<vmem>>, vector<1x128xf32>,
    } else {
    }
    return
  }
  func.func @transform_0(%arg0: i32, %arg1: i32) -> (i32, i32) {
    %c0_i32 = arith.constant 0 : i32
    %c0_i32_0 = arith.constant 0 : i32
    %c0_i32_1 = arith.constant 0 : i32
    return %c0_i32, %c0_i32_0 : i32, i32
  }
  func.func @transform_1(%arg0: i32, %arg1: i32) -> (i32, i32) {
    %c0_i32 = arith.constant 0 : i32
    %c0_i32_0 = arith.constant 0 : i32
    return %arg1, %c0_i32 : i32, i32
  }
  func.func @transform_2(%arg0: i32, %arg1: i32) -> (i32, i32) {
    %c0_i32 = arith.constant 0 : i32
    %c0_i32_0 = arith.constant 0 : i32
    return %arg1, %c0_i32 : i32, i32
  }
  func.func @transform_3(%arg0: i32, %arg1: i32) -> (i32, i32) {
    %c0_i32 = arith.constant 0 : i32
    %c0_i32_0 = arith.constant 0 : i32
    return %arg1, %c0_i32 : i32, i32
  }
  func.func @transform_4(%arg0: i32, %arg1: i32) -> (i32, i32) {
    %c0_i32 = arith.constant 0 : i32
    %c0_i32_0 = arith.constant 0 : i32
    return %c0_i32, %arg1 : i32, i32
  }
  func.func @transform_5(%arg0: i32, %arg1: i32) -> (i32, i32) {
    %c0_i32 = arith.constant 0 : i32
    %c0_i32_0 = arith.constant 0 : i32
    %c0_i32_1 = arith.constant 0 : i32
    return %c0_i32, %c0_i32_0 : i32, i32
  }
  func.func @transform_6(%arg0: i32, %arg1: i32) -> (i32, i32) {
    %c0_i32 = arith.constant 0 : i32
    %c0_i32_0 = arith.constant 0 : i32
    %c0_i32_1 = arith.constant 0 : i32
    return %c0_i32, %c0_i32_0 : i32, i32
  }
  func.func @transform_7(%arg0: i32, %arg1: i32) -> (i32, i32) {
    %c0_i32 = arith.constant 0 : i32
    %c0_i32_0 = arith.constant 0 : i32
    %c0_i32_1 = arith.constant 0 : i32
    return %c0_i32, %c0_i32_0 : i32, i32
  }
  func.func @transform_8(%arg0: i32, %arg1: i32) -> (i32, i32) {
    %c0_i32 = arith.constant 0 : i32
    %c0_i32_0 = arith.constant 0 : i32
    %c0_i32_1 = arith.constant 0 : i32
    return %c0_i32, %c0_i32_0 : i32, i32
  }
  func.func @transform_9(%arg0: i32, %arg1: i32) -> (i32, i32, i32) {
    %c0_i32 = arith.constant 0 : i32
    %c0_i32_0 = arith.constant 0 : i32
    %c0_i32_1 = arith.constant 0 : i32
    return %arg0, %c0_i32, %c0_i32_0 : i32, i32, i32
  }
  func.func @transform_10(%arg0: i32, %arg1: i32) -> (i32, i32, i32) {
    %c0_i32 = arith.constant 0 : i32
    %c0_i32_0 = arith.constant 0 : i32
    %c0_i32_1 = arith.constant 0 : i32
    return %arg0, %c0_i32, %c0_i32_0 : i32, i32, i32
  }
  func.func @transform_11(%arg0: i32, %arg1: i32) -> (i32, i32, i32) {
    %c0_i32 = arith.constant 0 : i32
    %c0_i32_0 = arith.constant 0 : i32
    %c0_i32_1 = arith.constant 0 : i32
    return %arg0, %c0_i32, %c0_i32_0 : i32, i32, i32
  }
  func.func @transform_12(%arg0: i32, %arg1: i32) -> (i32, i32, i32) {
    %c0_i32 = arith.constant 0 : i32
    %c0_i32_0 = arith.constant 0 : i32
    %c0_i32_1 = arith.constant 0 : i32
    return %arg0, %c0_i32, %c0_i32_0 : i32, i32, i32
  }
  func.func @transform_13(%arg0: i32, %arg1: i32) -> (i32, i32, i32) {
    %c0_i32 = arith.constant 0 : i32
    %c0_i32_0 = arith.constant 0 : i32
    %c0_i32_1 = arith.constant 0 : i32
    return %arg0, %c0_i32, %c0_i32_0 : i32, i32, i32
  }
  func.func @transform_14(%arg0: i32, %arg1: i32) -> (i32, i32, i32) {
    %c0_i32 = arith.constant 0 : i32
    %c0_i32_0 = arith.constant 0 : i32
    %c0_i32_1 = arith.constant 0 : i32
    return %arg0, %c0_i32, %c0_i32_0 : i32, i32, i32
  }
  func.func @transform_15(%arg0: i32, %arg1: i32) -> (i32, i32, i32) {
    %c0_i32 = arith.constant 0 : i32
    %c0_i32_0 = arith.constant 0 : i32
    %c0_i32_1 = arith.constant 0 : i32
    return %arg0, %c0_i32, %c0_i32_0 : i32, i32, i32
  }
  func.func @transform_16(%arg0: i32, %arg1: i32) -> (i32, i32, i32) {
    %c0_i32 = arith.constant 0 : i32
    %c0_i32_0 = arith.constant 0 : i32
    %c0_i32_1 = arith.constant 0 : i32
    return %arg0, %c0_i32, %c0_i32_0 : i32, i32, i32
  }
  func.func @transform_17(%arg0: i32, %arg1: i32) -> (i32, i32, i32) {
    %c0_i32 = arith.constant 0 : i32
    %c0_i32_0 = arith.constant 0 : i32
    %c0_i32_1 = arith.constant 0 : i32
    %c0_i32_2 = arith.constant 0 : i32
    return %c0_i32, %c0_i32_0, %c0_i32_1 : i32, i32, i32
  }
  func.func @transform_18(%arg0: i32, %arg1: i32) -> (i32, i32, i32) {
    %c0_i32 = arith.constant 0 : i32
    %c0_i32_0 = arith.constant 0 : i32
    %c0_i32_1 = arith.constant 0 : i32
    %c0_i32_2 = arith.constant 0 : i32
    return %c0_i32, %c0_i32_0, %c0_i32_1 : i32, i32, i32
  }
  func.func @transform_19(%arg0: i32, %arg1: i32) -> (i32, i32) {
    %c0_i32 = arith.constant 0 : i32
    %c0_i32_0 = arith.constant 0 : i32
    %c0_i32_1 = arith.constant 0 : i32
    return %c0_i32, %c0_i32_0 : i32, i32
  }
  func.func @transform_20(%arg0: i32, %arg1: i32) -> (i32, i32) {
    %c0_i32 = arith.constant 0 : i32
    %c0_i32_0 = arith.constant 0 : i32
    %c0_i32_1 = arith.constant 0 : i32
    return %c0_i32, %c0_i32_0 : i32, i32
  }
  func.func @transform_21(%arg0: i32, %arg1: i32) -> (i32, i32) {
    %c0_i32 = arith.constant 0 : i32
    %c0_i32_0 = arith.constant 0 : i32
    return %c0_i32, %arg1 : i32, i32
  }
}

</mosaic_0001>

<llo_original>
// kernel: tpu_custom_call.1
$region0: #{tpu_custom_call.1}
  #allocation0 [shape = 'u32[]', space=smem, size = 0x4, offset = 0x4, fixed_abs, tag = 'smem constant byte address 0x4 - core index']
  #allocation1 [shape = 'u32[72,128]{1,0:T(1,128)}', space=vmem, size = 0x9000, scoped, tag = 'internal scratch']
  #allocation2 [shape = 'f32[64,32]{1,0:T(8,128)}', space=vmem, size = 0x8000, scoped, tag = 'scratch operand']
  #allocation3 [shape = 'f32[2,128,32]{2,1,0:T(8,128)}', space=vmem, size = 0x20000, scoped, tag = 'scratch operand']
  #allocation4 [shape = 'f32[64,32]{1,0:T(8,128)}', space=vmem, size = 0x8000, scoped, tag = 'scratch operand']
  #allocation5 [shape = 'f32[64,32]{1,0:T(8,128)}', space=vmem, size = 0x8000, scoped, tag = 'scratch operand']
  #allocation6 [shape = 'bf16[128,64]{1,0:T(8,128)(2,1)}', space=vmem, size = 0x8000, scoped, tag = 'scratch operand']
  #allocation7 [shape = 'f32[1,1]{1,0:T(1,128)S(1)}', space=vmem, size = 0x200, scoped, tag = 'scoped memory for tpu_custom_call.1']
  %s0 = inlined_call_operand.vmem [shape: f32[64,2], index: 0, kind: input, shape index: {}]
  %s1 = inlined_call_operand.vmem [shape: f32[256,1], index: 1, kind: input, shape index: {}]
  %s2 = inlined_call_operand.vmem [shape: s32[256,1], index: 2, kind: input, shape index: {}]
  %s3 = inlined_call_operand.vmem [shape: s32[256,1], index: 3, kind: input, shape index: {}]
  %s4 = inlined_call_operand.vmem [shape: s32[1,256], index: 4, kind: input, shape index: {}]
  %s5 = inlined_call_operand.vmem [shape: bf16[2,32], index: 5, kind: input, shape index: {}]
  %s6 = inlined_call_operand.vmem [shape: f32[1,32], index: 6, kind: input, shape index: {}]
  %s7 = inlined_call_operand.vmem [shape: f32[1,32], index: 7, kind: input, shape index: {}]
  %s8 = inlined_call_operand.vmem [shape: f32[1,32], index: 8, kind: input, shape index: {}]
  %s9 = inlined_call_operand.vmem [shape: bf16[3,32,160], index: 9, kind: input, shape index: {}]
  %s10 = inlined_call_operand.vmem [shape: f32[3,1,160], index: 10, kind: input, shape index: {}]
  %s11 = inlined_call_operand.vmem [shape: bf16[3,32,32], index: 11, kind: input, shape index: {}]
  %s12 = inlined_call_operand.vmem [shape: f32[3,1,32], index: 12, kind: input, shape index: {}]
  %s13 = inlined_call_operand.vmem [shape: f32[3,1,32], index: 13, kind: input, shape index: {}]
  %s14 = inlined_call_operand.vmem [shape: f32[3,1,32], index: 14, kind: input, shape index: {}]
  %s15 = inlined_call_operand.vmem [shape: f32[3,1,32], index: 15, kind: input, shape index: {}]
  %s16 = inlined_call_operand.vmem [shape: f32[3,1,32], index: 16, kind: input, shape index: {}]
  %s17 = inlined_call_operand.vmem [shape: bf16[2,32,32], index: 17, kind: input, shape index: {}]
  %s18 = inlined_call_operand.vmem [shape: f32[2,1,32], index: 18, kind: input, shape index: {}]
  %s19 = inlined_call_operand.vmem [shape: bf16[1,32], index: 19, kind: input, shape index: {}]
  %s20 = inlined_call_operand.<no memory space> [shape: f32[1,1], index: 20, kind: input, shape index: {}]
  %s21 = inlined_call_operand.hbm [shape: f32[1,256], index: 21, kind: output, shape index: {}]
  %s22 = sld [smem:[#allocation0]]
  $region141: #{tpu_custom_call.1} parent=0
    _
  %s24 = ssub.s32 1, %s22
  %s25 = scalar_select 0, %s24, %s22
  %v26 = vstv %s20
  %27 = vst [vmem:[#allocation7] sm:$0x1] %v26
  $region1: #{tpu_custom_call.1} parent=0
    #allocation8 [shape = 'u8[1024]{0}', space=vmem, size = 0x400, scoped, tag = 'output window, operand 0']
    #allocation9 [shape = 's32[2]{0}', space=sflag, size = 0x8, scoped, tag = 'scoped memory for tpu_custom_call.1']
    %28 = vsyncpa [#allocation9], 0
    %s29 = scalar_lea.sflag [#allocation9], 1
    %30 = vsyncpa %s29, 0
    loop: start=0, step=1, limit=8
    $region2: #{tpu_custom_call.1} parent=1 // loop_pre_header
      _
    $region3: #{tpu_custom_call.1} parent=1 // loop_header
      %s32 = sphi 0, %s36
      %p33 = scmp.ge.s32.totalorder %s32, 8
      %s39 = sphi 0, %s51
      %s40 = sphi 0, %s47
      %s41 = sphi 0, %s39
      %s42 = sphi 0, %s40
      %s43 = sphi 0, %s41
      %s44 = sphi 0, %s42
      %s52 = sphi 0, %s52
      %s54 = sphi 0, %s52
      %s55 = sphi 0, %s54
      %s69 = sphi 0, %s55
      %s75 = sphi 0, %s77
      %s78 = sphi 0, %s75
      %s79 = sphi 0, %s78
      %s95 = sphi 0, %s79
      %s101 = sphi 0, %s103
      %s104 = sphi 0, %s101
      %s105 = sphi 0, %s104
      %s121 = sphi 0, %s105
      %s127 = sphi 0, %s129
      %s130 = sphi 0, %s127
      %s131 = sphi 0, %s130
      %s147 = sphi 0, %s131
      %s153 = sphi 0, %s155
      %s156 = sphi 0, %s153
      %s157 = sphi 0, %s156
      %s173 = sphi 0, %s157
      %s177 = sphi 0, %s177
      %s179 = sphi 0, %s177
      %s180 = sphi 0, %s179
      %s194 = sphi 0, %s180
      %s198 = sphi 0, %s198
      %s200 = sphi 0, %s198
      %s201 = sphi 0, %s200
      %s215 = sphi 0, %s201
      %s219 = sphi 0, %s219
      %s221 = sphi 0, %s219
      %s222 = sphi 0, %s221
      %s236 = sphi 0, %s222
      %s240 = sphi 0, %s240
      %s242 = sphi 0, %s240
      %s243 = sphi 0, %s242
      %s257 = sphi 0, %s243
      %s263 = sphi 0, %s265
      %s266 = sphi 0, %s263
      %s267 = sphi 0, %s266
      %s283 = sphi 0, %s267
      %s289 = sphi 0, %s291
      %s292 = sphi 0, %s289
      %s293 = sphi 0, %s292
      %s309 = sphi 0, %s293
      %s315 = sphi 0, %s317
      %s318 = sphi 0, %s315
      %s319 = sphi 0, %s318
      %s335 = sphi 0, %s319
      %s341 = sphi 0, %s343
      %s344 = sphi 0, %s341
      %s345 = sphi 0, %s344
      %s361 = sphi 0, %s345
      %s367 = sphi 0, %s369
      %s370 = sphi 0, %s367
      %s371 = sphi 0, %s370
      %s387 = sphi 0, %s371
      %s393 = sphi 0, %s395
      %s396 = sphi 0, %s393
      %s397 = sphi 0, %s396
      %s413 = sphi 0, %s397
      %s419 = sphi 0, %s421
      %s422 = sphi 0, %s419
      %s423 = sphi 0, %s422
      %s439 = sphi 0, %s423
      %s445 = sphi 0, %s447
      %s448 = sphi 0, %s445
      %s449 = sphi 0, %s448
      %s465 = sphi 0, %s449
      %s469 = sphi 0, %s469
      %s471 = sphi 0, %s469
      %s472 = sphi 0, %s471
      %s486 = sphi 0, %s472
      %s490 = sphi 0, %s490
      %s492 = sphi 0, %s490
      %s493 = sphi 0, %s492
      %s507 = sphi 0, %s493
      %s511 = sphi 0, %s511
      %s513 = sphi 0, %s511
      %s514 = sphi 0, %s513
      %s528 = sphi 0, %s514
      %s532 = sphi 0, %s532
      %s534 = sphi 0, %s532
      %s535 = sphi 0, %s534
      %s549 = sphi 0, %s535
      %s555 = sphi 0, %s557
      %s558 = sphi 0, %s555
      %s559 = sphi 0, %s558
      %s575 = sphi 0, %s559
    $region4: #{tpu_custom_call.1} parent=1 // loop_header_branch
      %35 = sbr.rel (%p33) target = $region8
    $region5: #{tpu_custom_call.1} parent=1 // loop_body
      %s37 = ssub.s32 %s32, 1
      %s38 = ssub.s32 %s32, 2
      %s45 = sadd.s32 1, %s40
      %p46 = scmp.ge.s32.totalorder %s45, 2
      %s47 = scalar_select %p46, 0, %s45
      %s48 = sadd.s32 1, %s39
      %s49 = scalar_select %p46, %s48, %s39
      %p50 = scmp.ge.s32.totalorder %s49, 3
      %s51 = scalar_select %p50, 0, %s49
      %s53 = sadd.s32 %s52, 1
      %p56 = scmp.eq.s32.totalorder %s32, 5
      %p57 = scmp.ne.s32.totalorder %s52, %s54
      %p58 = scmp.eq.s32.totalorder %s32, 0
      %p59 = por %p57, %p58
      %p60 = scmp.ne.s32.totalorder %s52, %s54
      %p61 = scmp.eq.s32.totalorder %s37, 5
      %p62 = por %p60, %p61
      %p63 = scmp.ne.s32.totalorder %s54, %s55
      %p64 = scmp.eq.s32.totalorder %s37, 0
      %p65 = por %p63, %p64
      %p66 = scmp.ne.s32.totalorder %s54, %s55
      %p67 = scmp.eq.s32.totalorder %s38, 5
      %p68 = por %p66, %p67
      %p70 = scmp.ne.s32.totalorder %s55, %s69
      %p71 = scmp.eq.s32.totalorder %s38, 0
      %p72 = por %p70, %p71
      %s73 = ssub.s32 %s40, %s47
      %p74 = scmp.eq.s32.totalorder %s73, 0
      %s76 = sadd.s32 %s75, 1
      %s77 = scalar_select %p74, %s75, %s76
      %p80 = pneg %p74
      %p81 = scmp.eq.s32.totalorder %s32, 5
      %p82 = por %p80, %p81
      %p83 = scmp.ne.s32.totalorder %s75, %s78
      %p84 = scmp.eq.s32.totalorder %s32, 0
      %p85 = por %p83, %p84
      %p86 = scmp.ne.s32.totalorder %s75, %s78
      %p87 = scmp.eq.s32.totalorder %s37, 5
      %p88 = por %p86, %p87
      %p89 = scmp.ne.s32.totalorder %s78, %s79
      %p90 = scmp.eq.s32.totalorder %s37, 0
      %p91 = por %p89, %p90
      %p92 = scmp.ne.s32.totalorder %s78, %s79
      %p93 = scmp.eq.s32.totalorder %s38, 5
      %p94 = por %p92, %p93
      %p96 = scmp.ne.s32.totalorder %s79, %s95
      %p97 = scmp.eq.s32.totalorder %s38, 0
      %p98 = por %p96, %p97
      %s99 = ssub.s32 %s40, %s47
      %p100 = scmp.eq.s32.totalorder %s99, 0
      %s102 = sadd.s32 %s101, 1
      %s103 = scalar_select %p100, %s101, %s102
      %p106 = pneg %p100
      %p107 = scmp.eq.s32.totalorder %s32, 5
      %p108 = por %p106, %p107
      %p109 = scmp.ne.s32.totalorder %s101, %s104
      %p110 = scmp.eq.s32.totalorder %s32, 0
      %p111 = por %p109, %p110
      %p112 = scmp.ne.s32.totalorder %s101, %s104
      %p113 = scmp.eq.s32.totalorder %s37, 5
      %p114 = por %p112, %p113
      %p115 = scmp.ne.s32.totalorder %s104, %s105
      %p116 = scmp.eq.s32.totalorder %s37, 0
      %p117 = por %p115, %p116
      %p118 = scmp.ne.s32.totalorder %s104, %s105
      %p119 = scmp.eq.s32.totalorder %s38, 5
      %p120 = por %p118, %p119
      %p122 = scmp.ne.s32.totalorder %s105, %s121
      %p123 = scmp.eq.s32.totalorder %s38, 0
      %p124 = por %p122, %p123
      %s125 = ssub.s32 %s40, %s47
      %p126 = scmp.eq.s32.totalorder %s125, 0
      %s128 = sadd.s32 %s127, 1
      %s129 = scalar_select %p126, %s127, %s128
      %p132 = pneg %p126
      %p133 = scmp.eq.s32.totalorder %s32, 5
      %p134 = por %p132, %p133
      %p135 = scmp.ne.s32.totalorder %s127, %s130
      %p136 = scmp.eq.s32.totalorder %s32, 0
      %p137 = por %p135, %p136
      %p138 = scmp.ne.s32.totalorder %s127, %s130
      %p139 = scmp.eq.s32.totalorder %s37, 5
      %p140 = por %p138, %p139
      %p141 = scmp.ne.s32.totalorder %s130, %s131
      %p142 = scmp.eq.s32.totalorder %s37, 0
      %p143 = por %p141, %p142
      %p144 = scmp.ne.s32.totalorder %s130, %s131
      %p145 = scmp.eq.s32.totalorder %s38, 5
      %p146 = por %p144, %p145
      %p148 = scmp.ne.s32.totalorder %s131, %s147
      %p149 = scmp.eq.s32.totalorder %s38, 0
      %p150 = por %p148, %p149
      %s151 = ssub.s32 %s40, %s47
      %p152 = scmp.eq.s32.totalorder %s151, 0
      %s154 = sadd.s32 %s153, 1
      %s155 = scalar_select %p152, %s153, %s154
      %p158 = pneg %p152
      %p159 = scmp.eq.s32.totalorder %s32, 5
      %p160 = por %p158, %p159
      %p161 = scmp.ne.s32.totalorder %s153, %s156
      %p162 = scmp.eq.s32.totalorder %s32, 0
      %p163 = por %p161, %p162
      %p164 = scmp.ne.s32.totalorder %s153, %s156
      %p165 = scmp.eq.s32.totalorder %s37, 5
      %p166 = por %p164, %p165
      %p167 = scmp.ne.s32.totalorder %s156, %s157
      %p168 = scmp.eq.s32.totalorder %s37, 0
      %p169 = por %p167, %p168
      %p170 = scmp.ne.s32.totalorder %s156, %s157
      %p171 = scmp.eq.s32.totalorder %s38, 5
      %p172 = por %p170, %p171
      %p174 = scmp.ne.s32.totalorder %s157, %s173
      %p175 = scmp.eq.s32.totalorder %s38, 0
      %p176 = por %p174, %p175
      %s178 = sadd.s32 %s177, 1
      %p181 = scmp.eq.s32.totalorder %s32, 5
      %p182 = scmp.ne.s32.totalorder %s177, %s179
      %p183 = scmp.eq.s32.totalorder %s32, 0
      %p184 = por %p182, %p183
      %p185 = scmp.ne.s32.totalorder %s177, %s179
      %p186 = scmp.eq.s32.totalorder %s37, 5
      %p187 = por %p185, %p186
      %p188 = scmp.ne.s32.totalorder %s179, %s180
      %p189 = scmp.eq.s32.totalorder %s37, 0
      %p190 = por %p188, %p189
      %p191 = scmp.ne.s32.totalorder %s179, %s180
      %p192 = scmp.eq.s32.totalorder %s38, 5
      %p193 = por %p191, %p192
      %p195 = scmp.ne.s32.totalorder %s180, %s194
      %p196 = scmp.eq.s32.totalorder %s38, 0
      %p197 = por %p195, %p196
      %s199 = sadd.s32 %s198, 1
      %p202 = scmp.eq.s32.totalorder %s32, 5
      %p203 = scmp.ne.s32.totalorder %s198, %s200
      %p204 = scmp.eq.s32.totalorder %s32, 0
      %p205 = por %p203, %p204
      %p206 = scmp.ne.s32.totalorder %s198, %s200
      %p207 = scmp.eq.s32.totalorder %s37, 5
      %p208 = por %p206, %p207
      %p209 = scmp.ne.s32.totalorder %s200, %s201
      %p210 = scmp.eq.s32.totalorder %s37, 0
      %p211 = por %p209, %p210
      %p212 = scmp.ne.s32.totalorder %s200, %s201
      %p213 = scmp.eq.s32.totalorder %s38, 5
      %p214 = por %p212, %p213
      %p216 = scmp.ne.s32.totalorder %s201, %s215
      %p217 = scmp.eq.s32.totalorder %s38, 0
      %p218 = por %p216, %p217
      %s220 = sadd.s32 %s219, 1
      %p223 = scmp.eq.s32.totalorder %s32, 5
      %p224 = scmp.ne.s32.totalorder %s219, %s221
      %p225 = scmp.eq.s32.totalorder %s32, 0
      %p226 = por %p224, %p225
      %p227 = scmp.ne.s32.totalorder %s219, %s221
      %p228 = scmp.eq.s32.totalorder %s37, 5
      %p229 = por %p227, %p228
      %p230 = scmp.ne.s32.totalorder %s221, %s222
      %p231 = scmp.eq.s32.totalorder %s37, 0
      %p232 = por %p230, %p231
      %p233 = scmp.ne.s32.totalorder %s221, %s222
      %p234 = scmp.eq.s32.totalorder %s38, 5
      %p235 = por %p233, %p234
      %p237 = scmp.ne.s32.totalorder %s222, %s236
      %p238 = scmp.eq.s32.totalorder %s38, 0
      %p239 = por %p237, %p238
      %s241 = sadd.s32 %s240, 1
      %p244 = scmp.eq.s32.totalorder %s32, 5
      %p245 = scmp.ne.s32.totalorder %s240, %s242
      %p246 = scmp.eq.s32.totalorder %s32, 0
      %p247 = por %p245, %p246
      %p248 = scmp.ne.s32.totalorder %s240, %s242
      %p249 = scmp.eq.s32.totalorder %s37, 5
      %p250 = por %p248, %p249
      %p251 = scmp.ne.s32.totalorder %s242, %s243
      %p252 = scmp.eq.s32.totalorder %s37, 0
      %p253 = por %p251, %p252
      %p254 = scmp.ne.s32.totalorder %s242, %s243
      %p255 = scmp.eq.s32.totalorder %s38, 5
      %p256 = por %p254, %p255
      %p258 = scmp.ne.s32.totalorder %s243, %s257
      %p259 = scmp.eq.s32.totalorder %s38, 0
      %p260 = por %p258, %p259
      %s261 = ssub.s32 %s39, %s51
      %p262 = scmp.eq.s32.totalorder %s261, 0
      %s264 = sadd.s32 %s263, 1
      %s265 = scalar_select %p262, %s263, %s264
      %p268 = pneg %p262
      %p269 = scmp.eq.s32.totalorder %s32, 5
      %p270 = por %p268, %p269
      %p271 = scmp.ne.s32.totalorder %s263, %s266
      %p272 = scmp.eq.s32.totalorder %s32, 0
      %p273 = por %p271, %p272
      %p274 = scmp.ne.s32.totalorder %s263, %s266
      %p275 = scmp.eq.s32.totalorder %s37, 5
      %p276 = por %p274, %p275
      %p277 = scmp.ne.s32.totalorder %s266, %s267
      %p278 = scmp.eq.s32.totalorder %s37, 0
      %p279 = por %p277, %p278
      %p280 = scmp.ne.s32.totalorder %s266, %s267
      %p281 = scmp.eq.s32.totalorder %s38, 5
      %p282 = por %p280, %p281
      %p284 = scmp.ne.s32.totalorder %s267, %s283
      %p285 = scmp.eq.s32.totalorder %s38, 0
      %p286 = por %p284, %p285
      %s287 = ssub.s32 %s39, %s51
      %p288 = scmp.eq.s32.totalorder %s287, 0
      %s290 = sadd.s32 %s289, 1
      %s291 = scalar_select %p288, %s289, %s290
      %p294 = pneg %p288
      %p295 = scmp.eq.s32.totalorder %s32, 5
      %p296 = por %p294, %p295
      %p297 = scmp.ne.s32.totalorder %s289, %s292
      %p298 = scmp.eq.s32.totalorder %s32, 0
      %p299 = por %p297, %p298
      %p300 = scmp.ne.s32.totalorder %s289, %s292
      %p301 = scmp.eq.s32.totalorder %s37, 5
      %p302 = por %p300, %p301
      %p303 = scmp.ne.s32.totalorder %s292, %s293
      %p304 = scmp.eq.s32.totalorder %s37, 0
      %p305 = por %p303, %p304
      %p306 = scmp.ne.s32.totalorder %s292, %s293
      %p307 = scmp.eq.s32.totalorder %s38, 5
      %p308 = por %p306, %p307
      %p310 = scmp.ne.s32.totalorder %s293, %s309
      %p311 = scmp.eq.s32.totalorder %s38, 0
      %p312 = por %p310, %p311
      %s313 = ssub.s32 %s39, %s51
      %p314 = scmp.eq.s32.totalorder %s313, 0
      %s316 = sadd.s32 %s315, 1
      %s317 = scalar_select %p314, %s315, %s316
      %p320 = pneg %p314
      %p321 = scmp.eq.s32.totalorder %s32, 5
      %p322 = por %p320, %p321
      %p323 = scmp.ne.s32.totalorder %s315, %s318
      %p324 = scmp.eq.s32.totalorder %s32, 0
      %p325 = por %p323, %p324
      %p326 = scmp.ne.s32.totalorder %s315, %s318
      %p327 = scmp.eq.s32.totalorder %s37, 5
      %p328 = por %p326, %p327
      %p329 = scmp.ne.s32.totalorder %s318, %s319
      %p330 = scmp.eq.s32.totalorder %s37, 0
      %p331 = por %p329, %p330
      %p332 = scmp.ne.s32.totalorder %s318, %s319
      %p333 = scmp.eq.s32.totalorder %s38, 5
      %p334 = por %p332, %p333
      %p336 = scmp.ne.s32.totalorder %s319, %s335
      %p337 = scmp.eq.s32.totalorder %s38, 0
      %p338 = por %p336, %p337
      %s339 = ssub.s32 %s39, %s51
      %p340 = scmp.eq.s32.totalorder %s339, 0
      %s342 = sadd.s32 %s341, 1
      %s343 = scalar_select %p340, %s341, %s342
      %p346 = pneg %p340
      %p347 = scmp.eq.s32.totalorder %s32, 5
      %p348 = por %p346, %p347
      %p349 = scmp.ne.s32.totalorder %s341, %s344
      %p350 = scmp.eq.s32.totalorder %s32, 0
      %p351 = por %p349, %p350
      %p352 = scmp.ne.s32.totalorder %s341, %s344
      %p353 = scmp.eq.s32.totalorder %s37, 5
      %p354 = por %p352, %p353
      %p355 = scmp.ne.s32.totalorder %s344, %s345
      %p356 = scmp.eq.s32.totalorder %s37, 0
      %p357 = por %p355, %p356
      %p358 = scmp.ne.s32.totalorder %s344, %s345
      %p359 = scmp.eq.s32.totalorder %s38, 5
      %p360 = por %p358, %p359
      %p362 = scmp.ne.s32.totalorder %s345, %s361
      %p363 = scmp.eq.s32.totalorder %s38, 0
      %p364 = por %p362, %p363
      %s365 = ssub.s32 %s39, %s51
      %p366 = scmp.eq.s32.totalorder %s365, 0
      %s368 = sadd.s32 %s367, 1
      %s369 = scalar_select %p366, %s367, %s368
      %p372 = pneg %p366
      %p373 = scmp.eq.s32.totalorder %s32, 5
      %p374 = por %p372, %p373
      %p375 = scmp.ne.s32.totalorder %s367, %s370
      %p376 = scmp.eq.s32.totalorder %s32, 0
      %p377 = por %p375, %p376
      %p378 = scmp.ne.s32.totalorder %s367, %s370
      %p379 = scmp.eq.s32.totalorder %s37, 5
      %p380 = por %p378, %p379
      %p381 = scmp.ne.s32.totalorder %s370, %s371
      %p382 = scmp.eq.s32.totalorder %s37, 0
      %p383 = por %p381, %p382
      %p384 = scmp.ne.s32.totalorder %s370, %s371
      %p385 = scmp.eq.s32.totalorder %s38, 5
      %p386 = por %p384, %p385
      %p388 = scmp.ne.s32.totalorder %s371, %s387
      %p389 = scmp.eq.s32.totalorder %s38, 0
      %p390 = por %p388, %p389
      %s391 = ssub.s32 %s39, %s51
      %p392 = scmp.eq.s32.totalorder %s391, 0
      %s394 = sadd.s32 %s393, 1
      %s395 = scalar_select %p392, %s393, %s394
      %p398 = pneg %p392
      %p399 = scmp.eq.s32.totalorder %s32, 5
      %p400 = por %p398, %p399
      %p401 = scmp.ne.s32.totalorder %s393, %s396
      %p402 = scmp.eq.s32.totalorder %s32, 0
      %p403 = por %p401, %p402
      %p404 = scmp.ne.s32.totalorder %s393, %s396
      %p405 = scmp.eq.s32.totalorder %s37, 5
      %p406 = por %p404, %p405
      %p407 = scmp.ne.s32.totalorder %s396, %s397
      %p408 = scmp.eq.s32.totalorder %s37, 0
      %p409 = por %p407, %p408
      %p410 = scmp.ne.s32.totalorder %s396, %s397
      %p411 = scmp.eq.s32.totalorder %s38, 5
      %p412 = por %p410, %p411
      %p414 = scmp.ne.s32.totalorder %s397, %s413
      %p415 = scmp.eq.s32.totalorder %s38, 0
      %p416 = por %p414, %p415
      %s417 = ssub.s32 %s39, %s51
      %p418 = scmp.eq.s32.totalorder %s417, 0
      %s420 = sadd.s32 %s419, 1
      %s421 = scalar_select %p418, %s419, %s420
      %p424 = pneg %p418
      %p425 = scmp.eq.s32.totalorder %s32, 5
      %p426 = por %p424, %p425
      %p427 = scmp.ne.s32.totalorder %s419, %s422
      %p428 = scmp.eq.s32.totalorder %s32, 0
      %p429 = por %p427, %p428
      %p430 = scmp.ne.s32.totalorder %s419, %s422
      %p431 = scmp.eq.s32.totalorder %s37, 5
      %p432 = por %p430, %p431
      %p433 = scmp.ne.s32.totalorder %s422, %s423
      %p434 = scmp.eq.s32.totalorder %s37, 0
      %p435 = por %p433, %p434
      %p436 = scmp.ne.s32.totalorder %s422, %s423
      %p437 = scmp.eq.s32.totalorder %s38, 5
      %p438 = por %p436, %p437
      %p440 = scmp.ne.s32.totalorder %s423, %s439
      %p441 = scmp.eq.s32.totalorder %s38, 0
      %p442 = por %p440, %p441
      %s443 = ssub.s32 %s39, %s51
      %p444 = scmp.eq.s32.totalorder %s443, 0
      %s446 = sadd.s32 %s445, 1
      %s447 = scalar_select %p444, %s445, %s446
      %p450 = pneg %p444
      %p451 = scmp.eq.s32.totalorder %s32, 5
      %p452 = por %p450, %p451
      %p453 = scmp.ne.s32.totalorder %s445, %s448
      %p454 = scmp.eq.s32.totalorder %s32, 0
      %p455 = por %p453, %p454
      %p456 = scmp.ne.s32.totalorder %s445, %s448
      %p457 = scmp.eq.s32.totalorder %s37, 5
      %p458 = por %p456, %p457
      %p459 = scmp.ne.s32.totalorder %s448, %s449
      %p460 = scmp.eq.s32.totalorder %s37, 0
      %p461 = por %p459, %p460
      %p462 = scmp.ne.s32.totalorder %s448, %s449
      %p463 = scmp.eq.s32.totalorder %s38, 5
      %p464 = por %p462, %p463
      %p466 = scmp.ne.s32.totalorder %s449, %s465
      %p467 = scmp.eq.s32.totalorder %s38, 0
      %p468 = por %p466, %p467
      %s470 = sadd.s32 %s469, 1
      %p473 = scmp.eq.s32.totalorder %s32, 5
      %p474 = scmp.ne.s32.totalorder %s469, %s471
      %p475 = scmp.eq.s32.totalorder %s32, 0
      %p476 = por %p474, %p475
      %p477 = scmp.ne.s32.totalorder %s469, %s471
      %p478 = scmp.eq.s32.totalorder %s37, 5
      %p479 = por %p477, %p478
      %p480 = scmp.ne.s32.totalorder %s471, %s472
      %p481 = scmp.eq.s32.totalorder %s37, 0
      %p482 = por %p480, %p481
      %p483 = scmp.ne.s32.totalorder %s471, %s472
      %p484 = scmp.eq.s32.totalorder %s38, 5
      %p485 = por %p483, %p484
      %p487 = scmp.ne.s32.totalorder %s472, %s486
      %p488 = scmp.eq.s32.totalorder %s38, 0
      %p489 = por %p487, %p488
      %s491 = sadd.s32 %s490, 1
      %p494 = scmp.eq.s32.totalorder %s32, 5
      %p495 = scmp.ne.s32.totalorder %s490, %s492
      %p496 = scmp.eq.s32.totalorder %s32, 0
      %p497 = por %p495, %p496
      %p498 = scmp.ne.s32.totalorder %s490, %s492
      %p499 = scmp.eq.s32.totalorder %s37, 5
      %p500 = por %p498, %p499
      %p501 = scmp.ne.s32.totalorder %s492, %s493
      %p502 = scmp.eq.s32.totalorder %s37, 0
      %p503 = por %p501, %p502
      %p504 = scmp.ne.s32.totalorder %s492, %s493
      %p505 = scmp.eq.s32.totalorder %s38, 5
      %p506 = por %p504, %p505
      %p508 = scmp.ne.s32.totalorder %s493, %s507
      %p509 = scmp.eq.s32.totalorder %s38, 0
      %p510 = por %p508, %p509
      %s512 = sadd.s32 %s511, 1
      %p515 = scmp.eq.s32.totalorder %s32, 5
      %p516 = scmp.ne.s32.totalorder %s511, %s513
      %p517 = scmp.eq.s32.totalorder %s32, 0
      %p518 = por %p516, %p517
      %p519 = scmp.ne.s32.totalorder %s511, %s513
      %p520 = scmp.eq.s32.totalorder %s37, 5
      %p521 = por %p519, %p520
      %p522 = scmp.ne.s32.totalorder %s513, %s514
      %p523 = scmp.eq.s32.totalorder %s37, 0
      %p524 = por %p522, %p523
      %p525 = scmp.ne.s32.totalorder %s513, %s514
      %p526 = scmp.eq.s32.totalorder %s38, 5
      %p527 = por %p525, %p526
      %p529 = scmp.ne.s32.totalorder %s514, %s528
      %p530 = scmp.eq.s32.totalorder %s38, 0
      %p531 = por %p529, %p530
      %s533 = sadd.s32 %s532, 1
      %p536 = scmp.eq.s32.totalorder %s32, 5
      %p537 = scmp.ne.s32.totalorder %s532, %s534
      %p538 = scmp.eq.s32.totalorder %s32, 0
      %p539 = por %p537, %p538
      %p540 = scmp.ne.s32.totalorder %s532, %s534
      %p541 = scmp.eq.s32.totalorder %s37, 5
      %p542 = por %p540, %p541
      %p543 = scmp.ne.s32.totalorder %s534, %s535
      %p544 = scmp.eq.s32.totalorder %s37, 0
      %p545 = por %p543, %p544
      %p546 = scmp.ne.s32.totalorder %s534, %s535
      %p547 = scmp.eq.s32.totalorder %s38, 5
      %p548 = por %p546, %p547
      %p550 = scmp.ne.s32.totalorder %s535, %s549
      %p551 = scmp.eq.s32.totalorder %s38, 0
      %p552 = por %p550, %p551
      %s553 = ssub.s32 %s40, %s47
      %p554 = scmp.eq.s32.totalorder %s553, 0
      %s556 = sadd.s32 %s555, 1
      %s557 = scalar_select %p554, %s555, %s556
      %p560 = pneg %p554
      %p561 = scmp.eq.s32.totalorder %s32, 5
      %p562 = por %p560, %p561
      %p563 = scmp.ne.s32.totalorder %s555, %s558
      %p564 = scmp.eq.s32.totalorder %s32, 0
      %p565 = por %p563, %p564
      %p566 = scmp.ne.s32.totalorder %s555, %s558
      %p567 = scmp.eq.s32.totalorder %s37, 5
      %p568 = por %p566, %p567
      %p569 = scmp.ne.s32.totalorder %s558, %s559
      %p570 = scmp.eq.s32.totalorder %s37, 0
      %p571 = por %p569, %p570
      %p572 = scmp.ne.s32.totalorder %s558, %s559
      %p573 = scmp.eq.s32.totalorder %s38, 5
      %p574 = por %p572, %p573
      %p576 = scmp.ne.s32.totalorder %s559, %s575
      %p577 = scmp.eq.s32.totalorder %s38, 0
      %p578 = por %p576, %p577
      %p579 = scmp.le.s32.totalorder 1, %s32
      %p580 = scmp.lt.s32.totalorder %s32, 7
      %p581 = pnand %p579, %p580
      %p582 = pneg %p581
      // Predicated region
      $region9: #{tpu_custom_call.1} parent=5 // pred_check
        _
      $region10: #{tpu_custom_call.1} parent=5 // pred_check_branch
        %584 = sbr.rel (%p581) target = $region12
      $region11: #{tpu_custom_call.1} parent=5 // pred_region
        %s585 = ssub.s32 %s32, 1
        // Predicated region
        $region13: #{tpu_custom_call.1} parent=11 // pred_check
          %p586 = pneg %p65
        $region14: #{tpu_custom_call.1} parent=11 // pred_check_branch
          %588 = sbr.rel (%p586) target = $region16
        $region15: #{tpu_custom_call.1} parent=11 // pred_region
          _
        $region16: #{tpu_custom_call.1} parent=11 // pred_fallthru
          _
        // Predicated region
        $region17: #{tpu_custom_call.1} parent=11 // pred_check
          %p589 = pneg %p190
        $region18: #{tpu_custom_call.1} parent=11 // pred_check_branch
          %591 = sbr.rel (%p589) target = $region20
        $region19: #{tpu_custom_call.1} parent=11 // pred_region
          _
        $region20: #{tpu_custom_call.1} parent=11 // pred_fallthru
          _
        // Predicated region
        $region21: #{tpu_custom_call.1} parent=11 // pred_check
          %p592 = pneg %p211
        $region22: #{tpu_custom_call.1} parent=11 // pred_check_branch
          %594 = sbr.rel (%p592) target = $region24
        $region23: #{tpu_custom_call.1} parent=11 // pred_region
          _
        $region24: #{tpu_custom_call.1} parent=11 // pred_fallthru
          _
        // Predicated region
        $region25: #{tpu_custom_call.1} parent=11 // pred_check
          %p595 = pneg %p232
        $region26: #{tpu_custom_call.1} parent=11 // pred_check_branch
          %597 = sbr.rel (%p595) target = $region28
        $region27: #{tpu_custom_call.1} parent=11 // pred_region
          _
        $region28: #{tpu_custom_call.1} parent=11 // pred_fallthru
          _
        // Predicated region
        $region29: #{tpu_custom_call.1} parent=11 // pred_check
          %p598 = pneg %p253
        $region30: #{tpu_custom_call.1} parent=11 // pred_check_branch
          %600 = sbr.rel (%p598) target = $region32
        $region31: #{tpu_custom_call.1} parent=11 // pred_region
          _
        $region32: #{tpu_custom_call.1} parent=11 // pred_fallthru
          _
        // Predicated region
        $region33: #{tpu_custom_call.1} parent=11 // pred_check
          %p601 = pneg %p482
        $region34: #{tpu_custom_call.1} parent=11 // pred_check_branch
          %603 = sbr.rel (%p601) target = $region36
        $region35: #{tpu_custom_call.1} parent=11 // pred_region
          _
        $region36: #{tpu_custom_call.1} parent=11 // pred_fallthru
          _
        // Predicated region
        $region37: #{tpu_custom_call.1} parent=11 // pred_check
          %p604 = pneg %p503
        $region38: #{tpu_custom_call.1} parent=11 // pred_check_branch
          %606 = sbr.rel (%p604) target = $region40
        $region39: #{tpu_custom_call.1} parent=11 // pred_region
          _
        $region40: #{tpu_custom_call.1} parent=11 // pred_fallthru
          _
        // Predicated region
        $region41: #{tpu_custom_call.1} parent=11 // pred_check
          %p607 = pneg %p524
        $region42: #{tpu_custom_call.1} parent=11 // pred_check_branch
          %609 = sbr.rel (%p607) target = $region44
        $region43: #{tpu_custom_call.1} parent=11 // pred_region
          _
        $region44: #{tpu_custom_call.1} parent=11 // pred_fallthru
          _
        // Predicated region
        $region45: #{tpu_custom_call.1} parent=11 // pred_check
          %p610 = pneg %p545
        $region46: #{tpu_custom_call.1} parent=11 // pred_check_branch
          %612 = sbr.rel (%p610) target = $region48
        $region47: #{tpu_custom_call.1} parent=11 // pred_region
          _
        $region48: #{tpu_custom_call.1} parent=11 // pred_fallthru
          _
      $region12: #{tpu_custom_call.1} parent=5 // pred_fallthru
        _
      %p613 = scmp.lt.s32.totalorder %s32, 6
      // Predicated region
      $region49: #{tpu_custom_call.1} parent=5 // pred_check
        %p614 = pneg %p613
      $region50: #{tpu_custom_call.1} parent=5 // pred_check_branch
        %616 = sbr.rel (%p614) target = $region52
      $region51: #{tpu_custom_call.1} parent=5 // pred_region
        // Predicated region
        $region53: #{tpu_custom_call.1} parent=51 // pred_check
          %p617 = pneg %p85
        $region54: #{tpu_custom_call.1} parent=51 // pred_check_branch
          %619 = sbr.rel (%p617) target = $region56
        $region55: #{tpu_custom_call.1} parent=51 // pred_region
          %s620 = smul.u32 16, %s40
          %p621 = scmp.lt.s32.totalorder %s620, 31
          %s622 = scalar_select %p621, %s620, 31
          %s623 = smul.addr %s622, 8
          %s624 = scalar_lea.vmem %s1, %s623
          %s625 = smul.u32 16, %s40
        $region56: #{tpu_custom_call.1} parent=51 // pred_fallthru
          _
        // Predicated region
        $region57: #{tpu_custom_call.1} parent=51 // pred_check
          %p626 = pneg %p111
        $region58: #{tpu_custom_call.1} parent=51 // pred_check_branch
          %628 = sbr.rel (%p626) target = $region60
        $region59: #{tpu_custom_call.1} parent=51 // pred_region
          %s629 = smul.u32 16, %s40
          %p630 = scmp.lt.s32.totalorder %s629, 31
          %s631 = scalar_select %p630, %s629, 31
          %s632 = smul.addr %s631, 8
          %s633 = scalar_lea.vmem %s2, %s632
          %s634 = smul.u32 16, %s40
        $region60: #{tpu_custom_call.1} parent=51 // pred_fallthru
          _
        // Predicated region
        $region61: #{tpu_custom_call.1} parent=51 // pred_check
          %p635 = pneg %p137
        $region62: #{tpu_custom_call.1} parent=51 // pred_check_branch
          %637 = sbr.rel (%p635) target = $region64
        $region63: #{tpu_custom_call.1} parent=51 // pred_region
          %s638 = smul.u32 16, %s40
          %p639 = scmp.lt.s32.totalorder %s638, 31
          %s640 = scalar_select %p639, %s638, 31
          %s641 = smul.addr %s640, 8
          %s642 = scalar_lea.vmem %s3, %s641
          %s643 = smul.u32 16, %s40
        $region64: #{tpu_custom_call.1} parent=51 // pred_fallthru
          _
        // Predicated region
        $region65: #{tpu_custom_call.1} parent=51 // pred_check
          %p644 = pneg %p163
        $region66: #{tpu_custom_call.1} parent=51 // pred_check_branch
          %646 = sbr.rel (%p644) target = $region68
        $region67: #{tpu_custom_call.1} parent=51 // pred_region
          %p647 = scmp.lt.s32.totalorder %s40, 1
          %s648 = scalar_select %p647, %s40, 1
          %s649 = scalar_lea.vmem %s4, %s648
        $region68: #{tpu_custom_call.1} parent=51 // pred_fallthru
          _
        // Predicated region
        $region69: #{tpu_custom_call.1} parent=51 // pred_check
          %p650 = pneg %p273
        $region70: #{tpu_custom_call.1} parent=51 // pred_check_branch
          %652 = sbr.rel (%p650) target = $region72
        $region71: #{tpu_custom_call.1} parent=51 // pred_region
          %p653 = scmp.lt.s32.totalorder %s39, 2
          %s654 = scalar_select %p653, %s39, 2
          %s655 = smul.addr %s654, 8
          %s656 = smul.addr %s655, 4
          %s657 = scalar_lea.vmem %s9, %s656
        $region72: #{tpu_custom_call.1} parent=51 // pred_fallthru
          _
        // Predicated region
        $region73: #{tpu_custom_call.1} parent=51 // pred_check
          %p658 = pneg %p299
        $region74: #{tpu_custom_call.1} parent=51 // pred_check_branch
          %660 = sbr.rel (%p658) target = $region76
        $region75: #{tpu_custom_call.1} parent=51 // pred_region
          %p661 = scmp.lt.s32.totalorder %s39, 2
          %s662 = scalar_select %p661, %s39, 2
          %s663 = smul.addr %s662, 2
          %s664 = scalar_lea.vmem %s10, %s663
        $region76: #{tpu_custom_call.1} parent=51 // pred_fallthru
          _
        // Predicated region
        $region77: #{tpu_custom_call.1} parent=51 // pred_check
          %p665 = pneg %p325
        $region78: #{tpu_custom_call.1} parent=51 // pred_check_branch
          %667 = sbr.rel (%p665) target = $region80
        $region79: #{tpu_custom_call.1} parent=51 // pred_region
          %p668 = scmp.lt.s32.totalorder %s39, 2
          %s669 = scalar_select %p668, %s39, 2
          %s670 = smul.addr %s669, 4
          %s671 = smul.addr %s670, 4
          %s672 = scalar_lea.vmem %s11, %s671
        $region80: #{tpu_custom_call.1} parent=51 // pred_fallthru
          _
        // Predicated region
        $region81: #{tpu_custom_call.1} parent=51 // pred_check
          %p673 = pneg %p351
        $region82: #{tpu_custom_call.1} parent=51 // pred_check_branch
          %675 = sbr.rel (%p673) target = $region84
        $region83: #{tpu_custom_call.1} parent=51 // pred_region
          %p676 = scmp.lt.s32.totalorder %s39, 2
          %s677 = scalar_select %p676, %s39, 2
          %s678 = scalar_lea.vmem %s12, %s677
        $region84: #{tpu_custom_call.1} parent=51 // pred_fallthru
          _
        // Predicated region
        $region85: #{tpu_custom_call.1} parent=51 // pred_check
          %p679 = pneg %p377
        $region86: #{tpu_custom_call.1} parent=51 // pred_check_branch
          %681 = sbr.rel (%p679) target = $region88
        $region87: #{tpu_custom_call.1} parent=51 // pred_region
          %p682 = scmp.lt.s32.totalorder %s39, 2
          %s683 = scalar_select %p682, %s39, 2
          %s684 = scalar_lea.vmem %s13, %s683
        $region88: #{tpu_custom_call.1} parent=51 // pred_fallthru
          _
        // Predicated region
        $region89: #{tpu_custom_call.1} parent=51 // pred_check
          %p685 = pneg %p403
        $region90: #{tpu_custom_call.1} parent=51 // pred_check_branch
          %687 = sbr.rel (%p685) target = $region92
        $region91: #{tpu_custom_call.1} parent=51 // pred_region
          %p688 = scmp.lt.s32.totalorder %s39, 2
          %s689 = scalar_select %p688, %s39, 2
          %s690 = scalar_lea.vmem %s14, %s689
        $region92: #{tpu_custom_call.1} parent=51 // pred_fallthru
          _
        // Predicated region
        $region93: #{tpu_custom_call.1} parent=51 // pred_check
          %p691 = pneg %p429
        $region94: #{tpu_custom_call.1} parent=51 // pred_check_branch
          %693 = sbr.rel (%p691) target = $region96
        $region95: #{tpu_custom_call.1} parent=51 // pred_region
          %p694 = scmp.lt.s32.totalorder %s39, 2
          %s695 = scalar_select %p694, %s39, 2
          %s696 = scalar_lea.vmem %s15, %s695
        $region96: #{tpu_custom_call.1} parent=51 // pred_fallthru
          _
        // Predicated region
        $region97: #{tpu_custom_call.1} parent=51 // pred_check
          %p697 = pneg %p455
        $region98: #{tpu_custom_call.1} parent=51 // pred_check_branch
          %699 = sbr.rel (%p697) target = $region100
        $region99: #{tpu_custom_call.1} parent=51 // pred_region
          %p700 = scmp.lt.s32.totalorder %s39, 2
          %s701 = scalar_select %p700, %s39, 2
          %s702 = scalar_lea.vmem %s16, %s701
        $region100: #{tpu_custom_call.1} parent=51 // pred_fallthru
          _
      $region52: #{tpu_custom_call.1} parent=5 // pred_fallthru
        _
      %p703 = scmp.le.s32.totalorder 1, %s32
      %p704 = scmp.lt.s32.totalorder %s32, 7
      %p705 = pnand %p703, %p704
      %p706 = pneg %p705
      // Predicated region
      $region101: #{tpu_custom_call.1} parent=5 // pred_check
        _
      $region102: #{tpu_custom_call.1} parent=5 // pred_check_branch
        %708 = sbr.rel (%p705) target = $region104
      $region103: #{tpu_custom_call.1} parent=5 // pred_region
        %s709 = ssub.s32 %s32, 1
        %p710 = pneg %p65
        %p711 = pneg %p62
        %s712 = smul.u32 16, %s42
        %p713 = scmp.lt.s32.totalorder %s712, 31
        %s714 = scalar_select %p713, %s712, 31
        %s715 = smul.addr %s714, 8
        %s716 = scalar_lea.vmem %s1, %s715
        %p717 = pneg %p91
        %p718 = pneg %p88
        %s719 = smul.u32 16, %s42
        %p720 = scmp.lt.s32.totalorder %s719, 31
        %s721 = scalar_select %p720, %s719, 31
        %s722 = smul.addr %s721, 8
        %s723 = scalar_lea.vmem %s2, %s722
        %p724 = pneg %p117
        %p725 = pneg %p114
        %s726 = smul.u32 16, %s42
        %p727 = scmp.lt.s32.totalorder %s726, 31
        %s728 = scalar_select %p727, %s726, 31
        %s729 = smul.addr %s728, 8
        %s730 = scalar_lea.vmem %s3, %s729
        %p731 = pneg %p143
        %p732 = pneg %p140
        %p733 = scmp.lt.s32.totalorder %s42, 1
        %s734 = scalar_select %p733, %s42, 1
        %s735 = scalar_lea.vmem %s4, %s734
        %p736 = pneg %p169
        %p737 = pneg %p166
        %p738 = pneg %p190
        %p739 = pneg %p187
        %p740 = pneg %p211
        %p741 = pneg %p208
        %p742 = pneg %p232
        %p743 = pneg %p229
        %p744 = pneg %p253
        %p745 = pneg %p250
        %p746 = scmp.lt.s32.totalorder %s41, 2
        %s747 = scalar_select %p746, %s41, 2
        %s748 = smul.addr %s747, 8
        %s749 = smul.addr %s748, 4
        %s750 = scalar_lea.vmem %s9, %s749
        %p751 = pneg %p279
        %p752 = pneg %p276
        %p753 = scmp.lt.s32.totalorder %s41, 2
        %s754 = scalar_select %p753, %s41, 2
        %s755 = smul.addr %s754, 2
        %s756 = scalar_lea.vmem %s10, %s755
        %p757 = pneg %p305
        %p758 = pneg %p302
        %p759 = scmp.lt.s32.totalorder %s41, 2
        %s760 = scalar_select %p759, %s41, 2
        %s761 = smul.addr %s760, 4
        %s762 = smul.addr %s761, 4
        %s763 = scalar_lea.vmem %s11, %s762
        %p764 = pneg %p331
        %p765 = pneg %p328
        %p766 = scmp.lt.s32.totalorder %s41, 2
        %s767 = scalar_select %p766, %s41, 2
        %s768 = scalar_lea.vmem %s12, %s767
        %p769 = pneg %p357
        %p770 = pneg %p354
        %p771 = scmp.lt.s32.totalorder %s41, 2
        %s772 = scalar_select %p771, %s41, 2
        %s773 = scalar_lea.vmem %s13, %s772
        %p774 = pneg %p383
        %p775 = pneg %p380
        %p776 = scmp.lt.s32.totalorder %s41, 2
        %s777 = scalar_select %p776, %s41, 2
        %s778 = scalar_lea.vmem %s14, %s777
        %p779 = pneg %p409
        %p780 = pneg %p406
        %p781 = scmp.lt.s32.totalorder %s41, 2
        %s782 = scalar_select %p781, %s41, 2
        %s783 = scalar_lea.vmem %s15, %s782
        %p784 = pneg %p435
        %p785 = pneg %p432
        %p786 = scmp.lt.s32.totalorder %s41, 2
        %s787 = scalar_select %p786, %s41, 2
        %s788 = scalar_lea.vmem %s16, %s787
        %p789 = pneg %p461
        %p790 = pneg %p458
        %p791 = pneg %p482
        %p792 = pneg %p479
        %p793 = pneg %p503
        %p794 = pneg %p500
        %p795 = pneg %p524
        %p796 = pneg %p521
        %p797 = pneg %p545
        %p798 = pneg %p542
        %p799 = pneg %p571
        %p800 = pneg %p568
        %s801 = sand.u32 %s558, 1
        %s802 = scalar_lea.sflag [#allocation9], %s801
        %s803 = sand.u32 %s558, 1
        %s804 = scalar_lea.vmem [#allocation8], %s803
        %s805 = smul.u32 16, %s42
        %p806 = scmp.lt.s32.totalorder %s805, 31
        %s807 = scalar_select %p806, %s805, 31
        %s808 = smul.addr %s807, 8
        %s809 = scalar_lea.vmem %s1, %s808
        %s810 = smul.u32 16, %s42
        %s811 = smul.u32 16, %s42
        %p812 = scmp.lt.s32.totalorder %s811, 31
        %s813 = scalar_select %p812, %s811, 31
        %s814 = smul.addr %s813, 8
        %s815 = scalar_lea.vmem %s2, %s814
        %s816 = smul.u32 16, %s42
        %s817 = smul.u32 16, %s42
        %p818 = scmp.lt.s32.totalorder %s817, 31
        %s819 = scalar_select %p818, %s817, 31
        %s820 = smul.addr %s819, 8
        %s821 = scalar_lea.vmem %s3, %s820
        %s822 = smul.u32 16, %s42
        %p823 = scmp.lt.s32.totalorder %s42, 1
        %s824 = scalar_select %p823, %s42, 1
        %s825 = scalar_lea.vmem %s4, %s824
        %p826 = scmp.lt.s32.totalorder %s41, 2
        %s827 = scalar_select %p826, %s41, 2
        %s828 = smul.addr %s827, 8
        %s829 = smul.addr %s828, 4
        %s830 = scalar_lea.vmem %s9, %s829
        %p831 = scmp.lt.s32.totalorder %s41, 2
        %s832 = scalar_select %p831, %s41, 2
        %s833 = smul.addr %s832, 2
        %s834 = scalar_lea.vmem %s10, %s833
        %p835 = scmp.lt.s32.totalorder %s41, 2
        %s836 = scalar_select %p835, %s41, 2
        %s837 = smul.addr %s836, 4
        %s838 = smul.addr %s837, 4
        %s839 = scalar_lea.vmem %s11, %s838
        %p840 = scmp.lt.s32.totalorder %s41, 2
        %s841 = scalar_select %p840, %s41, 2
        %s842 = scalar_lea.vmem %s12, %s841
        %p843 = scmp.lt.s32.totalorder %s41, 2
        %s844 = scalar_select %p843, %s41, 2
        %s845 = scalar_lea.vmem %s13, %s844
        %p846 = scmp.lt.s32.totalorder %s41, 2
        %s847 = scalar_select %p846, %s41, 2
        %s848 = scalar_lea.vmem %s14, %s847
        %p849 = scmp.lt.s32.totalorder %s41, 2
        %s850 = scalar_select %p849, %s41, 2
        %s851 = scalar_lea.vmem %s15, %s850
        %p852 = scmp.lt.s32.totalorder %s41, 2
        %s853 = scalar_select %p852, %s41, 2
        %s854 = scalar_lea.vmem %s16, %s853
        %p856 = scmp.eq.s32.totalorder %s41, 0
        %p857 = scmp.eq.s32.totalorder %s42, 0
        %p858 = pnand %p856, %p857
        %p859 = pneg %p858
        // Predicated region
        $region105: #{tpu_custom_call.1} parent=103 // pred_check
          _
        $region106: #{tpu_custom_call.1} parent=103 // pred_check_branch
          %861 = sbr.rel (%p858) target = $region108
        $region107: #{tpu_custom_call.1} parent=103 // pred_region
          %v862 = vld [vmem:[%s0] sm:$0xff]
          %v863 = vld [vmem:[%s0 + $0x8] sm:$0xff]
          %v864 = vld [vmem:[%s0 + $0x10] sm:$0xff]
          %v865 = vld [vmem:[%s0 + $0x18] sm:$0xff]
          %v866 = vld [vmem:[%s0 + $0x20] sm:$0xff]
          %v867 = vld [vmem:[%s0 + $0x28] sm:$0xff]
          %v868 = vld [vmem:[%s0 + $0x30] sm:$0xff]
          %v869 = vld [vmem:[%s0 + $0x38] sm:$0xff]
          %v870 = vpack.c.bf16 %v863, %v862
          %v871 = vpack.c.bf16 %v865, %v864
          %v872 = vpack.c.bf16 %v867, %v866
          %v873 = vpack.c.bf16 %v869, %v868
          %v874 = vld [vmem:[%s5] sm:$0x1]
          %v875 = vld [vmem:[%s6] sm:$0x1]
          %v877 = vperm.slane %v875, 0
          %vm879 = vcmask 15360
          %v881 = vsel %vm879, %v870, 0
          %v884 = vsel %vm879, %v871, 0
          %v887 = vsel %vm879, %v872, 0
          %v890 = vsel %vm879, %v873, 0
          %vm892 = vcmask 1040384
          %v894 = vsel %vm892, %v874, 0
          %896 = vmatpush.bf16.msra.mxu0 0
          %897 = vmatpush.bf16.msra.mxu0 0
          %898 = vmatpush.bf16.msra.mxu0 0
          %899 = vmatpush.bf16.msra.mxu0 0
          %900 = vmatpush.bf16.msra.mxu0 0
          %901 = vmatpush.bf16.msra.mxu0 0
          %902 = vmatpush.bf16.msra.mxu0 0
          %903 = vmatpush.bf16.msra.mxu0 %v894
          %904 = vmatmul.bf16.gmra.mxu0 %v881
          %v905 = vpop.f32.mrf.mxu0
          %v906 = vadd.f32 %v877, %v905
          %v907 = vpop.f32.mrf.mxu0
          %v908 = vadd.f32 %v877, %v907
          %909 = vmatmul.bf16.gmra.mxu0 %v884
          %v910 = vpop.f32.mrf.mxu0
          %v911 = vadd.f32 %v877, %v910
          %v912 = vpop.f32.mrf.mxu0
          %v913 = vadd.f32 %v877, %v912
          %914 = vmatmul.bf16.gmra.mxu0 %v887
          %v915 = vpop.f32.mrf.mxu0
          %v916 = vadd.f32 %v877, %v915
          %v917 = vpop.f32.mrf.mxu0
          %v918 = vadd.f32 %v877, %v917
          %919 = vmatmul.bf16.gmra.mxu0 %v890
          %v920 = vpop.f32.mrf.mxu0
          %v921 = vadd.f32 %v877, %v920
          %v922 = vpop.f32.mrf.mxu0
          %v923 = vadd.f32 %v877, %v922
          %924 = vdwg.mxu0
          %v925 = vxor.u32 %v906, 2147483648
          %v926 = vxor.u32 %v908, 2147483648
          %v927 = vxor.u32 %v911, 2147483648
          %v928 = vxor.u32 %v913, 2147483648
          %v929 = vxor.u32 %v916, 2147483648
          %v930 = vxor.u32 %v918, 2147483648
          %v931 = vxor.u32 %v921, 2147483648
          %v932 = vxor.u32 %v923, 2147483648
          %v933 = vmul.f32 %v925, 1.442695
          %v934 = vpow.pop %v933
          %v935 = vmul.f32 %v926, 1.442695
          %v936 = vpow.pop %v935
          %v937 = vmul.f32 %v927, 1.442695
          %v938 = vpow.pop %v937
          %v939 = vmul.f32 %v928, 1.442695
          %v940 = vpow.pop %v939
          %v941 = vmul.f32 %v929, 1.442695
          %v942 = vpow.pop %v941
          %v943 = vmul.f32 %v930, 1.442695
          %v944 = vpow.pop %v943
          %v945 = vmul.f32 %v931, 1.442695
          %v946 = vpow.pop %v945
          %v947 = vmul.f32 %v932, 1.442695
          %v948 = vpow.pop %v947
          %v949 = vadd.f32 %v934, 1.0
          %v950 = vadd.f32 %v936, 1.0
          %v951 = vadd.f32 %v938, 1.0
          %v952 = vadd.f32 %v940, 1.0
          %v953 = vadd.f32 %v942, 1.0
          %v954 = vadd.f32 %v944, 1.0
          %v955 = vadd.f32 %v946, 1.0
          %v956 = vadd.f32 %v948, 1.0
          %v957 = vrcp.pop %v949
          %v958 = vmul.f32 %v949, %v957
          %v959 = vsub.f32 1.0, %v958
          %v960 = vmul.f32 %v957, %v959
          %v961 = vadd.f32 %v957, %v960
          %vm962 = vweird.f32 %v949
          %vm963 = vweird.f32 %v957
          %vm964 = vmor %vm962, %vm963
          %v965 = vsel %vm964, %v957, %v961
          %v966 = vand.u32 2147483647, %v949
          %vm967 = vcmp.eq.f32.partialorder %v966, 8.507059e+37
          %v968 = vand.u32 %v949, 2147483648
          %v969 = vor.u32 1.1754944e-38, %v968
          %v970 = vsel %vm967, %v969, %v965
          %v971 = vmul.f32 1.0, %v970
          %v972 = vrcp.pop %v950
          %v973 = vmul.f32 %v950, %v972
          %v974 = vsub.f32 1.0, %v973
          %v975 = vmul.f32 %v972, %v974
          %v976 = vadd.f32 %v972, %v975
          %vm977 = vweird.f32 %v950
          %vm978 = vweird.f32 %v972
          %vm979 = vmor %vm977, %vm978
          %v980 = vsel %vm979, %v972, %v976
          %v981 = vand.u32 2147483647, %v950
          %vm982 = vcmp.eq.f32.partialorder %v981, 8.507059e+37
          %v983 = vand.u32 %v950, 2147483648
          %v984 = vor.u32 1.1754944e-38, %v983
          %v985 = vsel %vm982, %v984, %v980
          %v986 = vmul.f32 1.0, %v985
          %v987 = vrcp.pop %v951
          %v988 = vmul.f32 %v951, %v987
          %v989 = vsub.f32 1.0, %v988
          %v990 = vmul.f32 %v987, %v989
          %v991 = vadd.f32 %v987, %v990
          %vm992 = vweird.f32 %v951
          %vm993 = vweird.f32 %v987
          %vm994 = vmor %vm992, %vm993
          %v995 = vsel %vm994, %v987, %v991
          %v996 = vand.u32 2147483647, %v951
          %vm997 = vcmp.eq.f32.partialorder %v996, 8.507059e+37
          %v998 = vand.u32 %v951, 2147483648
          %v999 = vor.u32 1.1754944e-38, %v998
          %v1000 = vsel %vm997, %v999, %v995
          %v1001 = vmul.f32 1.0, %v1000
          %v1002 = vrcp.pop %v952
          %v1003 = vmul.f32 %v952, %v1002
          %v1004 = vsub.f32 1.0, %v1003
          %v1005 = vmul.f32 %v1002, %v1004
          %v1006 = vadd.f32 %v1002, %v1005
          %vm1007 = vweird.f32 %v952
          %vm1008 = vweird.f32 %v1002
          %vm1009 = vmor %vm1007, %vm1008
          %v1010 = vsel %vm1009, %v1002, %v1006
          %v1011 = vand.u32 2147483647, %v952
          %vm1012 = vcmp.eq.f32.partialorder %v1011, 8.507059e+37
          %v1013 = vand.u32 %v952, 2147483648
          %v1014 = vor.u32 1.1754944e-38, %v1013
          %v1015 = vsel %vm1012, %v1014, %v1010
          %v1016 = vmul.f32 1.0, %v1015
          %v1017 = vrcp.pop %v953
          %v1018 = vmul.f32 %v953, %v1017
          %v1019 = vsub.f32 1.0, %v1018
          %v1020 = vmul.f32 %v1017, %v1019
          %v1021 = vadd.f32 %v1017, %v1020
          %vm1022 = vweird.f32 %v953
          %vm1023 = vweird.f32 %v1017
          %vm1024 = vmor %vm1022, %vm1023
          %v1025 = vsel %vm1024, %v1017, %v1021
          %v1026 = vand.u32 2147483647, %v953
          %vm1027 = vcmp.eq.f32.partialorder %v1026, 8.507059e+37
          %v1028 = vand.u32 %v953, 2147483648
          %v1029 = vor.u32 1.1754944e-38, %v1028
          %v1030 = vsel %vm1027, %v1029, %v1025
          %v1031 = vmul.f32 1.0, %v1030
          %v1032 = vrcp.pop %v954
          %v1033 = vmul.f32 %v954, %v1032
          %v1034 = vsub.f32 1.0, %v1033
          %v1035 = vmul.f32 %v1032, %v1034
          %v1036 = vadd.f32 %v1032, %v1035
          %vm1037 = vweird.f32 %v954
          %vm1038 = vweird.f32 %v1032
          %vm1039 = vmor %vm1037, %vm1038
          %v1040 = vsel %vm1039, %v1032, %v1036
          %v1041 = vand.u32 2147483647, %v954
          %vm1042 = vcmp.eq.f32.partialorder %v1041, 8.507059e+37
          %v1043 = vand.u32 %v954, 2147483648
          %v1044 = vor.u32 1.1754944e-38, %v1043
          %v1045 = vsel %vm1042, %v1044, %v1040
          %v1046 = vmul.f32 1.0, %v1045
          %v1047 = vrcp.pop %v955
          %v1048 = vmul.f32 %v955, %v1047
          %v1049 = vsub.f32 1.0, %v1048
          %v1050 = vmul.f32 %v1047, %v1049
          %v1051 = vadd.f32 %v1047, %v1050
          %vm1052 = vweird.f32 %v955
          %vm1053 = vweird.f32 %v1047
          %vm1054 = vmor %vm1052, %vm1053
          %v1055 = vsel %vm1054, %v1047, %v1051
          %v1056 = vand.u32 2147483647, %v955
          %vm1057 = vcmp.eq.f32.partialorder %v1056, 8.507059e+37
          %v1058 = vand.u32 %v955, 2147483648
          %v1059 = vor.u32 1.1754944e-38, %v1058
          %v1060 = vsel %vm1057, %v1059, %v1055
          %v1061 = vmul.f32 1.0, %v1060
          %v1062 = vrcp.pop %v956
          %v1063 = vmul.f32 %v956, %v1062
          %v1064 = vsub.f32 1.0, %v1063
          %v1065 = vmul.f32 %v1062, %v1064
          %v1066 = vadd.f32 %v1062, %v1065
          %vm1067 = vweird.f32 %v956
          %vm1068 = vweird.f32 %v1062
          %vm1069 = vmor %vm1067, %vm1068
          %v1070 = vsel %vm1069, %v1062, %v1066
          %v1071 = vand.u32 2147483647, %v956
          %vm1072 = vcmp.eq.f32.partialorder %v1071, 8.507059e+37
          %v1073 = vand.u32 %v956, 2147483648
          %v1074 = vor.u32 1.1754944e-38, %v1073
          %v1075 = vsel %vm1072, %v1074, %v1070
          %v1076 = vmul.f32 1.0, %v1075
          %v1077 = vmul.f32 %v906, %v971
          %v1078 = vmul.f32 %v908, %v986
          %v1079 = vmul.f32 %v911, %v1001
          %v1080 = vmul.f32 %v913, %v1016
          %v1081 = vmul.f32 %v916, %v1031
          %v1082 = vmul.f32 %v918, %v1046
          %v1083 = vmul.f32 %v921, %v1061
          %v1084 = vmul.f32 %v923, %v1076
          %vm1085 = vcmask 261120
          %1086 = vst.msk [vmem:[#allocation2] sm:$0xff] %vm1085, %v1077
          %1087 = vst.msk [vmem:[#allocation2 + $0x8] sm:$0xff] %vm1085, %v1078
          %1088 = vst.msk [vmem:[#allocation2 + $0x10] sm:$0xff] %vm1085, %v1079
          %1089 = vst.msk [vmem:[#allocation2 + $0x18] sm:$0xff] %vm1085, %v1080
          %1090 = vst.msk [vmem:[#allocation2 + $0x20] sm:$0xff] %vm1085, %v1081
          %1091 = vst.msk [vmem:[#allocation2 + $0x28] sm:$0xff] %vm1085, %v1082
          %1092 = vst.msk [vmem:[#allocation2 + $0x30] sm:$0xff] %vm1085, %v1083
          %1093 = vst.msk [vmem:[#allocation2 + $0x38] sm:$0xff] %vm1085, %v1084
        $region108: #{tpu_custom_call.1} parent=103 // pred_fallthru
          _
        // Predicated region
        $region109: #{tpu_custom_call.1} parent=103 // pred_check
          %p1094 = pneg %p856
        $region110: #{tpu_custom_call.1} parent=103 // pred_check_branch
          %1096 = sbr.rel (%p1094) target = $region112
        $region111: #{tpu_custom_call.1} parent=103 // pred_region
          %v1097 = vld [vmem:[%s809] sm:$0xff]
          %v1098 = vld [vmem:[%s809 + $0x8] sm:$0xff]
          %v1099 = vld [vmem:[%s809 + $0x10] sm:$0xff]
          %v1100 = vld [vmem:[%s809 + $0x18] sm:$0xff]
          %v1101 = vld [vmem:[%s809 + $0x20] sm:$0xff]
          %v1102 = vld [vmem:[%s809 + $0x28] sm:$0xff]
          %v1103 = vld [vmem:[%s809 + $0x30] sm:$0xff]
          %v1104 = vld [vmem:[%s809 + $0x38] sm:$0xff]
          %v1105 = vld [vmem:[%s809 + $0x40] sm:$0xff]
          %v1106 = vld [vmem:[%s809 + $0x48] sm:$0xff]
          %v1107 = vld [vmem:[%s809 + $0x50] sm:$0xff]
          %v1108 = vld [vmem:[%s809 + $0x58] sm:$0xff]
          %v1109 = vld [vmem:[%s809 + $0x60] sm:$0xff]
          %v1110 = vld [vmem:[%s809 + $0x68] sm:$0xff]
          %v1111 = vld [vmem:[%s809 + $0x70] sm:$0xff]
          %v1112 = vld [vmem:[%s809 + $0x78] sm:$0xff]
          %v1113 = vld [vmem:[%s7] sm:$0x1]
          %1115 = vset.pattern.permute.xlu0 0
          %1116 = vperm.xlu0 %1115, %v1097
          %v1117 = vpop.permute.xlu0 %1116
          %1120 = vset.pattern.permute.xlu0 0
          %1121 = vperm.xlu0 %1120, %v1098
          %v1122 = vpop.permute.xlu0 %1121
          %1125 = vset.pattern.permute.xlu0 0
          %1126 = vperm.xlu0 %1125, %v1099
          %v1127 = vpop.permute.xlu0 %1126
          %1130 = vset.pattern.permute.xlu0 0
          %1131 = vperm.xlu0 %1130, %v1100
          %v1132 = vpop.permute.xlu0 %1131
          %1135 = vset.pattern.permute.xlu0 0
          %1136 = vperm.xlu0 %1135, %v1101
          %v1137 = vpop.permute.xlu0 %1136
          %1140 = vset.pattern.permute.xlu0 0
          %1141 = vperm.xlu0 %1140, %v1102
          %v1142 = vpop.permute.xlu0 %1141
          %1145 = vset.pattern.permute.xlu0 0
          %1146 = vperm.xlu0 %1145, %v1103
          %v1147 = vpop.permute.xlu0 %1146
          %1150 = vset.pattern.permute.xlu0 0
          %1151 = vperm.xlu0 %1150, %v1104
          %v1152 = vpop.permute.xlu0 %1151
          %1155 = vset.pattern.permute.xlu0 0
          %1156 = vperm.xlu0 %1155, %v1105
          %v1157 = vpop.permute.xlu0 %1156
          %1160 = vset.pattern.permute.xlu0 0
          %1161 = vperm.xlu0 %1160, %v1106
          %v1162 = vpop.permute.xlu0 %1161
          %1165 = vset.pattern.permute.xlu0 0
          %1166 = vperm.xlu0 %1165, %v1107
          %v1167 = vpop.permute.xlu0 %1166
          %1170 = vset.pattern.permute.xlu0 0
          %1171 = vperm.xlu0 %1170, %v1108
          %v1172 = vpop.permute.xlu0 %1171
          %1175 = vset.pattern.permute.xlu0 0
          %1176 = vperm.xlu0 %1175, %v1109
          %v1177 = vpop.permute.xlu0 %1176
          %1180 = vset.pattern.permute.xlu0 0
          %1181 = vperm.xlu0 %1180, %v1110
          %v1182 = vpop.permute.xlu0 %1181
          %1185 = vset.pattern.permute.xlu0 0
          %1186 = vperm.xlu0 %1185, %v1111
          %v1187 = vpop.permute.xlu0 %1186
          %1190 = vset.pattern.permute.xlu0 0
          %1191 = vperm.xlu0 %1190, %v1112
          %v1192 = vpop.permute.xlu0 %1191
          %v1195 = vperm.slane %v1113, 0
          %v1197 = vmul.f32 %v1117, %v1195
          %v1198 = vmul.f32 %v1122, %v1195
          %v1199 = vmul.f32 %v1127, %v1195
          %v1200 = vmul.f32 %v1132, %v1195
          %v1201 = vmul.f32 %v1137, %v1195
          %v1202 = vmul.f32 %v1142, %v1195
          %v1203 = vmul.f32 %v1147, %v1195
          %v1204 = vmul.f32 %v1152, %v1195
          %v1205 = vmul.f32 %v1157, %v1195
          %v1206 = vmul.f32 %v1162, %v1195
          %v1207 = vmul.f32 %v1167, %v1195
          %v1208 = vmul.f32 %v1172, %v1195
          %v1209 = vmul.f32 %v1177, %v1195
          %v1210 = vmul.f32 %v1182, %v1195
          %v1211 = vmul.f32 %v1187, %v1195
          %v1212 = vmul.f32 %v1192, %v1195
          %v1213 = vld [vmem:[%s8] sm:$0x1]
          %v1215 = vperm.slane %v1213, 0
          %v1217 = vadd.f32 %v1197, %v1215
          %v1218 = vadd.f32 %v1198, %v1215
          %v1219 = vadd.f32 %v1199, %v1215
          %v1220 = vadd.f32 %v1200, %v1215
          %v1221 = vadd.f32 %v1201, %v1215
          %v1222 = vadd.f32 %v1202, %v1215
          %v1223 = vadd.f32 %v1203, %v1215
          %v1224 = vadd.f32 %v1204, %v1215
          %v1225 = vadd.f32 %v1205, %v1215
          %v1226 = vadd.f32 %v1206, %v1215
          %v1227 = vadd.f32 %v1207, %v1215
          %v1228 = vadd.f32 %v1208, %v1215
          %v1229 = vadd.f32 %v1209, %v1215
          %v1230 = vadd.f32 %v1210, %v1215
          %v1231 = vadd.f32 %v1211, %v1215
          %v1232 = vadd.f32 %v1212, %v1215
          %v1233 = vxor.u32 %v1217, 2147483648
          %v1234 = vxor.u32 %v1218, 2147483648
          %v1235 = vxor.u32 %v1219, 2147483648
          %v1236 = vxor.u32 %v1220, 2147483648
          %v1237 = vxor.u32 %v1221, 2147483648
          %v1238 = vxor.u32 %v1222, 2147483648
          %v1239 = vxor.u32 %v1223, 2147483648
          %v1240 = vxor.u32 %v1224, 2147483648
          %v1241 = vxor.u32 %v1225, 2147483648
          %v1242 = vxor.u32 %v1226, 2147483648
          %v1243 = vxor.u32 %v1227, 2147483648
          %v1244 = vxor.u32 %v1228, 2147483648
          %v1245 = vxor.u32 %v1229, 2147483648
          %v1246 = vxor.u32 %v1230, 2147483648
          %v1247 = vxor.u32 %v1231, 2147483648
          %v1248 = vxor.u32 %v1232, 2147483648
          %v1249 = vmul.f32 %v1233, 1.442695
          %v1250 = vpow.pop %v1249
          %v1251 = vmul.f32 %v1234, 1.442695
          %v1252 = vpow.pop %v1251
          %v1253 = vmul.f32 %v1235, 1.442695
          %v1254 = vpow.pop %v1253
          %v1255 = vmul.f32 %v1236, 1.442695
          %v1256 = vpow.pop %v1255
          %v1257 = vmul.f32 %v1237, 1.442695
          %v1258 = vpow.pop %v1257
          %v1259 = vmul.f32 %v1238, 1.442695
          %v1260 = vpow.pop %v1259
          %v1261 = vmul.f32 %v1239, 1.442695
          %v1262 = vpow.pop %v1261
          %v1263 = vmul.f32 %v1240, 1.442695
          %v1264 = vpow.pop %v1263
          %v1265 = vmul.f32 %v1241, 1.442695
          %v1266 = vpow.pop %v1265
          %v1267 = vmul.f32 %v1242, 1.442695
          %v1268 = vpow.pop %v1267
          %v1269 = vmul.f32 %v1243, 1.442695
          %v1270 = vpow.pop %v1269
          %v1271 = vmul.f32 %v1244, 1.442695
          %v1272 = vpow.pop %v1271
          %v1273 = vmul.f32 %v1245, 1.442695
          %v1274 = vpow.pop %v1273
          %v1275 = vmul.f32 %v1246, 1.442695
          %v1276 = vpow.pop %v1275
          %v1277 = vmul.f32 %v1247, 1.442695
          %v1278 = vpow.pop %v1277
          %v1279 = vmul.f32 %v1248, 1.442695
          %v1280 = vpow.pop %v1279
          %v1281 = vadd.f32 %v1250, 1.0
          %v1282 = vadd.f32 %v1252, 1.0
          %v1283 = vadd.f32 %v1254, 1.0
          %v1284 = vadd.f32 %v1256, 1.0
          %v1285 = vadd.f32 %v1258, 1.0
          %v1286 = vadd.f32 %v1260, 1.0
          %v1287 = vadd.f32 %v1262, 1.0
          %v1288 = vadd.f32 %v1264, 1.0
          %v1289 = vadd.f32 %v1266, 1.0
          %v1290 = vadd.f32 %v1268, 1.0
          %v1291 = vadd.f32 %v1270, 1.0
          %v1292 = vadd.f32 %v1272, 1.0
          %v1293 = vadd.f32 %v1274, 1.0
          %v1294 = vadd.f32 %v1276, 1.0
          %v1295 = vadd.f32 %v1278, 1.0
          %v1296 = vadd.f32 %v1280, 1.0
          %v1297 = vrcp.pop %v1281
          %v1298 = vmul.f32 %v1281, %v1297
          %v1299 = vsub.f32 1.0, %v1298
          %v1300 = vmul.f32 %v1297, %v1299
          %v1301 = vadd.f32 %v1297, %v1300
          %vm1302 = vweird.f32 %v1281
          %vm1303 = vweird.f32 %v1297
          %vm1304 = vmor %vm1302, %vm1303
          %v1305 = vsel %vm1304, %v1297, %v1301
          %v1306 = vand.u32 2147483647, %v1281
          %vm1307 = vcmp.eq.f32.partialorder %v1306, 8.507059e+37
          %v1308 = vand.u32 %v1281, 2147483648
          %v1309 = vor.u32 1.1754944e-38, %v1308
          %v1310 = vsel %vm1307, %v1309, %v1305
          %v1311 = vmul.f32 1.0, %v1310
          %v1312 = vrcp.pop %v1282
          %v1313 = vmul.f32 %v1282, %v1312
          %v1314 = vsub.f32 1.0, %v1313
          %v1315 = vmul.f32 %v1312, %v1314
          %v1316 = vadd.f32 %v1312, %v1315
          %vm1317 = vweird.f32 %v1282
          %vm1318 = vweird.f32 %v1312
          %vm1319 = vmor %vm1317, %vm1318
          %v1320 = vsel %vm1319, %v1312, %v1316
          %v1321 = vand.u32 2147483647, %v1282
          %vm1322 = vcmp.eq.f32.partialorder %v1321, 8.507059e+37
          %v1323 = vand.u32 %v1282, 2147483648
          %v1324 = vor.u32 1.1754944e-38, %v1323
          %v1325 = vsel %vm1322, %v1324, %v1320
          %v1326 = vmul.f32 1.0, %v1325
          %v1327 = vrcp.pop %v1283
          %v1328 = vmul.f32 %v1283, %v1327
          %v1329 = vsub.f32 1.0, %v1328
          %v1330 = vmul.f32 %v1327, %v1329
          %v1331 = vadd.f32 %v1327, %v1330
          %vm1332 = vweird.f32 %v1283
          %vm1333 = vweird.f32 %v1327
          %vm1334 = vmor %vm1332, %vm1333
          %v1335 = vsel %vm1334, %v1327, %v1331
          %v1336 = vand.u32 2147483647, %v1283
          %vm1337 = vcmp.eq.f32.partialorder %v1336, 8.507059e+37
          %v1338 = vand.u32 %v1283, 2147483648
          %v1339 = vor.u32 1.1754944e-38, %v1338
          %v1340 = vsel %vm1337, %v1339, %v1335
          %v1341 = vmul.f32 1.0, %v1340
          %v1342 = vrcp.pop %v1284
          %v1343 = vmul.f32 %v1284, %v1342
          %v1344 = vsub.f32 1.0, %v1343
          %v1345 = vmul.f32 %v1342, %v1344
          %v1346 = vadd.f32 %v1342, %v1345
          %vm1347 = vweird.f32 %v1284
          %vm1348 = vweird.f32 %v1342
          %vm1349 = vmor %vm1347, %vm1348
          %v1350 = vsel %vm1349, %v1342, %v1346
          %v1351 = vand.u32 2147483647, %v1284
          %vm1352 = vcmp.eq.f32.partialorder %v1351, 8.507059e+37
          %v1353 = vand.u32 %v1284, 2147483648
          %v1354 = vor.u32 1.1754944e-38, %v1353
          %v1355 = vsel %vm1352, %v1354, %v1350
          %v1356 = vmul.f32 1.0, %v1355
          %v1357 = vrcp.pop %v1285
          %v1358 = vmul.f32 %v1285, %v1357
          %v1359 = vsub.f32 1.0, %v1358
          %v1360 = vmul.f32 %v1357, %v1359
          %v1361 = vadd.f32 %v1357, %v1360
          %vm1362 = vweird.f32 %v1285
          %vm1363 = vweird.f32 %v1357
          %vm1364 = vmor %vm1362, %vm1363
          %v1365 = vsel %vm1364, %v1357, %v1361
          %v1366 = vand.u32 2147483647, %v1285
          %vm1367 = vcmp.eq.f32.partialorder %v1366, 8.507059e+37
          %v1368 = vand.u32 %v1285, 2147483648
          %v1369 = vor.u32 1.1754944e-38, %v1368
          %v1370 = vsel %vm1367, %v1369, %v1365
          %v1371 = vmul.f32 1.0, %v1370
          %v1372 = vrcp.pop %v1286
          %v1373 = vmul.f32 %v1286, %v1372
          %v1374 = vsub.f32 1.0, %v1373
          %v1375 = vmul.f32 %v1372, %v1374
          %v1376 = vadd.f32 %v1372, %v1375
          %vm1377 = vweird.f32 %v1286
          %vm1378 = vweird.f32 %v1372
          %vm1379 = vmor %vm1377, %vm1378
          %v1380 = vsel %vm1379, %v1372, %v1376
          %v1381 = vand.u32 2147483647, %v1286
          %vm1382 = vcmp.eq.f32.partialorder %v1381, 8.507059e+37
          %v1383 = vand.u32 %v1286, 2147483648
          %v1384 = vor.u32 1.1754944e-38, %v1383
          %v1385 = vsel %vm1382, %v1384, %v1380
          %v1386 = vmul.f32 1.0, %v1385
          %v1387 = vrcp.pop %v1287
          %v1388 = vmul.f32 %v1287, %v1387
          %v1389 = vsub.f32 1.0, %v1388
          %v1390 = vmul.f32 %v1387, %v1389
          %v1391 = vadd.f32 %v1387, %v1390
          %vm1392 = vweird.f32 %v1287
          %vm1393 = vweird.f32 %v1387
          %vm1394 = vmor %vm1392, %vm1393
          %v1395 = vsel %vm1394, %v1387, %v1391
          %v1396 = vand.u32 2147483647, %v1287
          %vm1397 = vcmp.eq.f32.partialorder %v1396, 8.507059e+37
          %v1398 = vand.u32 %v1287, 2147483648
          %v1399 = vor.u32 1.1754944e-38, %v1398
          %v1400 = vsel %vm1397, %v1399, %v1395
          %v1401 = vmul.f32 1.0, %v1400
          %v1402 = vrcp.pop %v1288
          %v1403 = vmul.f32 %v1288, %v1402
          %v1404 = vsub.f32 1.0, %v1403
          %v1405 = vmul.f32 %v1402, %v1404
          %v1406 = vadd.f32 %v1402, %v1405
          %vm1407 = vweird.f32 %v1288
          %vm1408 = vweird.f32 %v1402
          %vm1409 = vmor %vm1407, %vm1408
          %v1410 = vsel %vm1409, %v1402, %v1406
          %v1411 = vand.u32 2147483647, %v1288
          %vm1412 = vcmp.eq.f32.partialorder %v1411, 8.507059e+37
          %v1413 = vand.u32 %v1288, 2147483648
          %v1414 = vor.u32 1.1754944e-38, %v1413
          %v1415 = vsel %vm1412, %v1414, %v1410
          %v1416 = vmul.f32 1.0, %v1415
          %v1417 = vrcp.pop %v1289
          %v1418 = vmul.f32 %v1289, %v1417
          %v1419 = vsub.f32 1.0, %v1418
          %v1420 = vmul.f32 %v1417, %v1419
          %v1421 = vadd.f32 %v1417, %v1420
          %vm1422 = vweird.f32 %v1289
          %vm1423 = vweird.f32 %v1417
          %vm1424 = vmor %vm1422, %vm1423
          %v1425 = vsel %vm1424, %v1417, %v1421
          %v1426 = vand.u32 2147483647, %v1289
          %vm1427 = vcmp.eq.f32.partialorder %v1426, 8.507059e+37
          %v1428 = vand.u32 %v1289, 2147483648
          %v1429 = vor.u32 1.1754944e-38, %v1428
          %v1430 = vsel %vm1427, %v1429, %v1425
          %v1431 = vmul.f32 1.0, %v1430
          %v1432 = vrcp.pop %v1290
          %v1433 = vmul.f32 %v1290, %v1432
          %v1434 = vsub.f32 1.0, %v1433
          %v1435 = vmul.f32 %v1432, %v1434
          %v1436 = vadd.f32 %v1432, %v1435
          %vm1437 = vweird.f32 %v1290
          %vm1438 = vweird.f32 %v1432
          %vm1439 = vmor %vm1437, %vm1438
          %v1440 = vsel %vm1439, %v1432, %v1436
          %v1441 = vand.u32 2147483647, %v1290
          %vm1442 = vcmp.eq.f32.partialorder %v1441, 8.507059e+37
          %v1443 = vand.u32 %v1290, 2147483648
          %v1444 = vor.u32 1.1754944e-38, %v1443
          %v1445 = vsel %vm1442, %v1444, %v1440
          %v1446 = vmul.f32 1.0, %v1445
          %v1447 = vrcp.pop %v1291
          %v1448 = vmul.f32 %v1291, %v1447
          %v1449 = vsub.f32 1.0, %v1448
          %v1450 = vmul.f32 %v1447, %v1449
          %v1451 = vadd.f32 %v1447, %v1450
          %vm1452 = vweird.f32 %v1291
          %vm1453 = vweird.f32 %v1447
          %vm1454 = vmor %vm1452, %vm1453
          %v1455 = vsel %vm1454, %v1447, %v1451
          %v1456 = vand.u32 2147483647, %v1291
          %vm1457 = vcmp.eq.f32.partialorder %v1456, 8.507059e+37
          %v1458 = vand.u32 %v1291, 2147483648
          %v1459 = vor.u32 1.1754944e-38, %v1458
          %v1460 = vsel %vm1457, %v1459, %v1455
          %v1461 = vmul.f32 1.0, %v1460
          %v1462 = vrcp.pop %v1292
          %v1463 = vmul.f32 %v1292, %v1462
          %v1464 = vsub.f32 1.0, %v1463
          %v1465 = vmul.f32 %v1462, %v1464
          %v1466 = vadd.f32 %v1462, %v1465
          %vm1467 = vweird.f32 %v1292
          %vm1468 = vweird.f32 %v1462
          %vm1469 = vmor %vm1467, %vm1468
          %v1470 = vsel %vm1469, %v1462, %v1466
          %v1471 = vand.u32 2147483647, %v1292
          %vm1472 = vcmp.eq.f32.partialorder %v1471, 8.507059e+37
          %v1473 = vand.u32 %v1292, 2147483648
          %v1474 = vor.u32 1.1754944e-38, %v1473
          %v1475 = vsel %vm1472, %v1474, %v1470
          %v1476 = vmul.f32 1.0, %v1475
          %v1477 = vrcp.pop %v1293
          %v1478 = vmul.f32 %v1293, %v1477
          %v1479 = vsub.f32 1.0, %v1478
          %v1480 = vmul.f32 %v1477, %v1479
          %v1481 = vadd.f32 %v1477, %v1480
          %vm1482 = vweird.f32 %v1293
          %vm1483 = vweird.f32 %v1477
          %vm1484 = vmor %vm1482, %vm1483
          %v1485 = vsel %vm1484, %v1477, %v1481
          %v1486 = vand.u32 2147483647, %v1293
          %vm1487 = vcmp.eq.f32.partialorder %v1486, 8.507059e+37
          %v1488 = vand.u32 %v1293, 2147483648
          %v1489 = vor.u32 1.1754944e-38, %v1488
          %v1490 = vsel %vm1487, %v1489, %v1485
          %v1491 = vmul.f32 1.0, %v1490
          %v1492 = vrcp.pop %v1294
          %v1493 = vmul.f32 %v1294, %v1492
          %v1494 = vsub.f32 1.0, %v1493
          %v1495 = vmul.f32 %v1492, %v1494
          %v1496 = vadd.f32 %v1492, %v1495
          %vm1497 = vweird.f32 %v1294
          %vm1498 = vweird.f32 %v1492
          %vm1499 = vmor %vm1497, %vm1498
          %v1500 = vsel %vm1499, %v1492, %v1496
          %v1501 = vand.u32 2147483647, %v1294
          %vm1502 = vcmp.eq.f32.partialorder %v1501, 8.507059e+37
          %v1503 = vand.u32 %v1294, 2147483648
          %v1504 = vor.u32 1.1754944e-38, %v1503
          %v1505 = vsel %vm1502, %v1504, %v1500
          %v1506 = vmul.f32 1.0, %v1505
          %v1507 = vrcp.pop %v1295
          %v1508 = vmul.f32 %v1295, %v1507
          %v1509 = vsub.f32 1.0, %v1508
          %v1510 = vmul.f32 %v1507, %v1509
          %v1511 = vadd.f32 %v1507, %v1510
          %vm1512 = vweird.f32 %v1295
          %vm1513 = vweird.f32 %v1507
          %vm1514 = vmor %vm1512, %vm1513
          %v1515 = vsel %vm1514, %v1507, %v1511
          %v1516 = vand.u32 2147483647, %v1295
          %vm1517 = vcmp.eq.f32.partialorder %v1516, 8.507059e+37
          %v1518 = vand.u32 %v1295, 2147483648
          %v1519 = vor.u32 1.1754944e-38, %v1518
          %v1520 = vsel %vm1517, %v1519, %v1515
          %v1521 = vmul.f32 1.0, %v1520
          %v1522 = vrcp.pop %v1296
          %v1523 = vmul.f32 %v1296, %v1522
          %v1524 = vsub.f32 1.0, %v1523
          %v1525 = vmul.f32 %v1522, %v1524
          %v1526 = vadd.f32 %v1522, %v1525
          %vm1527 = vweird.f32 %v1296
          %vm1528 = vweird.f32 %v1522
          %vm1529 = vmor %vm1527, %vm1528
          %v1530 = vsel %vm1529, %v1522, %v1526
          %v1531 = vand.u32 2147483647, %v1296
          %vm1532 = vcmp.eq.f32.partialorder %v1531, 8.507059e+37
          %v1533 = vand.u32 %v1296, 2147483648
          %v1534 = vor.u32 1.1754944e-38, %v1533
          %v1535 = vsel %vm1532, %v1534, %v1530
          %v1536 = vmul.f32 1.0, %v1535
          %v1537 = vmul.f32 %v1217, %v1311
          %v1538 = vmul.f32 %v1218, %v1326
          %v1539 = vmul.f32 %v1219, %v1341
          %v1540 = vmul.f32 %v1220, %v1356
          %v1541 = vmul.f32 %v1221, %v1371
          %v1542 = vmul.f32 %v1222, %v1386
          %v1543 = vmul.f32 %v1223, %v1401
          %v1544 = vmul.f32 %v1224, %v1416
          %v1545 = vmul.f32 %v1225, %v1431
          %v1546 = vmul.f32 %v1226, %v1446
          %v1547 = vmul.f32 %v1227, %v1461
          %v1548 = vmul.f32 %v1228, %v1476
          %v1549 = vmul.f32 %v1229, %v1491
          %v1550 = vmul.f32 %v1230, %v1506
          %v1551 = vmul.f32 %v1231, %v1521
          %v1552 = vmul.f32 %v1232, %v1536
          %s1553 = smul.u32 %s42, 128
          %s1554 = scalar_lea.vmem [#allocation3], %s1553
          %vm1555 = vcmask 261120
          %1556 = vst.msk [vmem:[%s1554] sm:$0xff] %vm1555, %v1537
          %1557 = vst.msk [vmem:[%s1554 + $0x8] sm:$0xff] %vm1555, %v1538
          %1558 = vst.msk [vmem:[%s1554 + $0x10] sm:$0xff] %vm1555, %v1539
          %1559 = vst.msk [vmem:[%s1554 + $0x18] sm:$0xff] %vm1555, %v1540
          %1560 = vst.msk [vmem:[%s1554 + $0x20] sm:$0xff] %vm1555, %v1541
          %1561 = vst.msk [vmem:[%s1554 + $0x28] sm:$0xff] %vm1555, %v1542
          %1562 = vst.msk [vmem:[%s1554 + $0x30] sm:$0xff] %vm1555, %v1543
          %1563 = vst.msk [vmem:[%s1554 + $0x38] sm:$0xff] %vm1555, %v1544
          %1564 = vst.msk [vmem:[%s1554 + $0x40] sm:$0xff] %vm1555, %v1545
          %1565 = vst.msk [vmem:[%s1554 + $0x48] sm:$0xff] %vm1555, %v1546
          %1566 = vst.msk [vmem:[%s1554 + $0x50] sm:$0xff] %vm1555, %v1547
          %1567 = vst.msk [vmem:[%s1554 + $0x58] sm:$0xff] %vm1555, %v1548
          %1568 = vst.msk [vmem:[%s1554 + $0x60] sm:$0xff] %vm1555, %v1549
          %1569 = vst.msk [vmem:[%s1554 + $0x68] sm:$0xff] %vm1555, %v1550
          %1570 = vst.msk [vmem:[%s1554 + $0x70] sm:$0xff] %vm1555, %v1551
          %1571 = vst.msk [vmem:[%s1554 + $0x78] sm:$0xff] %vm1555, %v1552
        $region112: #{tpu_custom_call.1} parent=103 // pred_fallthru
          _
        // Predicated region
        $region113: #{tpu_custom_call.1} parent=103 // pred_check
          %p1572 = pneg %p857
        $region114: #{tpu_custom_call.1} parent=103 // pred_check_branch
          %1574 = sbr.rel (%p1572) target = $region116
        $region115: #{tpu_custom_call.1} parent=103 // pred_region
          %v1575 = vld [vmem:[#allocation2] sm:$0xff]
          %v1576 = vld [vmem:[#allocation2 + $0x8] sm:$0xff]
          %v1577 = vld [vmem:[#allocation2 + $0x10] sm:$0xff]
          %v1578 = vld [vmem:[#allocation2 + $0x18] sm:$0xff]
          %v1579 = vld [vmem:[#allocation2 + $0x20] sm:$0xff]
          %v1580 = vld [vmem:[#allocation2 + $0x28] sm:$0xff]
          %v1581 = vld [vmem:[#allocation2 + $0x30] sm:$0xff]
          %v1582 = vld [vmem:[#allocation2 + $0x38] sm:$0xff]
          %v1583 = vpack.c.bf16 %v1576, %v1575
          %v1584 = vpack.c.bf16 %v1578, %v1577
          %v1585 = vpack.c.bf16 %v1580, %v1579
          %v1586 = vpack.c.bf16 %v1582, %v1581
          %v1587 = vld [vmem:[%s830] sm:$0xff]
          %v1588 = vld [vmem:[%s830 + $0x8] sm:$0xff]
          %v1589 = vld [vmem:[%s830 + $0x10] sm:$0xff]
          %v1590 = vld [vmem:[%s830 + $0x18] sm:$0xff]
          %v1591 = vld [vmem:[%s834] sm:$0x3]
          %v1593 = vperm.slane %v1591, 0
          %v1594 = vperm.slane %v1591, 1
          %v1601 = vunpack.c.l.b16 %v1587
          %v1602 = vunpack.c.h.b16 %v1587
          %v1603 = vunpack.c.l.b16 %v1588
          %v1604 = vunpack.c.h.b16 %v1588
          %v1605 = vunpack.c.l.b16 %v1589
          %v1606 = vunpack.c.h.b16 %v1589
          %v1607 = vunpack.c.l.b16 %v1590
          %v1608 = vunpack.c.h.b16 %v1590
          %v1609 = vpack.c.b16 %v1603, %v1601
          %v1610 = vpack.c.b16 %v1604, %v1602
          %v1611 = vpack.c.b16 %v1607, %v1605
          %v1612 = vpack.c.b16 %v1608, %v1606
          %vm1617 = vcmask 261120
          %v1619 = vsel %vm1617, %v1583, 0
          %v1622 = vsel %vm1617, %v1584, 0
          %v1625 = vsel %vm1617, %v1585, 0
          %v1628 = vsel %vm1617, %v1586, 0
          %1630 = vmatpush.bf16.msra.mxu0 0
          %1631 = vmatpush.bf16.msra.mxu0 0
          %1632 = vmatpush.bf16.msra.mxu0 0
          %1633 = vmatpush.bf16.msra.mxu0 0
          %1634 = vmatpush.bf16.msra.mxu0 0
          %1635 = vmatpush.bf16.msra.mxu0 0
          %1636 = vmatpush.bf16.msra.mxu0 %v1611
          %1637 = vmatpush.bf16.msra.mxu0 %v1609
          %1638 = vmatmul.bf16.gmra.mxu0 %v1619
          %v1639 = vpop.f32.mrf.mxu0
          %v1640 = vadd.f32 %v1593, %v1639
          %v1641 = vpop.f32.mrf.mxu0
          %v1642 = vadd.f32 %v1593, %v1641
          %1643 = vmatmul.bf16.gmra.mxu0 %v1622
          %v1644 = vpop.f32.mrf.mxu0
          %v1645 = vadd.f32 %v1593, %v1644
          %v1646 = vpop.f32.mrf.mxu0
          %v1647 = vadd.f32 %v1593, %v1646
          %1648 = vmatmul.bf16.gmra.mxu0 %v1625
          %v1649 = vpop.f32.mrf.mxu0
          %v1650 = vadd.f32 %v1593, %v1649
          %v1651 = vpop.f32.mrf.mxu0
          %v1652 = vadd.f32 %v1593, %v1651
          %1653 = vmatmul.bf16.gmra.mxu0 %v1628
          %v1654 = vpop.f32.mrf.mxu0
          %v1655 = vadd.f32 %v1593, %v1654
          %v1656 = vpop.f32.mrf.mxu0
          %v1657 = vadd.f32 %v1593, %v1656
          %1658 = vdwg.mxu0
          %1659 = vmatpush.bf16.msra.mxu0 0
          %1660 = vmatpush.bf16.msra.mxu0 0
          %1661 = vmatpush.bf16.msra.mxu0 0
          %1662 = vmatpush.bf16.msra.mxu0 0
          %1663 = vmatpush.bf16.msra.mxu0 0
          %1664 = vmatpush.bf16.msra.mxu0 0
          %1665 = vmatpush.bf16.msra.mxu0 %v1612
          %1666 = vmatpush.bf16.msra.mxu0 %v1610
          %1667 = vmatmul.bf16.gmra.mxu0 %v1619
          %v1668 = vpop.f32.mrf.mxu0
          %v1669 = vadd.f32 %v1594, %v1668
          %v1670 = vpop.f32.mrf.mxu0
          %v1671 = vadd.f32 %v1594, %v1670
          %1672 = vmatmul.bf16.gmra.mxu0 %v1622
          %v1673 = vpop.f32.mrf.mxu0
          %v1674 = vadd.f32 %v1594, %v1673
          %v1675 = vpop.f32.mrf.mxu0
          %v1676 = vadd.f32 %v1594, %v1675
          %1677 = vmatmul.bf16.gmra.mxu0 %v1625
          %v1678 = vpop.f32.mrf.mxu0
          %v1679 = vadd.f32 %v1594, %v1678
          %v1680 = vpop.f32.mrf.mxu0
          %v1681 = vadd.f32 %v1594, %v1680
          %1682 = vmatmul.bf16.gmra.mxu0 %v1628
          %v1683 = vpop.f32.mrf.mxu0
          %v1684 = vadd.f32 %v1594, %v1683
          %v1685 = vpop.f32.mrf.mxu0
          %v1686 = vadd.f32 %v1594, %v1685
          %1687 = vdwg.mxu0
          %1688 = vst.msk [vmem:[#allocation5] sm:$0xff] %vm1617, %v1640
          %1689 = vst.msk [vmem:[#allocation5 + $0x8] sm:$0xff] %vm1617, %v1642
          %1690 = vst.msk [vmem:[#allocation5 + $0x10] sm:$0xff] %vm1617, %v1645
          %1691 = vst.msk [vmem:[#allocation5 + $0x18] sm:$0xff] %vm1617, %v1647
          %1692 = vst.msk [vmem:[#allocation5 + $0x20] sm:$0xff] %vm1617, %v1650
          %1693 = vst.msk [vmem:[#allocation5 + $0x28] sm:$0xff] %vm1617, %v1652
          %1694 = vst.msk [vmem:[#allocation5 + $0x30] sm:$0xff] %vm1617, %v1655
          %1695 = vst.msk [vmem:[#allocation5 + $0x38] sm:$0xff] %vm1617, %v1657
          %v1696 = vpack.c.bf16 %v1640, %v1640
          %v1697 = vpack.c.bf16 %v1642, %v1642
          %v1698 = vpack.c.bf16 %v1645, %v1645
          %v1699 = vpack.c.bf16 %v1647, %v1647
          %v1700 = vpack.c.bf16 %v1650, %v1650
          %v1701 = vpack.c.bf16 %v1652, %v1652
          %v1702 = vpack.c.bf16 %v1655, %v1655
          %v1703 = vpack.c.bf16 %v1657, %v1657
          %1712 = vrot.lane.b32.xlu0 %v1696, 96
          %v1713 = vpop.permute.xlu0 %1712
          %1714 = vrot.lane.b32.xlu0 %v1697, 96
          %v1715 = vpop.permute.xlu0 %1714
          %1716 = vrot.lane.b32.xlu0 %v1698, 96
          %v1717 = vpop.permute.xlu0 %1716
          %1718 = vrot.lane.b32.xlu0 %v1699, 96
          %v1719 = vpop.permute.xlu0 %1718
          %1720 = vrot.lane.b32.xlu0 %v1700, 96
          %v1721 = vpop.permute.xlu0 %1720
          %1722 = vrot.lane.b32.xlu0 %v1701, 96
          %v1723 = vpop.permute.xlu0 %1722
          %1724 = vrot.lane.b32.xlu0 %v1702, 96
          %v1725 = vpop.permute.xlu0 %1724
          %1726 = vrot.lane.b32.xlu0 %v1703, 96
          %v1727 = vpop.permute.xlu0 %1726
          %vm1736 = vcmask 519168
          %1737 = vst.msk [vmem:[#allocation6] sm:$0xf] %vm1736, %v1713
          %1738 = vst.msk [vmem:[#allocation6 + $0x4] sm:$0xf] %vm1736, %v1715
          %1739 = vst.msk [vmem:[#allocation6 + $0x8] sm:$0xf] %vm1736, %v1717
          %1740 = vst.msk [vmem:[#allocation6 + $0xc] sm:$0xf] %vm1736, %v1719
          %1741 = vst.msk [vmem:[#allocation6 + $0x10] sm:$0xf] %vm1736, %v1721
          %1742 = vst.msk [vmem:[#allocation6 + $0x14] sm:$0xf] %vm1736, %v1723
          %1743 = vst.msk [vmem:[#allocation6 + $0x18] sm:$0xf] %vm1736, %v1725
          %1744 = vst.msk [vmem:[#allocation6 + $0x1c] sm:$0xf] %vm1736, %v1727
          %v1745 = vpack.c.bf16 %v1669, %v1640
          %v1746 = vpack.c.bf16 %v1671, %v1642
          %v1747 = vpack.c.bf16 %v1674, %v1645
          %v1748 = vpack.c.bf16 %v1676, %v1647
          %v1749 = vpack.c.bf16 %v1679, %v1650
          %v1750 = vpack.c.bf16 %v1681, %v1652
          %v1751 = vpack.c.bf16 %v1684, %v1655
          %v1752 = vpack.c.bf16 %v1686, %v1657
          %1761 = vrot.lane.b32.xlu0 %v1745, 32
          %v1762 = vpop.permute.xlu0 %1761
          %1763 = vrot.lane.b32.xlu0 %v1746, 32
          %v1764 = vpop.permute.xlu0 %1763
          %1765 = vrot.lane.b32.xlu0 %v1747, 32
          %v1766 = vpop.permute.xlu0 %1765
          %1767 = vrot.lane.b32.xlu0 %v1748, 32
          %v1768 = vpop.permute.xlu0 %1767
          %1769 = vrot.lane.b32.xlu0 %v1749, 32
          %v1770 = vpop.permute.xlu0 %1769
          %1771 = vrot.lane.b32.xlu0 %v1750, 32
          %v1772 = vpop.permute.xlu0 %1771
          %1773 = vrot.lane.b32.xlu0 %v1751, 32
          %v1774 = vpop.permute.xlu0 %1773
          %1775 = vrot.lane.b32.xlu0 %v1752, 32
          %v1776 = vpop.permute.xlu0 %1775
          %v1777 = vrot.slane %v1762, 4
          %v1778 = vrot.slane %v1764, 4
          %v1779 = vrot.slane %v1766, 4
          %v1780 = vrot.slane %v1768, 4
          %v1781 = vrot.slane %v1770, 4
          %v1782 = vrot.slane %v1772, 4
          %v1783 = vrot.slane %v1774, 4
          %v1784 = vrot.slane %v1776, 4
          %vm1785 = vcmask 261120
          %v1786 = vsel %vm1785, %v1762, %v1777
          %v1787 = vsel %vm1785, %v1764, %v1778
          %v1788 = vsel %vm1785, %v1766, %v1779
          %v1789 = vsel %vm1785, %v1768, %v1780
          %v1790 = vsel %vm1785, %v1770, %v1781
          %v1791 = vsel %vm1785, %v1772, %v1782
          %v1792 = vsel %vm1785, %v1774, %v1783
          %v1793 = vsel %vm1785, %v1776, %v1784
          %1802 = vst.msk [vmem:[#allocation6 + $0x20] sm:$0xf] %vm1736, %v1786
          %1803 = vst.msk [vmem:[#allocation6 + $0x24] sm:$0xf] %vm1736, %v1787
          %1804 = vst.msk [vmem:[#allocation6 + $0x28] sm:$0xf] %vm1736, %v1788
          %1805 = vst.msk [vmem:[#allocation6 + $0x2c] sm:$0xf] %vm1736, %v1789
          %1806 = vst.msk [vmem:[#allocation6 + $0x30] sm:$0xf] %vm1736, %v1790
          %1807 = vst.msk [vmem:[#allocation6 + $0x34] sm:$0xf] %vm1736, %v1791
          %1808 = vst.msk [vmem:[#allocation6 + $0x38] sm:$0xf] %vm1736, %v1792
          %1809 = vst.msk [vmem:[#allocation6 + $0x3c] sm:$0xf] %vm1736, %v1793
          %1810 = vst.msk [vmem:[#allocation4] sm:$0xff] %vm1617, 0.0
          %1811 = vst.msk [vmem:[#allocation4 + $0x8] sm:$0xff] %vm1617, 0.0
          %1812 = vst.msk [vmem:[#allocation4 + $0x10] sm:$0xff] %vm1617, 0.0
          %1813 = vst.msk [vmem:[#allocation4 + $0x18] sm:$0xff] %vm1617, 0.0
          %1814 = vst.msk [vmem:[#allocation4 + $0x20] sm:$0xff] %vm1617, 0.0
          %1815 = vst.msk [vmem:[#allocation4 + $0x28] sm:$0xff] %vm1617, 0.0
          %1816 = vst.msk [vmem:[#allocation4 + $0x30] sm:$0xff] %vm1617, 0.0
          %1817 = vst.msk [vmem:[#allocation4 + $0x38] sm:$0xff] %vm1617, 0.0
        $region116: #{tpu_custom_call.1} parent=103 // pred_fallthru
          _
        %v1818 = vld [vmem:[%s815] sm:$0xff]
        %v1819 = vld [vmem:[%s815 + $0x8] sm:$0xff]
        %v1820 = vld [vmem:[%s815 + $0x10] sm:$0xff]
        %v1821 = vld [vmem:[%s815 + $0x18] sm:$0xff]
        %v1822 = vld [vmem:[%s815 + $0x20] sm:$0xff]
        %v1823 = vld [vmem:[%s815 + $0x28] sm:$0xff]
        %v1824 = vld [vmem:[%s815 + $0x30] sm:$0xff]
        %v1825 = vld [vmem:[%s815 + $0x38] sm:$0xff]
        %v1826 = vld [vmem:[%s815 + $0x40] sm:$0xff]
        %v1827 = vld [vmem:[%s815 + $0x48] sm:$0xff]
        %v1828 = vld [vmem:[%s815 + $0x50] sm:$0xff]
        %v1829 = vld [vmem:[%s815 + $0x58] sm:$0xff]
        %v1830 = vld [vmem:[%s815 + $0x60] sm:$0xff]
        %v1831 = vld [vmem:[%s815 + $0x68] sm:$0xff]
        %v1832 = vld [vmem:[%s815 + $0x70] sm:$0xff]
        %v1833 = vld [vmem:[%s815 + $0x78] sm:$0xff]
        %v1834 = vld [vmem:[%s821] sm:$0xff]
        %v1835 = vld [vmem:[%s821 + $0x8] sm:$0xff]
        %v1836 = vld [vmem:[%s821 + $0x10] sm:$0xff]
        %v1837 = vld [vmem:[%s821 + $0x18] sm:$0xff]
        %v1838 = vld [vmem:[%s821 + $0x20] sm:$0xff]
        %v1839 = vld [vmem:[%s821 + $0x28] sm:$0xff]
        %v1840 = vld [vmem:[%s821 + $0x30] sm:$0xff]
        %v1841 = vld [vmem:[%s821 + $0x38] sm:$0xff]
        %v1842 = vld [vmem:[%s821 + $0x40] sm:$0xff]
        %v1843 = vld [vmem:[%s821 + $0x48] sm:$0xff]
        %v1844 = vld [vmem:[%s821 + $0x50] sm:$0xff]
        %v1845 = vld [vmem:[%s821 + $0x58] sm:$0xff]
        %v1846 = vld [vmem:[%s821 + $0x60] sm:$0xff]
        %v1847 = vld [vmem:[%s821 + $0x68] sm:$0xff]
        %v1848 = vld [vmem:[%s821 + $0x70] sm:$0xff]
        %v1849 = vld [vmem:[%s821 + $0x78] sm:$0xff]
        %v1850 = vlaneseq
        %v1851 = vand.u32 %v1850, 127
        %1852 = vset.pattern.permute.xlu0 0
        %1853 = vperm.xlu0 %1852, %v1818
        %v1854 = vpop.permute.xlu0 %1853
        %1855 = vset.pattern.permute.xlu0 0
        %1856 = vperm.xlu0 %1855, %v1819
        %v1857 = vpop.permute.xlu0 %1856
        %1858 = vset.pattern.permute.xlu0 0
        %1859 = vperm.xlu0 %1858, %v1820
        %v1860 = vpop.permute.xlu0 %1859
        %1861 = vset.pattern.permute.xlu0 0
        %1862 = vperm.xlu0 %1861, %v1821
        %v1863 = vpop.permute.xlu0 %1862
        %1864 = vset.pattern.permute.xlu0 0
        %1865 = vperm.xlu0 %1864, %v1822
        %v1866 = vpop.permute.xlu0 %1865
        %1867 = vset.pattern.permute.xlu0 0
        %1868 = vperm.xlu0 %1867, %v1823
        %v1869 = vpop.permute.xlu0 %1868
        %1870 = vset.pattern.permute.xlu0 0
        %1871 = vperm.xlu0 %1870, %v1824
        %v1872 = vpop.permute.xlu0 %1871
        %1873 = vset.pattern.permute.xlu0 0
        %1874 = vperm.xlu0 %1873, %v1825
        %v1875 = vpop.permute.xlu0 %1874
        %1876 = vset.pattern.permute.xlu0 0
        %1877 = vperm.xlu0 %1876, %v1826
        %v1878 = vpop.permute.xlu0 %1877
        %1879 = vset.pattern.permute.xlu0 0
        %1880 = vperm.xlu0 %1879, %v1827
        %v1881 = vpop.permute.xlu0 %1880
        %1882 = vset.pattern.permute.xlu0 0
        %1883 = vperm.xlu0 %1882, %v1828
        %v1884 = vpop.permute.xlu0 %1883
        %1885 = vset.pattern.permute.xlu0 0
        %1886 = vperm.xlu0 %1885, %v1829
        %v1887 = vpop.permute.xlu0 %1886
        %1888 = vset.pattern.permute.xlu0 0
        %1889 = vperm.xlu0 %1888, %v1830
        %v1890 = vpop.permute.xlu0 %1889
        %1891 = vset.pattern.permute.xlu0 0
        %1892 = vperm.xlu0 %1891, %v1831
        %v1893 = vpop.permute.xlu0 %1892
        %1894 = vset.pattern.permute.xlu0 0
        %1895 = vperm.xlu0 %1894, %v1832
        %v1896 = vpop.permute.xlu0 %1895
        %1897 = vset.pattern.permute.xlu0 0
        %1898 = vperm.xlu0 %1897, %v1833
        %v1899 = vpop.permute.xlu0 %1898
        %vm1900 = vcmp.eq.s32.totalorder %v1851, %v1854
        %vm1901 = vcmp.eq.s32.totalorder %v1851, %v1857
        %vm1902 = vcmp.eq.s32.totalorder %v1851, %v1860
        %vm1903 = vcmp.eq.s32.totalorder %v1851, %v1863
        %vm1904 = vcmp.eq.s32.totalorder %v1851, %v1866
        %vm1905 = vcmp.eq.s32.totalorder %v1851, %v1869
        %vm1906 = vcmp.eq.s32.totalorder %v1851, %v1872
        %vm1907 = vcmp.eq.s32.totalorder %v1851, %v1875
        %vm1908 = vcmp.eq.s32.totalorder %v1851, %v1878
        %vm1909 = vcmp.eq.s32.totalorder %v1851, %v1881
        %vm1910 = vcmp.eq.s32.totalorder %v1851, %v1884
        %vm1911 = vcmp.eq.s32.totalorder %v1851, %v1887
        %vm1912 = vcmp.eq.s32.totalorder %v1851, %v1890
        %vm1913 = vcmp.eq.s32.totalorder %v1851, %v1893
        %vm1914 = vcmp.eq.s32.totalorder %v1851, %v1896
        %vm1915 = vcmp.eq.s32.totalorder %v1851, %v1899
        %v1916 = vadd.s32 %v1834, 64
        %v1917 = vadd.s32 %v1835, 64
        %v1918 = vadd.s32 %v1836, 64
        %v1919 = vadd.s32 %v1837, 64
        %v1920 = vadd.s32 %v1838, 64
        %v1921 = vadd.s32 %v1839, 64
        %v1922 = vadd.s32 %v1840, 64
        %v1923 = vadd.s32 %v1841, 64
        %v1924 = vadd.s32 %v1842, 64
        %v1925 = vadd.s32 %v1843, 64
        %v1926 = vadd.s32 %v1844, 64
        %v1927 = vadd.s32 %v1845, 64
        %v1928 = vadd.s32 %v1846, 64
        %v1929 = vadd.s32 %v1847, 64
        %v1930 = vadd.s32 %v1848, 64
        %v1931 = vadd.s32 %v1849, 64
        %1932 = vset.pattern.permute.xlu0 0
        %1933 = vperm.xlu0 %1932, %v1916
        %v1934 = vpop.permute.xlu0 %1933
        %1935 = vset.pattern.permute.xlu0 0
        %1936 = vperm.xlu0 %1935, %v1917
        %v1937 = vpop.permute.xlu0 %1936
        %1938 = vset.pattern.permute.xlu0 0
        %1939 = vperm.xlu0 %1938, %v1918
        %v1940 = vpop.permute.xlu0 %1939
        %1941 = vset.pattern.permute.xlu0 0
        %1942 = vperm.xlu0 %1941, %v1919
        %v1943 = vpop.permute.xlu0 %1942
        %1944 = vset.pattern.permute.xlu0 0
        %1945 = vperm.xlu0 %1944, %v1920
        %v1946 = vpop.permute.xlu0 %1945
        %1947 = vset.pattern.permute.xlu0 0
        %1948 = vperm.xlu0 %1947, %v1921
        %v1949 = vpop.permute.xlu0 %1948
        %1950 = vset.pattern.permute.xlu0 0
        %1951 = vperm.xlu0 %1950, %v1922
        %v1952 = vpop.permute.xlu0 %1951
        %1953 = vset.pattern.permute.xlu0 0
        %1954 = vperm.xlu0 %1953, %v1923
        %v1955 = vpop.permute.xlu0 %1954
        %1956 = vset.pattern.permute.xlu0 0
        %1957 = vperm.xlu0 %1956, %v1924
        %v1958 = vpop.permute.xlu0 %1957
        %1959 = vset.pattern.permute.xlu0 0
        %1960 = vperm.xlu0 %1959, %v1925
        %v1961 = vpop.permute.xlu0 %1960
        %1962 = vset.pattern.permute.xlu0 0
        %1963 = vperm.xlu0 %1962, %v1926
        %v1964 = vpop.permute.xlu0 %1963
        %1965 = vset.pattern.permute.xlu0 0
        %1966 = vperm.xlu0 %1965, %v1927
        %v1967 = vpop.permute.xlu0 %1966
        %1968 = vset.pattern.permute.xlu0 0
        %1969 = vperm.xlu0 %1968, %v1928
        %v1970 = vpop.permute.xlu0 %1969
        %1971 = vset.pattern.permute.xlu0 0
        %1972 = vperm.xlu0 %1971, %v1929
        %v1973 = vpop.permute.xlu0 %1972
        %1974 = vset.pattern.permute.xlu0 0
        %1975 = vperm.xlu0 %1974, %v1930
        %v1976 = vpop.permute.xlu0 %1975
        %1977 = vset.pattern.permute.xlu0 0
        %1978 = vperm.xlu0 %1977, %v1931
        %v1979 = vpop.permute.xlu0 %1978
        %vm1980 = vcmp.eq.s32.totalorder %v1851, %v1934
        %vm1981 = vcmp.eq.s32.totalorder %v1851, %v1937
        %vm1982 = vcmp.eq.s32.totalorder %v1851, %v1940
        %vm1983 = vcmp.eq.s32.totalorder %v1851, %v1943
        %vm1984 = vcmp.eq.s32.totalorder %v1851, %v1946
        %vm1985 = vcmp.eq.s32.totalorder %v1851, %v1949
        %vm1986 = vcmp.eq.s32.totalorder %v1851, %v1952
        %vm1987 = vcmp.eq.s32.totalorder %v1851, %v1955
        %vm1988 = vcmp.eq.s32.totalorder %v1851, %v1958
        %vm1989 = vcmp.eq.s32.totalorder %v1851, %v1961
        %vm1990 = vcmp.eq.s32.totalorder %v1851, %v1964
        %vm1991 = vcmp.eq.s32.totalorder %v1851, %v1967
        %vm1992 = vcmp.eq.s32.totalorder %v1851, %v1970
        %vm1993 = vcmp.eq.s32.totalorder %v1851, %v1973
        %vm1994 = vcmp.eq.s32.totalorder %v1851, %v1976
        %vm1995 = vcmp.eq.s32.totalorder %v1851, %v1979
        %vm1996 = vmor %vm1900, %vm1980
        %vm1997 = vmor %vm1901, %vm1981
        %vm1998 = vmor %vm1902, %vm1982
        %vm1999 = vmor %vm1903, %vm1983
        %vm2000 = vmor %vm1904, %vm1984
        %vm2001 = vmor %vm1905, %vm1985
        %vm2002 = vmor %vm1906, %vm1986
        %vm2003 = vmor %vm1907, %vm1987
        %vm2004 = vmor %vm1908, %vm1988
        %vm2005 = vmor %vm1909, %vm1989
        %vm2006 = vmor %vm1910, %vm1990
        %vm2007 = vmor %vm1911, %vm1991
        %vm2008 = vmor %vm1912, %vm1992
        %vm2009 = vmor %vm1913, %vm1993
        %vm2010 = vmor %vm1914, %vm1994
        %vm2011 = vmor %vm1915, %vm1995
        %v2012 = vsel %vm1996, 1, 0
        %v2013 = vsel %vm1997, 1, 0
        %v2014 = vsel %vm1998, 1, 0
        %v2015 = vsel %vm1999, 1, 0
        %v2016 = vsel %vm2000, 1, 0
        %v2017 = vsel %vm2001, 1, 0
        %v2018 = vsel %vm2002, 1, 0
        %v2019 = vsel %vm2003, 1, 0
        %v2020 = vsel %vm2004, 1, 0
        %v2021 = vsel %vm2005, 1, 0
        %v2022 = vsel %vm2006, 1, 0
        %v2023 = vsel %vm2007, 1, 0
        %v2024 = vsel %vm2008, 1, 0
        %v2025 = vsel %vm2009, 1, 0
        %v2026 = vsel %vm2010, 1, 0
        %v2027 = vsel %vm2011, 1, 0
        %v2028 = vcvt.s32.f32 %v2012
        %v2029 = vcvt.s32.f32 %v2013
        %v2030 = vcvt.s32.f32 %v2014
        %v2031 = vcvt.s32.f32 %v2015
        %v2032 = vcvt.s32.f32 %v2016
        %v2033 = vcvt.s32.f32 %v2017
        %v2034 = vcvt.s32.f32 %v2018
        %v2035 = vcvt.s32.f32 %v2019
        %v2036 = vcvt.s32.f32 %v2020
        %v2037 = vcvt.s32.f32 %v2021
        %v2038 = vcvt.s32.f32 %v2022
        %v2039 = vcvt.s32.f32 %v2023
        %v2040 = vcvt.s32.f32 %v2024
        %v2041 = vcvt.s32.f32 %v2025
        %v2042 = vcvt.s32.f32 %v2026
        %v2043 = vcvt.s32.f32 %v2027
        %v2044 = vpack.c.bf16 %v2029, %v2028
        %v2045 = vpack.c.bf16 %v2031, %v2030
        %v2046 = vpack.c.bf16 %v2033, %v2032
        %v2047 = vpack.c.bf16 %v2035, %v2034
        %v2048 = vpack.c.bf16 %v2037, %v2036
        %v2049 = vpack.c.bf16 %v2039, %v2038
        %v2050 = vpack.c.bf16 %v2041, %v2040
        %v2051 = vpack.c.bf16 %v2043, %v2042
        %v2052 = vlaneseq
        %v2053 = vshrl.u32 %v2052, 7
        %v2054 = vadd.s32 %v2053, 8
        %v2055 = vadd.s32 %v2053, 16
        %v2056 = vadd.s32 %v2053, 24
        %v2057 = vadd.s32 %v2053, 32
        %v2058 = vadd.s32 %v2053, 40
        %v2059 = vadd.s32 %v2053, 48
        %v2060 = vadd.s32 %v2053, 56
        %v2061 = vld [vmem:[%s825] sm:$0x1]
        %v2062 = vperm.slane %v2061, 0
        %vm2063 = vcmp.eq.s32.totalorder %v2053, %v2062
        %vm2064 = vcmp.eq.s32.totalorder %v2054, %v2062
        %vm2065 = vcmp.eq.s32.totalorder %v2055, %v2062
        %vm2066 = vcmp.eq.s32.totalorder %v2056, %v2062
        %vm2067 = vcmp.eq.s32.totalorder %v2057, %v2062
        %vm2068 = vcmp.eq.s32.totalorder %v2058, %v2062
        %vm2069 = vcmp.eq.s32.totalorder %v2059, %v2062
        %vm2070 = vcmp.eq.s32.totalorder %v2060, %v2062
        %v2071 = vsel %vm2063, 1, 0
        %v2072 = vsel %vm2064, 1, 0
        %v2073 = vsel %vm2065, 1, 0
        %v2074 = vsel %vm2066, 1, 0
        %v2075 = vsel %vm2067, 1, 0
        %v2076 = vsel %vm2068, 1, 0
        %v2077 = vsel %vm2069, 1, 0
        %v2078 = vsel %vm2070, 1, 0
        %v2079 = vcvt.s32.f32 %v2071
        %v2080 = vcvt.s32.f32 %v2072
        %v2081 = vcvt.s32.f32 %v2073
        %v2082 = vcvt.s32.f32 %v2074
        %v2083 = vcvt.s32.f32 %v2075
        %v2084 = vcvt.s32.f32 %v2076
        %v2085 = vcvt.s32.f32 %v2077
        %v2086 = vcvt.s32.f32 %v2078
        %v2087 = vpack.c.bf16 %v2080, %v2079
        %v2088 = vpack.c.bf16 %v2082, %v2081
        %v2089 = vpack.c.bf16 %v2084, %v2083
        %v2090 = vpack.c.bf16 %v2086, %v2085
        %s2091 = smul.u32 %s42, 128
        %s2092 = scalar_lea.vmem [#allocation3], %s2091
        %v2093 = vld [vmem:[%s2092] sm:$0xff]
        %v2094 = vld [vmem:[%s2092 + $0x8] sm:$0xff]
        %v2095 = vld [vmem:[%s2092 + $0x10] sm:$0xff]
        %v2096 = vld [vmem:[%s2092 + $0x18] sm:$0xff]
        %v2097 = vld [vmem:[%s2092 + $0x20] sm:$0xff]
        %v2098 = vld [vmem:[%s2092 + $0x28] sm:$0xff]
        %v2099 = vld [vmem:[%s2092 + $0x30] sm:$0xff]
        %v2100 = vld [vmem:[%s2092 + $0x38] sm:$0xff]
        %v2101 = vld [vmem:[%s2092 + $0x40] sm:$0xff]
        %v2102 = vld [vmem:[%s2092 + $0x48] sm:$0xff]
        %v2103 = vld [vmem:[%s2092 + $0x50] sm:$0xff]
        %v2104 = vld [vmem:[%s2092 + $0x58] sm:$0xff]
        %v2105 = vld [vmem:[%s2092 + $0x60] sm:$0xff]
        %v2106 = vld [vmem:[%s2092 + $0x68] sm:$0xff]
        %v2107 = vld [vmem:[%s2092 + $0x70] sm:$0xff]
        %v2108 = vld [vmem:[%s2092 + $0x78] sm:$0xff]
        %v2109 = vpack.c.bf16 %v2094, %v2093
        %v2110 = vpack.c.bf16 %v2096, %v2095
        %v2111 = vpack.c.bf16 %v2098, %v2097
        %v2112 = vpack.c.bf16 %v2100, %v2099
        %v2113 = vpack.c.bf16 %v2102, %v2101
        %v2114 = vpack.c.bf16 %v2104, %v2103
        %v2115 = vpack.c.bf16 %v2106, %v2105
        %v2116 = vpack.c.bf16 %v2108, %v2107
        %v2117 = vld [vmem:[%s839] sm:$0xf]
        %v2118 = vld [vmem:[%s839 + $0x4] sm:$0xf]
        %v2119 = vld [vmem:[%s839 + $0x8] sm:$0xf]
        %v2120 = vld [vmem:[%s839 + $0xc] sm:$0xf]
        %v2121 = vld [vmem:[%s842] sm:$0x1]
        %v2123 = vperm.slane %v2121, 0
        %v2129 = vunpack.c.l.b16 %v2117
        %v2130 = vunpack.c.l.b16 %v2118
        %v2131 = vunpack.c.l.b16 %v2119
        %v2132 = vunpack.c.l.b16 %v2120
        %v2133 = vpack.c.b16 %v2130, %v2129
        %v2134 = vpack.c.b16 %v2132, %v2131
        %vm2137 = vcmask 261120
        %v2139 = vsel %vm2137, %v2109, 0
        %v2142 = vsel %vm2137, %v2110, 0
        %v2145 = vsel %vm2137, %v2111, 0
        %v2148 = vsel %vm2137, %v2112, 0
        %v2151 = vsel %vm2137, %v2113, 0
        %v2154 = vsel %vm2137, %v2114, 0
        %v2157 = vsel %vm2137, %v2115, 0
        %v2160 = vsel %vm2137, %v2116, 0
        %2162 = vmatpush.bf16.msra.mxu0 0
        %2163 = vmatpush.bf16.msra.mxu0 0
        %2164 = vmatpush.bf16.msra.mxu0 0
        %2165 = vmatpush.bf16.msra.mxu0 0
        %2166 = vmatpush.bf16.msra.mxu0 0
        %2167 = vmatpush.bf16.msra.mxu0 0
        %2168 = vmatpush.bf16.msra.mxu0 %v2134
        %2169 = vmatpush.bf16.msra.mxu0 %v2133
        %2170 = vmatmul.bf16.gmra.mxu0 %v2139
        %v2171 = vpop.f32.mrf.mxu0
        %v2172 = vadd.f32 %v2123, %v2171
        %v2173 = vpop.f32.mrf.mxu0
        %v2174 = vadd.f32 %v2123, %v2173
        %2175 = vmatmul.bf16.gmra.mxu0 %v2142
        %v2176 = vpop.f32.mrf.mxu0
        %v2177 = vadd.f32 %v2123, %v2176
        %v2178 = vpop.f32.mrf.mxu0
        %v2179 = vadd.f32 %v2123, %v2178
        %2180 = vmatmul.bf16.gmra.mxu0 %v2145
        %v2181 = vpop.f32.mrf.mxu0
        %v2182 = vadd.f32 %v2123, %v2181
        %v2183 = vpop.f32.mrf.mxu0
        %v2184 = vadd.f32 %v2123, %v2183
        %2185 = vmatmul.bf16.gmra.mxu0 %v2148
        %v2186 = vpop.f32.mrf.mxu0
        %v2187 = vadd.f32 %v2123, %v2186
        %v2188 = vpop.f32.mrf.mxu0
        %v2189 = vadd.f32 %v2123, %v2188
        %2190 = vmatmul.bf16.gmra.mxu0 %v2151
        %v2191 = vpop.f32.mrf.mxu0
        %v2192 = vadd.f32 %v2123, %v2191
        %v2193 = vpop.f32.mrf.mxu0
        %v2194 = vadd.f32 %v2123, %v2193
        %2195 = vmatmul.bf16.gmra.mxu0 %v2154
        %v2196 = vpop.f32.mrf.mxu0
        %v2197 = vadd.f32 %v2123, %v2196
        %v2198 = vpop.f32.mrf.mxu0
        %v2199 = vadd.f32 %v2123, %v2198
        %2200 = vmatmul.bf16.gmra.mxu0 %v2157
        %v2201 = vpop.f32.mrf.mxu0
        %v2202 = vadd.f32 %v2123, %v2201
        %v2203 = vpop.f32.mrf.mxu0
        %v2204 = vadd.f32 %v2123, %v2203
        %2205 = vmatmul.bf16.gmra.mxu0 %v2160
        %v2206 = vpop.f32.mrf.mxu0
        %v2207 = vadd.f32 %v2123, %v2206
        %v2208 = vpop.f32.mrf.mxu0
        %v2209 = vadd.f32 %v2123, %v2208
        %2210 = vdwg.mxu0
        %v2211 = vxor.u32 %v2093, 2147483648
        %v2212 = vxor.u32 %v2094, 2147483648
        %v2213 = vxor.u32 %v2095, 2147483648
        %v2214 = vxor.u32 %v2096, 2147483648
        %v2215 = vxor.u32 %v2097, 2147483648
        %v2216 = vxor.u32 %v2098, 2147483648
        %v2217 = vxor.u32 %v2099, 2147483648
        %v2218 = vxor.u32 %v2100, 2147483648
        %v2219 = vxor.u32 %v2101, 2147483648
        %v2220 = vxor.u32 %v2102, 2147483648
        %v2221 = vxor.u32 %v2103, 2147483648
        %v2222 = vxor.u32 %v2104, 2147483648
        %v2223 = vxor.u32 %v2105, 2147483648
        %v2224 = vxor.u32 %v2106, 2147483648
        %v2225 = vxor.u32 %v2107, 2147483648
        %v2226 = vxor.u32 %v2108, 2147483648
        %v2227 = vmul.f32 %v2211, 1.442695
        %v2228 = vpow.pop %v2227
        %v2229 = vmul.f32 %v2212, 1.442695
        %v2230 = vpow.pop %v2229
        %v2231 = vmul.f32 %v2213, 1.442695
        %v2232 = vpow.pop %v2231
        %v2233 = vmul.f32 %v2214, 1.442695
        %v2234 = vpow.pop %v2233
        %v2235 = vmul.f32 %v2215, 1.442695
        %v2236 = vpow.pop %v2235
        %v2237 = vmul.f32 %v2216, 1.442695
        %v2238 = vpow.pop %v2237
        %v2239 = vmul.f32 %v2217, 1.442695
        %v2240 = vpow.pop %v2239
        %v2241 = vmul.f32 %v2218, 1.442695
        %v2242 = vpow.pop %v2241
        %v2243 = vmul.f32 %v2219, 1.442695
        %v2244 = vpow.pop %v2243
        %v2245 = vmul.f32 %v2220, 1.442695
        %v2246 = vpow.pop %v2245
        %v2247 = vmul.f32 %v2221, 1.442695
        %v2248 = vpow.pop %v2247
        %v2249 = vmul.f32 %v2222, 1.442695
        %v2250 = vpow.pop %v2249
        %v2251 = vmul.f32 %v2223, 1.442695
        %v2252 = vpow.pop %v2251
        %v2253 = vmul.f32 %v2224, 1.442695
        %v2254 = vpow.pop %v2253
        %v2255 = vmul.f32 %v2225, 1.442695
        %v2256 = vpow.pop %v2255
        %v2257 = vmul.f32 %v2226, 1.442695
        %v2258 = vpow.pop %v2257
        %v2259 = vadd.f32 %v2228, 1.0
        %v2260 = vadd.f32 %v2230, 1.0
        %v2261 = vadd.f32 %v2232, 1.0
        %v2262 = vadd.f32 %v2234, 1.0
        %v2263 = vadd.f32 %v2236, 1.0
        %v2264 = vadd.f32 %v2238, 1.0
        %v2265 = vadd.f32 %v2240, 1.0
        %v2266 = vadd.f32 %v2242, 1.0
        %v2267 = vadd.f32 %v2244, 1.0
        %v2268 = vadd.f32 %v2246, 1.0
        %v2269 = vadd.f32 %v2248, 1.0
        %v2270 = vadd.f32 %v2250, 1.0
        %v2271 = vadd.f32 %v2252, 1.0
        %v2272 = vadd.f32 %v2254, 1.0
        %v2273 = vadd.f32 %v2256, 1.0
        %v2274 = vadd.f32 %v2258, 1.0
        %v2275 = vrcp.pop %v2259
        %v2276 = vmul.f32 %v2259, %v2275
        %v2277 = vsub.f32 1.0, %v2276
        %v2278 = vmul.f32 %v2275, %v2277
        %v2279 = vadd.f32 %v2275, %v2278
        %vm2280 = vweird.f32 %v2259
        %vm2281 = vweird.f32 %v2275
        %vm2282 = vmor %vm2280, %vm2281
        %v2283 = vsel %vm2282, %v2275, %v2279
        %v2284 = vand.u32 2147483647, %v2259
        %vm2285 = vcmp.eq.f32.partialorder %v2284, 8.507059e+37
        %v2286 = vand.u32 %v2259, 2147483648
        %v2287 = vor.u32 1.1754944e-38, %v2286
        %v2288 = vsel %vm2285, %v2287, %v2283
        %v2289 = vmul.f32 1.0, %v2288
        %v2290 = vrcp.pop %v2260
        %v2291 = vmul.f32 %v2260, %v2290
        %v2292 = vsub.f32 1.0, %v2291
        %v2293 = vmul.f32 %v2290, %v2292
        %v2294 = vadd.f32 %v2290, %v2293
        %vm2295 = vweird.f32 %v2260
        %vm2296 = vweird.f32 %v2290
        %vm2297 = vmor %vm2295, %vm2296
        %v2298 = vsel %vm2297, %v2290, %v2294
        %v2299 = vand.u32 2147483647, %v2260
        %vm2300 = vcmp.eq.f32.partialorder %v2299, 8.507059e+37
        %v2301 = vand.u32 %v2260, 2147483648
        %v2302 = vor.u32 1.1754944e-38, %v2301
        %v2303 = vsel %vm2300, %v2302, %v2298
        %v2304 = vmul.f32 1.0, %v2303
        %v2305 = vrcp.pop %v2261
        %v2306 = vmul.f32 %v2261, %v2305
        %v2307 = vsub.f32 1.0, %v2306
        %v2308 = vmul.f32 %v2305, %v2307
        %v2309 = vadd.f32 %v2305, %v2308
        %vm2310 = vweird.f32 %v2261
        %vm2311 = vweird.f32 %v2305
        %vm2312 = vmor %vm2310, %vm2311
        %v2313 = vsel %vm2312, %v2305, %v2309
        %v2314 = vand.u32 2147483647, %v2261
        %vm2315 = vcmp.eq.f32.partialorder %v2314, 8.507059e+37
        %v2316 = vand.u32 %v2261, 2147483648
        %v2317 = vor.u32 1.1754944e-38, %v2316
        %v2318 = vsel %vm2315, %v2317, %v2313
        %v2319 = vmul.f32 1.0, %v2318
        %v2320 = vrcp.pop %v2262
        %v2321 = vmul.f32 %v2262, %v2320
        %v2322 = vsub.f32 1.0, %v2321
        %v2323 = vmul.f32 %v2320, %v2322
        %v2324 = vadd.f32 %v2320, %v2323
        %vm2325 = vweird.f32 %v2262
        %vm2326 = vweird.f32 %v2320
        %vm2327 = vmor %vm2325, %vm2326
        %v2328 = vsel %vm2327, %v2320, %v2324
        %v2329 = vand.u32 2147483647, %v2262
        %vm2330 = vcmp.eq.f32.partialorder %v2329, 8.507059e+37
        %v2331 = vand.u32 %v2262, 2147483648
        %v2332 = vor.u32 1.1754944e-38, %v2331
        %v2333 = vsel %vm2330, %v2332, %v2328
        %v2334 = vmul.f32 1.0, %v2333
        %v2335 = vrcp.pop %v2263
        %v2336 = vmul.f32 %v2263, %v2335
        %v2337 = vsub.f32 1.0, %v2336
        %v2338 = vmul.f32 %v2335, %v2337
        %v2339 = vadd.f32 %v2335, %v2338
        %vm2340 = vweird.f32 %v2263
        %vm2341 = vweird.f32 %v2335
        %vm2342 = vmor %vm2340, %vm2341
        %v2343 = vsel %vm2342, %v2335, %v2339
        %v2344 = vand.u32 2147483647, %v2263
        %vm2345 = vcmp.eq.f32.partialorder %v2344, 8.507059e+37
        %v2346 = vand.u32 %v2263, 2147483648
        %v2347 = vor.u32 1.1754944e-38, %v2346
        %v2348 = vsel %vm2345, %v2347, %v2343
        %v2349 = vmul.f32 1.0, %v2348
        %v2350 = vrcp.pop %v2264
        %v2351 = vmul.f32 %v2264, %v2350
        %v2352 = vsub.f32 1.0, %v2351
        %v2353 = vmul.f32 %v2350, %v2352
        %v2354 = vadd.f32 %v2350, %v2353
        %vm2355 = vweird.f32 %v2264
        %vm2356 = vweird.f32 %v2350
        %vm2357 = vmor %vm2355, %vm2356
        %v2358 = vsel %vm2357, %v2350, %v2354
        %v2359 = vand.u32 2147483647, %v2264
        %vm2360 = vcmp.eq.f32.partialorder %v2359, 8.507059e+37
        %v2361 = vand.u32 %v2264, 2147483648
        %v2362 = vor.u32 1.1754944e-38, %v2361
        %v2363 = vsel %vm2360, %v2362, %v2358
        %v2364 = vmul.f32 1.0, %v2363
        %v2365 = vrcp.pop %v2265
        %v2366 = vmul.f32 %v2265, %v2365
        %v2367 = vsub.f32 1.0, %v2366
        %v2368 = vmul.f32 %v2365, %v2367
        %v2369 = vadd.f32 %v2365, %v2368
        %vm2370 = vweird.f32 %v2265
        %vm2371 = vweird.f32 %v2365
        %vm2372 = vmor %vm2370, %vm2371
        %v2373 = vsel %vm2372, %v2365, %v2369
        %v2374 = vand.u32 2147483647, %v2265
        %vm2375 = vcmp.eq.f32.partialorder %v2374, 8.507059e+37
        %v2376 = vand.u32 %v2265, 2147483648
        %v2377 = vor.u32 1.1754944e-38, %v2376
        %v2378 = vsel %vm2375, %v2377, %v2373
        %v2379 = vmul.f32 1.0, %v2378
        %v2380 = vrcp.pop %v2266
        %v2381 = vmul.f32 %v2266, %v2380
        %v2382 = vsub.f32 1.0, %v2381
        %v2383 = vmul.f32 %v2380, %v2382
        %v2384 = vadd.f32 %v2380, %v2383
        %vm2385 = vweird.f32 %v2266
        %vm2386 = vweird.f32 %v2380
        %vm2387 = vmor %vm2385, %vm2386
        %v2388 = vsel %vm2387, %v2380, %v2384
        %v2389 = vand.u32 2147483647, %v2266
        %vm2390 = vcmp.eq.f32.partialorder %v2389, 8.507059e+37
        %v2391 = vand.u32 %v2266, 2147483648
        %v2392 = vor.u32 1.1754944e-38, %v2391
        %v2393 = vsel %vm2390, %v2392, %v2388
        %v2394 = vmul.f32 1.0, %v2393
        %v2395 = vrcp.pop %v2267
        %v2396 = vmul.f32 %v2267, %v2395
        %v2397 = vsub.f32 1.0, %v2396
        %v2398 = vmul.f32 %v2395, %v2397
        %v2399 = vadd.f32 %v2395, %v2398
        %vm2400 = vweird.f32 %v2267
        %vm2401 = vweird.f32 %v2395
        %vm2402 = vmor %vm2400, %vm2401
        %v2403 = vsel %vm2402, %v2395, %v2399
        %v2404 = vand.u32 2147483647, %v2267
        %vm2405 = vcmp.eq.f32.partialorder %v2404, 8.507059e+37
        %v2406 = vand.u32 %v2267, 2147483648
        %v2407 = vor.u32 1.1754944e-38, %v2406
        %v2408 = vsel %vm2405, %v2407, %v2403
        %v2409 = vmul.f32 1.0, %v2408
        %v2410 = vrcp.pop %v2268
        %v2411 = vmul.f32 %v2268, %v2410
        %v2412 = vsub.f32 1.0, %v2411
        %v2413 = vmul.f32 %v2410, %v2412
        %v2414 = vadd.f32 %v2410, %v2413
        %vm2415 = vweird.f32 %v2268
        %vm2416 = vweird.f32 %v2410
        %vm2417 = vmor %vm2415, %vm2416
        %v2418 = vsel %vm2417, %v2410, %v2414
        %v2419 = vand.u32 2147483647, %v2268
        %vm2420 = vcmp.eq.f32.partialorder %v2419, 8.507059e+37
        %v2421 = vand.u32 %v2268, 2147483648
        %v2422 = vor.u32 1.1754944e-38, %v2421
        %v2423 = vsel %vm2420, %v2422, %v2418
        %v2424 = vmul.f32 1.0, %v2423
        %v2425 = vrcp.pop %v2269
        %v2426 = vmul.f32 %v2269, %v2425
        %v2427 = vsub.f32 1.0, %v2426
        %v2428 = vmul.f32 %v2425, %v2427
        %v2429 = vadd.f32 %v2425, %v2428
        %vm2430 = vweird.f32 %v2269
        %vm2431 = vweird.f32 %v2425
        %vm2432 = vmor %vm2430, %vm2431
        %v2433 = vsel %vm2432, %v2425, %v2429
        %v2434 = vand.u32 2147483647, %v2269
        %vm2435 = vcmp.eq.f32.partialorder %v2434, 8.507059e+37
        %v2436 = vand.u32 %v2269, 2147483648
        %v2437 = vor.u32 1.1754944e-38, %v2436
        %v2438 = vsel %vm2435, %v2437, %v2433
        %v2439 = vmul.f32 1.0, %v2438
        %v2440 = vrcp.pop %v2270
        %v2441 = vmul.f32 %v2270, %v2440
        %v2442 = vsub.f32 1.0, %v2441
        %v2443 = vmul.f32 %v2440, %v2442
        %v2444 = vadd.f32 %v2440, %v2443
        %vm2445 = vweird.f32 %v2270
        %vm2446 = vweird.f32 %v2440
        %vm2447 = vmor %vm2445, %vm2446
        %v2448 = vsel %vm2447, %v2440, %v2444
        %v2449 = vand.u32 2147483647, %v2270
        %vm2450 = vcmp.eq.f32.partialorder %v2449, 8.507059e+37
        %v2451 = vand.u32 %v2270, 2147483648
        %v2452 = vor.u32 1.1754944e-38, %v2451
        %v2453 = vsel %vm2450, %v2452, %v2448
        %v2454 = vmul.f32 1.0, %v2453
        %v2455 = vrcp.pop %v2271
        %v2456 = vmul.f32 %v2271, %v2455
        %v2457 = vsub.f32 1.0, %v2456
        %v2458 = vmul.f32 %v2455, %v2457
        %v2459 = vadd.f32 %v2455, %v2458
        %vm2460 = vweird.f32 %v2271
        %vm2461 = vweird.f32 %v2455
        %vm2462 = vmor %vm2460, %vm2461
        %v2463 = vsel %vm2462, %v2455, %v2459
        %v2464 = vand.u32 2147483647, %v2271
        %vm2465 = vcmp.eq.f32.partialorder %v2464, 8.507059e+37
        %v2466 = vand.u32 %v2271, 2147483648
        %v2467 = vor.u32 1.1754944e-38, %v2466
        %v2468 = vsel %vm2465, %v2467, %v2463
        %v2469 = vmul.f32 1.0, %v2468
        %v2470 = vrcp.pop %v2272
        %v2471 = vmul.f32 %v2272, %v2470
        %v2472 = vsub.f32 1.0, %v2471
        %v2473 = vmul.f32 %v2470, %v2472
        %v2474 = vadd.f32 %v2470, %v2473
        %vm2475 = vweird.f32 %v2272
        %vm2476 = vweird.f32 %v2470
        %vm2477 = vmor %vm2475, %vm2476
        %v2478 = vsel %vm2477, %v2470, %v2474
        %v2479 = vand.u32 2147483647, %v2272
        %vm2480 = vcmp.eq.f32.partialorder %v2479, 8.507059e+37
        %v2481 = vand.u32 %v2272, 2147483648
        %v2482 = vor.u32 1.1754944e-38, %v2481
        %v2483 = vsel %vm2480, %v2482, %v2478
        %v2484 = vmul.f32 1.0, %v2483
        %v2485 = vrcp.pop %v2273
        %v2486 = vmul.f32 %v2273, %v2485
        %v2487 = vsub.f32 1.0, %v2486
        %v2488 = vmul.f32 %v2485, %v2487
        %v2489 = vadd.f32 %v2485, %v2488
        %vm2490 = vweird.f32 %v2273
        %vm2491 = vweird.f32 %v2485
        %vm2492 = vmor %vm2490, %vm2491
        %v2493 = vsel %vm2492, %v2485, %v2489
        %v2494 = vand.u32 2147483647, %v2273
        %vm2495 = vcmp.eq.f32.partialorder %v2494, 8.507059e+37
        %v2496 = vand.u32 %v2273, 2147483648
        %v2497 = vor.u32 1.1754944e-38, %v2496
        %v2498 = vsel %vm2495, %v2497, %v2493
        %v2499 = vmul.f32 1.0, %v2498
        %v2500 = vrcp.pop %v2274
        %v2501 = vmul.f32 %v2274, %v2500
        %v2502 = vsub.f32 1.0, %v2501
        %v2503 = vmul.f32 %v2500, %v2502
        %v2504 = vadd.f32 %v2500, %v2503
        %vm2505 = vweird.f32 %v2274
        %vm2506 = vweird.f32 %v2500
        %vm2507 = vmor %vm2505, %vm2506
        %v2508 = vsel %vm2507, %v2500, %v2504
        %v2509 = vand.u32 2147483647, %v2274
        %vm2510 = vcmp.eq.f32.partialorder %v2509, 8.507059e+37
        %v2511 = vand.u32 %v2274, 2147483648
        %v2512 = vor.u32 1.1754944e-38, %v2511
        %v2513 = vsel %vm2510, %v2512, %v2508
        %v2514 = vmul.f32 1.0, %v2513
        %v2515 = vld [vmem:[#allocation6] sm:$0xf]
        %v2516 = vld [vmem:[#allocation6 + $0x4] sm:$0xf]
        %v2517 = vld [vmem:[#allocation6 + $0x8] sm:$0xf]
        %v2518 = vld [vmem:[#allocation6 + $0xc] sm:$0xf]
        %v2519 = vld [vmem:[#allocation6 + $0x10] sm:$0xf]
        %v2520 = vld [vmem:[#allocation6 + $0x14] sm:$0xf]
        %v2521 = vld [vmem:[#allocation6 + $0x18] sm:$0xf]
        %v2522 = vld [vmem:[#allocation6 + $0x1c] sm:$0xf]
        %v2523 = vld [vmem:[#allocation6 + $0x20] sm:$0xf]
        %v2524 = vld [vmem:[#allocation6 + $0x24] sm:$0xf]
        %v2525 = vld [vmem:[#allocation6 + $0x28] sm:$0xf]
        %v2526 = vld [vmem:[#allocation6 + $0x2c] sm:$0xf]
        %v2527 = vld [vmem:[#allocation6 + $0x30] sm:$0xf]
        %v2528 = vld [vmem:[#allocation6 + $0x34] sm:$0xf]
        %v2529 = vld [vmem:[#allocation6 + $0x38] sm:$0xf]
        %v2530 = vld [vmem:[#allocation6 + $0x3c] sm:$0xf]
        %v2547 = vunpack.c.l.b16 %v2515
        %v2548 = vunpack.c.l.b16 %v2516
        %v2549 = vunpack.c.l.b16 %v2517
        %v2550 = vunpack.c.l.b16 %v2518
        %v2551 = vunpack.c.l.b16 %v2519
        %v2552 = vunpack.c.l.b16 %v2520
        %v2553 = vunpack.c.l.b16 %v2521
        %v2554 = vunpack.c.l.b16 %v2522
        %v2555 = vunpack.c.l.b16 %v2523
        %v2556 = vunpack.c.l.b16 %v2524
        %v2557 = vunpack.c.l.b16 %v2525
        %v2558 = vunpack.c.l.b16 %v2526
        %v2559 = vunpack.c.l.b16 %v2527
        %v2560 = vunpack.c.l.b16 %v2528
        %v2561 = vunpack.c.l.b16 %v2529
        %v2562 = vunpack.c.l.b16 %v2530
        %v2563 = vpack.c.b16 %v2548, %v2547
        %v2564 = vpack.c.b16 %v2550, %v2549
        %v2565 = vpack.c.b16 %v2552, %v2551
        %v2566 = vpack.c.b16 %v2554, %v2553
        %v2567 = vpack.c.b16 %v2556, %v2555
        %v2568 = vpack.c.b16 %v2558, %v2557
        %v2569 = vpack.c.b16 %v2560, %v2559
        %v2570 = vpack.c.b16 %v2562, %v2561
        %2579 = vmatpush.bf16.msra.mxu0 %v2570
        %2580 = vmatpush.bf16.msra.mxu0 %v2569
        %2581 = vmatpush.bf16.msra.mxu0 %v2568
        %2582 = vmatpush.bf16.msra.mxu0 %v2567
        %2583 = vmatpush.bf16.msra.mxu0 %v2566
        %2584 = vmatpush.bf16.msra.mxu0 %v2565
        %2585 = vmatpush.bf16.msra.mxu0 %v2564
        %2586 = vmatpush.bf16.msra.mxu0 %v2563
        %2587 = vmatmul.bf16.gmra.mxu0 %v2044
        %v2588 = vpop.f32.mrf.mxu0
        %v2589 = vadd.f32 0.0, %v2588
        %v2590 = vpop.f32.mrf.mxu0
        %v2591 = vadd.f32 0.0, %v2590
        %2592 = vmatmul.bf16.gmra.mxu0 %v2045
        %v2593 = vpop.f32.mrf.mxu0
        %v2594 = vadd.f32 0.0, %v2593
        %v2595 = vpop.f32.mrf.mxu0
        %v2596 = vadd.f32 0.0, %v2595
        %2597 = vmatmul.bf16.gmra.mxu0 %v2046
        %v2598 = vpop.f32.mrf.mxu0
        %v2599 = vadd.f32 0.0, %v2598
        %v2600 = vpop.f32.mrf.mxu0
        %v2601 = vadd.f32 0.0, %v2600
        %2602 = vmatmul.bf16.gmra.mxu0 %v2047
        %v2603 = vpop.f32.mrf.mxu0
        %v2604 = vadd.f32 0.0, %v2603
        %v2605 = vpop.f32.mrf.mxu0
        %v2606 = vadd.f32 0.0, %v2605
        %2607 = vmatmul.bf16.gmra.mxu0 %v2048
        %v2608 = vpop.f32.mrf.mxu0
        %v2609 = vadd.f32 0.0, %v2608
        %v2610 = vpop.f32.mrf.mxu0
        %v2611 = vadd.f32 0.0, %v2610
        %2612 = vmatmul.bf16.gmra.mxu0 %v2049
        %v2613 = vpop.f32.mrf.mxu0
        %v2614 = vadd.f32 0.0, %v2613
        %v2615 = vpop.f32.mrf.mxu0
        %v2616 = vadd.f32 0.0, %v2615
        %2617 = vmatmul.bf16.gmra.mxu0 %v2050
        %v2618 = vpop.f32.mrf.mxu0
        %v2619 = vadd.f32 0.0, %v2618
        %v2620 = vpop.f32.mrf.mxu0
        %v2621 = vadd.f32 0.0, %v2620
        %2622 = vmatmul.bf16.gmra.mxu0 %v2051
        %v2623 = vpop.f32.mrf.mxu0
        %v2624 = vadd.f32 0.0, %v2623
        %v2625 = vpop.f32.mrf.mxu0
        %v2626 = vadd.f32 0.0, %v2625
        %2627 = vdwg.mxu0
        %2644 = vrot.lane.b32.xlu0 %v2589, 96
        %v2645 = vpop.permute.xlu0 %2644
        %2646 = vrot.lane.b32.xlu0 %v2591, 96
        %v2647 = vpop.permute.xlu0 %2646
        %2648 = vrot.lane.b32.xlu0 %v2594, 96
        %v2649 = vpop.permute.xlu0 %2648
        %2650 = vrot.lane.b32.xlu0 %v2596, 96
        %v2651 = vpop.permute.xlu0 %2650
        %2652 = vrot.lane.b32.xlu0 %v2599, 96
        %v2653 = vpop.permute.xlu0 %2652
        %2654 = vrot.lane.b32.xlu0 %v2601, 96
        %v2655 = vpop.permute.xlu0 %2654
        %2656 = vrot.lane.b32.xlu0 %v2604, 96
        %v2657 = vpop.permute.xlu0 %2656
        %2658 = vrot.lane.b32.xlu0 %v2606, 96
        %v2659 = vpop.permute.xlu0 %2658
        %2660 = vrot.lane.b32.xlu0 %v2609, 96
        %v2661 = vpop.permute.xlu0 %2660
        %2662 = vrot.lane.b32.xlu0 %v2611, 96
        %v2663 = vpop.permute.xlu0 %2662
        %2664 = vrot.lane.b32.xlu0 %v2614, 96
        %v2665 = vpop.permute.xlu0 %2664
        %2666 = vrot.lane.b32.xlu0 %v2616, 96
        %v2667 = vpop.permute.xlu0 %2666
        %2668 = vrot.lane.b32.xlu0 %v2619, 96
        %v2669 = vpop.permute.xlu0 %2668
        %2670 = vrot.lane.b32.xlu0 %v2621, 96
        %v2671 = vpop.permute.xlu0 %2670
        %2672 = vrot.lane.b32.xlu0 %v2624, 96
        %v2673 = vpop.permute.xlu0 %2672
        %2674 = vrot.lane.b32.xlu0 %v2626, 96
        %v2675 = vpop.permute.xlu0 %2674
        %v2692 = vmul.f32 %v2289, %v2645
        %v2693 = vmul.f32 %v2304, %v2647
        %v2694 = vmul.f32 %v2319, %v2649
        %v2695 = vmul.f32 %v2334, %v2651
        %v2696 = vmul.f32 %v2349, %v2653
        %v2697 = vmul.f32 %v2364, %v2655
        %v2698 = vmul.f32 %v2379, %v2657
        %v2699 = vmul.f32 %v2394, %v2659
        %v2700 = vmul.f32 %v2409, %v2661
        %v2701 = vmul.f32 %v2424, %v2663
        %v2702 = vmul.f32 %v2439, %v2665
        %v2703 = vmul.f32 %v2454, %v2667
        %v2704 = vmul.f32 %v2469, %v2669
        %v2705 = vmul.f32 %v2484, %v2671
        %v2706 = vmul.f32 %v2499, %v2673
        %v2707 = vmul.f32 %v2514, %v2675
        %v2708 = vld [vmem:[#allocation4] sm:$0xff]
        %v2709 = vld [vmem:[#allocation4 + $0x8] sm:$0xff]
        %v2710 = vld [vmem:[#allocation4 + $0x10] sm:$0xff]
        %v2711 = vld [vmem:[#allocation4 + $0x18] sm:$0xff]
        %v2712 = vld [vmem:[#allocation4 + $0x20] sm:$0xff]
        %v2713 = vld [vmem:[#allocation4 + $0x28] sm:$0xff]
        %v2714 = vld [vmem:[#allocation4 + $0x30] sm:$0xff]
        %v2715 = vld [vmem:[#allocation4 + $0x38] sm:$0xff]
        %v2716 = vpack.c.bf16 %v2693, %v2692
        %v2717 = vpack.c.bf16 %v2695, %v2694
        %v2718 = vpack.c.bf16 %v2697, %v2696
        %v2719 = vpack.c.bf16 %v2699, %v2698
        %v2720 = vpack.c.bf16 %v2701, %v2700
        %v2721 = vpack.c.bf16 %v2703, %v2702
        %v2722 = vpack.c.bf16 %v2705, %v2704
        %v2723 = vpack.c.bf16 %v2707, %v2706
        %2724 = vmatpush.bf16.msra.mxu0 %v2723
        %2725 = vmatpush.bf16.msra.mxu0 %v2722
        %2726 = vmatpush.bf16.msra.mxu0 %v2721
        %2727 = vmatpush.bf16.msra.mxu0 %v2720
        %2728 = vmatpush.bf16.msra.mxu0 %v2719
        %2729 = vmatpush.bf16.msra.mxu0 %v2718
        %2730 = vmatpush.bf16.msra.mxu0 %v2717
        %2731 = vmatpush.bf16.msra.mxu0 %v2716
        %2732 = vmatmul.bf16.gmra.mxu0 %v2087
        %v2733 = vpop.f32.mrf.mxu0
        %v2734 = vadd.f32 0.0, %v2733
        %v2735 = vpop.f32.mrf.mxu0
        %v2736 = vadd.f32 0.0, %v2735
        %2737 = vmatmul.bf16.gmra.mxu0 %v2088
        %v2738 = vpop.f32.mrf.mxu0
        %v2739 = vadd.f32 0.0, %v2738
        %v2740 = vpop.f32.mrf.mxu0
        %v2741 = vadd.f32 0.0, %v2740
        %2742 = vmatmul.bf16.gmra.mxu0 %v2089
        %v2743 = vpop.f32.mrf.mxu0
        %v2744 = vadd.f32 0.0, %v2743
        %v2745 = vpop.f32.mrf.mxu0
        %v2746 = vadd.f32 0.0, %v2745
        %2747 = vmatmul.bf16.gmra.mxu0 %v2090
        %v2748 = vpop.f32.mrf.mxu0
        %v2749 = vadd.f32 0.0, %v2748
        %v2750 = vpop.f32.mrf.mxu0
        %v2751 = vadd.f32 0.0, %v2750
        %2752 = vdwg.mxu0
        %v2753 = vadd.f32 %v2708, %v2734
        %v2754 = vadd.f32 %v2709, %v2736
        %v2755 = vadd.f32 %v2710, %v2739
        %v2756 = vadd.f32 %v2711, %v2741
        %v2757 = vadd.f32 %v2712, %v2744
        %v2758 = vadd.f32 %v2713, %v2746
        %v2759 = vadd.f32 %v2714, %v2749
        %v2760 = vadd.f32 %v2715, %v2751
        %2761 = vst.msk [vmem:[#allocation4] sm:$0xff] %vm2137, %v2753
        %2762 = vst.msk [vmem:[#allocation4 + $0x8] sm:$0xff] %vm2137, %v2754
        %2763 = vst.msk [vmem:[#allocation4 + $0x10] sm:$0xff] %vm2137, %v2755
        %2764 = vst.msk [vmem:[#allocation4 + $0x18] sm:$0xff] %vm2137, %v2756
        %2765 = vst.msk [vmem:[#allocation4 + $0x20] sm:$0xff] %vm2137, %v2757
        %2766 = vst.msk [vmem:[#allocation4 + $0x28] sm:$0xff] %vm2137, %v2758
        %2767 = vst.msk [vmem:[#allocation4 + $0x30] sm:$0xff] %vm2137, %v2759
        %2768 = vst.msk [vmem:[#allocation4 + $0x38] sm:$0xff] %vm2137, %v2760
        %v2769 = vadd.f32 %v2172, %v2589
        %v2770 = vadd.f32 %v2174, %v2591
        %v2771 = vadd.f32 %v2177, %v2594
        %v2772 = vadd.f32 %v2179, %v2596
        %v2773 = vadd.f32 %v2182, %v2599
        %v2774 = vadd.f32 %v2184, %v2601
        %v2775 = vadd.f32 %v2187, %v2604
        %v2776 = vadd.f32 %v2189, %v2606
        %v2777 = vadd.f32 %v2192, %v2609
        %v2778 = vadd.f32 %v2194, %v2611
        %v2779 = vadd.f32 %v2197, %v2614
        %v2780 = vadd.f32 %v2199, %v2616
        %v2781 = vadd.f32 %v2202, %v2619
        %v2782 = vadd.f32 %v2204, %v2621
        %v2783 = vadd.f32 %v2207, %v2624
        %v2784 = vadd.f32 %v2209, %v2626
        %v2785 = vld [vmem:[%s851] sm:$0x1]
        %v2787 = vperm.slane %v2785, 0
        %v2789 = vmul.f32 %v2769, %v2787
        %v2790 = vmul.f32 %v2770, %v2787
        %v2791 = vmul.f32 %v2771, %v2787
        %v2792 = vmul.f32 %v2772, %v2787
        %v2793 = vmul.f32 %v2773, %v2787
        %v2794 = vmul.f32 %v2774, %v2787
        %v2795 = vmul.f32 %v2775, %v2787
        %v2796 = vmul.f32 %v2776, %v2787
        %v2797 = vmul.f32 %v2777, %v2787
        %v2798 = vmul.f32 %v2778, %v2787
        %v2799 = vmul.f32 %v2779, %v2787
        %v2800 = vmul.f32 %v2780, %v2787
        %v2801 = vmul.f32 %v2781, %v2787
        %v2802 = vmul.f32 %v2782, %v2787
        %v2803 = vmul.f32 %v2783, %v2787
        %v2804 = vmul.f32 %v2784, %v2787
        %v2805 = vld [vmem:[%s854] sm:$0x1]
        %v2807 = vperm.slane %v2805, 0
        %v2809 = vadd.f32 %v2789, %v2807
        %v2810 = vadd.f32 %v2790, %v2807
        %v2811 = vadd.f32 %v2791, %v2807
        %v2812 = vadd.f32 %v2792, %v2807
        %v2813 = vadd.f32 %v2793, %v2807
        %v2814 = vadd.f32 %v2794, %v2807
        %v2815 = vadd.f32 %v2795, %v2807
        %v2816 = vadd.f32 %v2796, %v2807
        %v2817 = vadd.f32 %v2797, %v2807
        %v2818 = vadd.f32 %v2798, %v2807
        %v2819 = vadd.f32 %v2799, %v2807
        %v2820 = vadd.f32 %v2800, %v2807
        %v2821 = vadd.f32 %v2801, %v2807
        %v2822 = vadd.f32 %v2802, %v2807
        %v2823 = vadd.f32 %v2803, %v2807
        %v2824 = vadd.f32 %v2804, %v2807
        %v2825 = vxor.u32 %v2809, 2147483648
        %v2826 = vxor.u32 %v2810, 2147483648
        %v2827 = vxor.u32 %v2811, 2147483648
        %v2828 = vxor.u32 %v2812, 2147483648
        %v2829 = vxor.u32 %v2813, 2147483648
        %v2830 = vxor.u32 %v2814, 2147483648
        %v2831 = vxor.u32 %v2815, 2147483648
        %v2832 = vxor.u32 %v2816, 2147483648
        %v2833 = vxor.u32 %v2817, 2147483648
        %v2834 = vxor.u32 %v2818, 2147483648
        %v2835 = vxor.u32 %v2819, 2147483648
        %v2836 = vxor.u32 %v2820, 2147483648
        %v2837 = vxor.u32 %v2821, 2147483648
        %v2838 = vxor.u32 %v2822, 2147483648
        %v2839 = vxor.u32 %v2823, 2147483648
        %v2840 = vxor.u32 %v2824, 2147483648
        %v2841 = vmul.f32 %v2825, 1.442695
        %v2842 = vpow.pop %v2841
        %v2843 = vmul.f32 %v2826, 1.442695
        %v2844 = vpow.pop %v2843
        %v2845 = vmul.f32 %v2827, 1.442695
        %v2846 = vpow.pop %v2845
        %v2847 = vmul.f32 %v2828, 1.442695
        %v2848 = vpow.pop %v2847
        %v2849 = vmul.f32 %v2829, 1.442695
        %v2850 = vpow.pop %v2849
        %v2851 = vmul.f32 %v2830, 1.442695
        %v2852 = vpow.pop %v2851
        %v2853 = vmul.f32 %v2831, 1.442695
        %v2854 = vpow.pop %v2853
        %v2855 = vmul.f32 %v2832, 1.442695
        %v2856 = vpow.pop %v2855
        %v2857 = vmul.f32 %v2833, 1.442695
        %v2858 = vpow.pop %v2857
        %v2859 = vmul.f32 %v2834, 1.442695
        %v2860 = vpow.pop %v2859
        %v2861 = vmul.f32 %v2835, 1.442695
        %v2862 = vpow.pop %v2861
        %v2863 = vmul.f32 %v2836, 1.442695
        %v2864 = vpow.pop %v2863
        %v2865 = vmul.f32 %v2837, 1.442695
        %v2866 = vpow.pop %v2865
        %v2867 = vmul.f32 %v2838, 1.442695
        %v2868 = vpow.pop %v2867
        %v2869 = vmul.f32 %v2839, 1.442695
        %v2870 = vpow.pop %v2869
        %v2871 = vmul.f32 %v2840, 1.442695
        %v2872 = vpow.pop %v2871
        %v2873 = vadd.f32 %v2842, 1.0
        %v2874 = vadd.f32 %v2844, 1.0
        %v2875 = vadd.f32 %v2846, 1.0
        %v2876 = vadd.f32 %v2848, 1.0
        %v2877 = vadd.f32 %v2850, 1.0
        %v2878 = vadd.f32 %v2852, 1.0
        %v2879 = vadd.f32 %v2854, 1.0
        %v2880 = vadd.f32 %v2856, 1.0
        %v2881 = vadd.f32 %v2858, 1.0
        %v2882 = vadd.f32 %v2860, 1.0
        %v2883 = vadd.f32 %v2862, 1.0
        %v2884 = vadd.f32 %v2864, 1.0
        %v2885 = vadd.f32 %v2866, 1.0
        %v2886 = vadd.f32 %v2868, 1.0
        %v2887 = vadd.f32 %v2870, 1.0
        %v2888 = vadd.f32 %v2872, 1.0
        %v2889 = vrcp.pop %v2873
        %v2890 = vmul.f32 %v2873, %v2889
        %v2891 = vsub.f32 1.0, %v2890
        %v2892 = vmul.f32 %v2889, %v2891
        %v2893 = vadd.f32 %v2889, %v2892
        %vm2894 = vweird.f32 %v2873
        %vm2895 = vweird.f32 %v2889
        %vm2896 = vmor %vm2894, %vm2895
        %v2897 = vsel %vm2896, %v2889, %v2893
        %v2898 = vand.u32 2147483647, %v2873
        %vm2899 = vcmp.eq.f32.partialorder %v2898, 8.507059e+37
        %v2900 = vand.u32 %v2873, 2147483648
        %v2901 = vor.u32 1.1754944e-38, %v2900
        %v2902 = vsel %vm2899, %v2901, %v2897
        %v2903 = vmul.f32 1.0, %v2902
        %v2904 = vrcp.pop %v2874
        %v2905 = vmul.f32 %v2874, %v2904
        %v2906 = vsub.f32 1.0, %v2905
        %v2907 = vmul.f32 %v2904, %v2906
        %v2908 = vadd.f32 %v2904, %v2907
        %vm2909 = vweird.f32 %v2874
        %vm2910 = vweird.f32 %v2904
        %vm2911 = vmor %vm2909, %vm2910
        %v2912 = vsel %vm2911, %v2904, %v2908
        %v2913 = vand.u32 2147483647, %v2874
        %vm2914 = vcmp.eq.f32.partialorder %v2913, 8.507059e+37
        %v2915 = vand.u32 %v2874, 2147483648
        %v2916 = vor.u32 1.1754944e-38, %v2915
        %v2917 = vsel %vm2914, %v2916, %v2912
        %v2918 = vmul.f32 1.0, %v2917
        %v2919 = vrcp.pop %v2875
        %v2920 = vmul.f32 %v2875, %v2919
        %v2921 = vsub.f32 1.0, %v2920
        %v2922 = vmul.f32 %v2919, %v2921
        %v2923 = vadd.f32 %v2919, %v2922
        %vm2924 = vweird.f32 %v2875
        %vm2925 = vweird.f32 %v2919
        %vm2926 = vmor %vm2924, %vm2925
        %v2927 = vsel %vm2926, %v2919, %v2923
        %v2928 = vand.u32 2147483647, %v2875
        %vm2929 = vcmp.eq.f32.partialorder %v2928, 8.507059e+37
        %v2930 = vand.u32 %v2875, 2147483648
        %v2931 = vor.u32 1.1754944e-38, %v2930
        %v2932 = vsel %vm2929, %v2931, %v2927
        %v2933 = vmul.f32 1.0, %v2932
        %v2934 = vrcp.pop %v2876
        %v2935 = vmul.f32 %v2876, %v2934
        %v2936 = vsub.f32 1.0, %v2935
        %v2937 = vmul.f32 %v2934, %v2936
        %v2938 = vadd.f32 %v2934, %v2937
        %vm2939 = vweird.f32 %v2876
        %vm2940 = vweird.f32 %v2934
        %vm2941 = vmor %vm2939, %vm2940
        %v2942 = vsel %vm2941, %v2934, %v2938
        %v2943 = vand.u32 2147483647, %v2876
        %vm2944 = vcmp.eq.f32.partialorder %v2943, 8.507059e+37
        %v2945 = vand.u32 %v2876, 2147483648
        %v2946 = vor.u32 1.1754944e-38, %v2945
        %v2947 = vsel %vm2944, %v2946, %v2942
        %v2948 = vmul.f32 1.0, %v2947
        %v2949 = vrcp.pop %v2877
        %v2950 = vmul.f32 %v2877, %v2949
        %v2951 = vsub.f32 1.0, %v2950
        %v2952 = vmul.f32 %v2949, %v2951
        %v2953 = vadd.f32 %v2949, %v2952
        %vm2954 = vweird.f32 %v2877
        %vm2955 = vweird.f32 %v2949
        %vm2956 = vmor %vm2954, %vm2955
        %v2957 = vsel %vm2956, %v2949, %v2953
        %v2958 = vand.u32 2147483647, %v2877
        %vm2959 = vcmp.eq.f32.partialorder %v2958, 8.507059e+37
        %v2960 = vand.u32 %v2877, 2147483648
        %v2961 = vor.u32 1.1754944e-38, %v2960
        %v2962 = vsel %vm2959, %v2961, %v2957
        %v2963 = vmul.f32 1.0, %v2962
        %v2964 = vrcp.pop %v2878
        %v2965 = vmul.f32 %v2878, %v2964
        %v2966 = vsub.f32 1.0, %v2965
        %v2967 = vmul.f32 %v2964, %v2966
        %v2968 = vadd.f32 %v2964, %v2967
        %vm2969 = vweird.f32 %v2878
        %vm2970 = vweird.f32 %v2964
        %vm2971 = vmor %vm2969, %vm2970
        %v2972 = vsel %vm2971, %v2964, %v2968
        %v2973 = vand.u32 2147483647, %v2878
        %vm2974 = vcmp.eq.f32.partialorder %v2973, 8.507059e+37
        %v2975 = vand.u32 %v2878, 2147483648
        %v2976 = vor.u32 1.1754944e-38, %v2975
        %v2977 = vsel %vm2974, %v2976, %v2972
        %v2978 = vmul.f32 1.0, %v2977
        %v2979 = vrcp.pop %v2879
        %v2980 = vmul.f32 %v2879, %v2979
        %v2981 = vsub.f32 1.0, %v2980
        %v2982 = vmul.f32 %v2979, %v2981
        %v2983 = vadd.f32 %v2979, %v2982
        %vm2984 = vweird.f32 %v2879
        %vm2985 = vweird.f32 %v2979
        %vm2986 = vmor %vm2984, %vm2985
        %v2987 = vsel %vm2986, %v2979, %v2983
        %v2988 = vand.u32 2147483647, %v2879
        %vm2989 = vcmp.eq.f32.partialorder %v2988, 8.507059e+37
        %v2990 = vand.u32 %v2879, 2147483648
        %v2991 = vor.u32 1.1754944e-38, %v2990
        %v2992 = vsel %vm2989, %v2991, %v2987
        %v2993 = vmul.f32 1.0, %v2992
        %v2994 = vrcp.pop %v2880
        %v2995 = vmul.f32 %v2880, %v2994
        %v2996 = vsub.f32 1.0, %v2995
        %v2997 = vmul.f32 %v2994, %v2996
        %v2998 = vadd.f32 %v2994, %v2997
        %vm2999 = vweird.f32 %v2880
        %vm3000 = vweird.f32 %v2994
        %vm3001 = vmor %vm2999, %vm3000
        %v3002 = vsel %vm3001, %v2994, %v2998
        %v3003 = vand.u32 2147483647, %v2880
        %vm3004 = vcmp.eq.f32.partialorder %v3003, 8.507059e+37
        %v3005 = vand.u32 %v2880, 2147483648
        %v3006 = vor.u32 1.1754944e-38, %v3005
        %v3007 = vsel %vm3004, %v3006, %v3002
        %v3008 = vmul.f32 1.0, %v3007
        %v3009 = vrcp.pop %v2881
        %v3010 = vmul.f32 %v2881, %v3009
        %v3011 = vsub.f32 1.0, %v3010
        %v3012 = vmul.f32 %v3009, %v3011
        %v3013 = vadd.f32 %v3009, %v3012
        %vm3014 = vweird.f32 %v2881
        %vm3015 = vweird.f32 %v3009
        %vm3016 = vmor %vm3014, %vm3015
        %v3017 = vsel %vm3016, %v3009, %v3013
        %v3018 = vand.u32 2147483647, %v2881
        %vm3019 = vcmp.eq.f32.partialorder %v3018, 8.507059e+37
        %v3020 = vand.u32 %v2881, 2147483648
        %v3021 = vor.u32 1.1754944e-38, %v3020
        %v3022 = vsel %vm3019, %v3021, %v3017
        %v3023 = vmul.f32 1.0, %v3022
        %v3024 = vrcp.pop %v2882
        %v3025 = vmul.f32 %v2882, %v3024
        %v3026 = vsub.f32 1.0, %v3025
        %v3027 = vmul.f32 %v3024, %v3026
        %v3028 = vadd.f32 %v3024, %v3027
        %vm3029 = vweird.f32 %v2882
        %vm3030 = vweird.f32 %v3024
        %vm3031 = vmor %vm3029, %vm3030
        %v3032 = vsel %vm3031, %v3024, %v3028
        %v3033 = vand.u32 2147483647, %v2882
        %vm3034 = vcmp.eq.f32.partialorder %v3033, 8.507059e+37
        %v3035 = vand.u32 %v2882, 2147483648
        %v3036 = vor.u32 1.1754944e-38, %v3035
        %v3037 = vsel %vm3034, %v3036, %v3032
        %v3038 = vmul.f32 1.0, %v3037
        %v3039 = vrcp.pop %v2883
        %v3040 = vmul.f32 %v2883, %v3039
        %v3041 = vsub.f32 1.0, %v3040
        %v3042 = vmul.f32 %v3039, %v3041
        %v3043 = vadd.f32 %v3039, %v3042
        %vm3044 = vweird.f32 %v2883
        %vm3045 = vweird.f32 %v3039
        %vm3046 = vmor %vm3044, %vm3045
        %v3047 = vsel %vm3046, %v3039, %v3043
        %v3048 = vand.u32 2147483647, %v2883
        %vm3049 = vcmp.eq.f32.partialorder %v3048, 8.507059e+37
        %v3050 = vand.u32 %v2883, 2147483648
        %v3051 = vor.u32 1.1754944e-38, %v3050
        %v3052 = vsel %vm3049, %v3051, %v3047
        %v3053 = vmul.f32 1.0, %v3052
        %v3054 = vrcp.pop %v2884
        %v3055 = vmul.f32 %v2884, %v3054
        %v3056 = vsub.f32 1.0, %v3055
        %v3057 = vmul.f32 %v3054, %v3056
        %v3058 = vadd.f32 %v3054, %v3057
        %vm3059 = vweird.f32 %v2884
        %vm3060 = vweird.f32 %v3054
        %vm3061 = vmor %vm3059, %vm3060
        %v3062 = vsel %vm3061, %v3054, %v3058
        %v3063 = vand.u32 2147483647, %v2884
        %vm3064 = vcmp.eq.f32.partialorder %v3063, 8.507059e+37
        %v3065 = vand.u32 %v2884, 2147483648
        %v3066 = vor.u32 1.1754944e-38, %v3065
        %v3067 = vsel %vm3064, %v3066, %v3062
        %v3068 = vmul.f32 1.0, %v3067
        %v3069 = vrcp.pop %v2885
        %v3070 = vmul.f32 %v2885, %v3069
        %v3071 = vsub.f32 1.0, %v3070
        %v3072 = vmul.f32 %v3069, %v3071
        %v3073 = vadd.f32 %v3069, %v3072
        %vm3074 = vweird.f32 %v2885
        %vm3075 = vweird.f32 %v3069
        %vm3076 = vmor %vm3074, %vm3075
        %v3077 = vsel %vm3076, %v3069, %v3073
        %v3078 = vand.u32 2147483647, %v2885
        %vm3079 = vcmp.eq.f32.partialorder %v3078, 8.507059e+37
        %v3080 = vand.u32 %v2885, 2147483648
        %v3081 = vor.u32 1.1754944e-38, %v3080
        %v3082 = vsel %vm3079, %v3081, %v3077
        %v3083 = vmul.f32 1.0, %v3082
        %v3084 = vrcp.pop %v2886
        %v3085 = vmul.f32 %v2886, %v3084
        %v3086 = vsub.f32 1.0, %v3085
        %v3087 = vmul.f32 %v3084, %v3086
        %v3088 = vadd.f32 %v3084, %v3087
        %vm3089 = vweird.f32 %v2886
        %vm3090 = vweird.f32 %v3084
        %vm3091 = vmor %vm3089, %vm3090
        %v3092 = vsel %vm3091, %v3084, %v3088
        %v3093 = vand.u32 2147483647, %v2886
        %vm3094 = vcmp.eq.f32.partialorder %v3093, 8.507059e+37
        %v3095 = vand.u32 %v2886, 2147483648
        %v3096 = vor.u32 1.1754944e-38, %v3095
        %v3097 = vsel %vm3094, %v3096, %v3092
        %v3098 = vmul.f32 1.0, %v3097
        %v3099 = vrcp.pop %v2887
        %v3100 = vmul.f32 %v2887, %v3099
        %v3101 = vsub.f32 1.0, %v3100
        %v3102 = vmul.f32 %v3099, %v3101
        %v3103 = vadd.f32 %v3099, %v3102
        %vm3104 = vweird.f32 %v2887
        %vm3105 = vweird.f32 %v3099
        %vm3106 = vmor %vm3104, %vm3105
        %v3107 = vsel %vm3106, %v3099, %v3103
        %v3108 = vand.u32 2147483647, %v2887
        %vm3109 = vcmp.eq.f32.partialorder %v3108, 8.507059e+37
        %v3110 = vand.u32 %v2887, 2147483648
        %v3111 = vor.u32 1.1754944e-38, %v3110
        %v3112 = vsel %vm3109, %v3111, %v3107
        %v3113 = vmul.f32 1.0, %v3112
        %v3114 = vrcp.pop %v2888
        %v3115 = vmul.f32 %v2888, %v3114
        %v3116 = vsub.f32 1.0, %v3115
        %v3117 = vmul.f32 %v3114, %v3116
        %v3118 = vadd.f32 %v3114, %v3117
        %vm3119 = vweird.f32 %v2888
        %vm3120 = vweird.f32 %v3114
        %vm3121 = vmor %vm3119, %vm3120
        %v3122 = vsel %vm3121, %v3114, %v3118
        %v3123 = vand.u32 2147483647, %v2888
        %vm3124 = vcmp.eq.f32.partialorder %v3123, 8.507059e+37
        %v3125 = vand.u32 %v2888, 2147483648
        %v3126 = vor.u32 1.1754944e-38, %v3125
        %v3127 = vsel %vm3124, %v3126, %v3122
        %v3128 = vmul.f32 1.0, %v3127
        %v3129 = vmul.f32 %v2809, %v2903
        %v3130 = vmul.f32 %v2810, %v2918
        %v3131 = vmul.f32 %v2811, %v2933
        %v3132 = vmul.f32 %v2812, %v2948
        %v3133 = vmul.f32 %v2813, %v2963
        %v3134 = vmul.f32 %v2814, %v2978
        %v3135 = vmul.f32 %v2815, %v2993
        %v3136 = vmul.f32 %v2816, %v3008
        %v3137 = vmul.f32 %v2817, %v3023
        %v3138 = vmul.f32 %v2818, %v3038
        %v3139 = vmul.f32 %v2819, %v3053
        %v3140 = vmul.f32 %v2820, %v3068
        %v3141 = vmul.f32 %v2821, %v3083
        %v3142 = vmul.f32 %v2822, %v3098
        %v3143 = vmul.f32 %v2823, %v3113
        %v3144 = vmul.f32 %v2824, %v3128
        %v3145 = vadd.f32 %v2093, %v3129
        %v3146 = vadd.f32 %v2094, %v3130
        %v3147 = vadd.f32 %v2095, %v3131
        %v3148 = vadd.f32 %v2096, %v3132
        %v3149 = vadd.f32 %v2097, %v3133
        %v3150 = vadd.f32 %v2098, %v3134
        %v3151 = vadd.f32 %v2099, %v3135
        %v3152 = vadd.f32 %v2100, %v3136
        %v3153 = vadd.f32 %v2101, %v3137
        %v3154 = vadd.f32 %v2102, %v3138
        %v3155 = vadd.f32 %v2103, %v3139
        %v3156 = vadd.f32 %v2104, %v3140
        %v3157 = vadd.f32 %v2105, %v3141
        %v3158 = vadd.f32 %v2106, %v3142
        %v3159 = vadd.f32 %v2107, %v3143
        %v3160 = vadd.f32 %v2108, %v3144
        %3161 = vst.msk [vmem:[%s2092] sm:$0xff] %vm2137, %v3145
        %3162 = vst.msk [vmem:[%s2092 + $0x8] sm:$0xff] %vm2137, %v3146
        %3163 = vst.msk [vmem:[%s2092 + $0x10] sm:$0xff] %vm2137, %v3147
        %3164 = vst.msk [vmem:[%s2092 + $0x18] sm:$0xff] %vm2137, %v3148
        %3165 = vst.msk [vmem:[%s2092 + $0x20] sm:$0xff] %vm2137, %v3149
        %3166 = vst.msk [vmem:[%s2092 + $0x28] sm:$0xff] %vm2137, %v3150
        %3167 = vst.msk [vmem:[%s2092 + $0x30] sm:$0xff] %vm2137, %v3151
        %3168 = vst.msk [vmem:[%s2092 + $0x38] sm:$0xff] %vm2137, %v3152
        %3169 = vst.msk [vmem:[%s2092 + $0x40] sm:$0xff] %vm2137, %v3153
        %3170 = vst.msk [vmem:[%s2092 + $0x48] sm:$0xff] %vm2137, %v3154
        %3171 = vst.msk [vmem:[%s2092 + $0x50] sm:$0xff] %vm2137, %v3155
        %3172 = vst.msk [vmem:[%s2092 + $0x58] sm:$0xff] %vm2137, %v3156
        %3173 = vst.msk [vmem:[%s2092 + $0x60] sm:$0xff] %vm2137, %v3157
        %3174 = vst.msk [vmem:[%s2092 + $0x68] sm:$0xff] %vm2137, %v3158
        %3175 = vst.msk [vmem:[%s2092 + $0x70] sm:$0xff] %vm2137, %v3159
        %3176 = vst.msk [vmem:[%s2092 + $0x78] sm:$0xff] %vm2137, %v3160
        %p3177 = scmp.eq.s32.totalorder %s42, 1
        // Predicated region
        $region117: #{tpu_custom_call.1} parent=103 // pred_check
          %p3178 = pneg %p3177
        $region118: #{tpu_custom_call.1} parent=103 // pred_check_branch
          %3180 = sbr.rel (%p3178) target = $region120
        $region119: #{tpu_custom_call.1} parent=103 // pred_region
          %v3181 = vld [vmem:[#allocation5] sm:$0xff]
          %v3182 = vld [vmem:[#allocation5 + $0x8] sm:$0xff]
          %v3183 = vld [vmem:[#allocation5 + $0x10] sm:$0xff]
          %v3184 = vld [vmem:[#allocation5 + $0x18] sm:$0xff]
          %v3185 = vld [vmem:[#allocation5 + $0x20] sm:$0xff]
          %v3186 = vld [vmem:[#allocation5 + $0x28] sm:$0xff]
          %v3187 = vld [vmem:[#allocation5 + $0x30] sm:$0xff]
          %v3188 = vld [vmem:[#allocation5 + $0x38] sm:$0xff]
          %v3189 = vld [vmem:[#allocation4] sm:$0xff]
          %v3190 = vld [vmem:[#allocation4 + $0x8] sm:$0xff]
          %v3191 = vld [vmem:[#allocation4 + $0x10] sm:$0xff]
          %v3192 = vld [vmem:[#allocation4 + $0x18] sm:$0xff]
          %v3193 = vld [vmem:[#allocation4 + $0x20] sm:$0xff]
          %v3194 = vld [vmem:[#allocation4 + $0x28] sm:$0xff]
          %v3195 = vld [vmem:[#allocation4 + $0x30] sm:$0xff]
          %v3196 = vld [vmem:[#allocation4 + $0x38] sm:$0xff]
          %v3197 = vadd.f32 %v3181, %v3189
          %v3198 = vadd.f32 %v3182, %v3190
          %v3199 = vadd.f32 %v3183, %v3191
          %v3200 = vadd.f32 %v3184, %v3192
          %v3201 = vadd.f32 %v3185, %v3193
          %v3202 = vadd.f32 %v3186, %v3194
          %v3203 = vadd.f32 %v3187, %v3195
          %v3204 = vadd.f32 %v3188, %v3196
          %v3205 = vld [vmem:[%s845] sm:$0x1]
          %v3207 = vperm.slane %v3205, 0
          %v3209 = vmul.f32 %v3197, %v3207
          %v3210 = vmul.f32 %v3198, %v3207
          %v3211 = vmul.f32 %v3199, %v3207
          %v3212 = vmul.f32 %v3200, %v3207
          %v3213 = vmul.f32 %v3201, %v3207
          %v3214 = vmul.f32 %v3202, %v3207
          %v3215 = vmul.f32 %v3203, %v3207
          %v3216 = vmul.f32 %v3204, %v3207
          %v3217 = vld [vmem:[%s848] sm:$0x1]
          %v3219 = vperm.slane %v3217, 0
          %v3221 = vadd.f32 %v3209, %v3219
          %v3222 = vadd.f32 %v3210, %v3219
          %v3223 = vadd.f32 %v3211, %v3219
          %v3224 = vadd.f32 %v3212, %v3219
          %v3225 = vadd.f32 %v3213, %v3219
          %v3226 = vadd.f32 %v3214, %v3219
          %v3227 = vadd.f32 %v3215, %v3219
          %v3228 = vadd.f32 %v3216, %v3219
          %v3229 = vld [vmem:[#allocation2] sm:$0xff]
          %v3230 = vld [vmem:[#allocation2 + $0x8] sm:$0xff]
          %v3231 = vld [vmem:[#allocation2 + $0x10] sm:$0xff]
          %v3232 = vld [vmem:[#allocation2 + $0x18] sm:$0xff]
          %v3233 = vld [vmem:[#allocation2 + $0x20] sm:$0xff]
          %v3234 = vld [vmem:[#allocation2 + $0x28] sm:$0xff]
          %v3235 = vld [vmem:[#allocation2 + $0x30] sm:$0xff]
          %v3236 = vld [vmem:[#allocation2 + $0x38] sm:$0xff]
          %v3237 = vxor.u32 %v3221, 2147483648
          %v3238 = vxor.u32 %v3222, 2147483648
          %v3239 = vxor.u32 %v3223, 2147483648
          %v3240 = vxor.u32 %v3224, 2147483648
          %v3241 = vxor.u32 %v3225, 2147483648
          %v3242 = vxor.u32 %v3226, 2147483648
          %v3243 = vxor.u32 %v3227, 2147483648
          %v3244 = vxor.u32 %v3228, 2147483648
          %v3245 = vmul.f32 %v3237, 1.442695
          %v3246 = vpow.pop %v3245
          %v3247 = vmul.f32 %v3238, 1.442695
          %v3248 = vpow.pop %v3247
          %v3249 = vmul.f32 %v3239, 1.442695
          %v3250 = vpow.pop %v3249
          %v3251 = vmul.f32 %v3240, 1.442695
          %v3252 = vpow.pop %v3251
          %v3253 = vmul.f32 %v3241, 1.442695
          %v3254 = vpow.pop %v3253
          %v3255 = vmul.f32 %v3242, 1.442695
          %v3256 = vpow.pop %v3255
          %v3257 = vmul.f32 %v3243, 1.442695
          %v3258 = vpow.pop %v3257
          %v3259 = vmul.f32 %v3244, 1.442695
          %v3260 = vpow.pop %v3259
          %v3261 = vadd.f32 %v3246, 1.0
          %v3262 = vadd.f32 %v3248, 1.0
          %v3263 = vadd.f32 %v3250, 1.0
          %v3264 = vadd.f32 %v3252, 1.0
          %v3265 = vadd.f32 %v3254, 1.0
          %v3266 = vadd.f32 %v3256, 1.0
          %v3267 = vadd.f32 %v3258, 1.0
          %v3268 = vadd.f32 %v3260, 1.0
          %v3269 = vrcp.pop %v3261
          %v3270 = vmul.f32 %v3261, %v3269
          %v3271 = vsub.f32 1.0, %v3270
          %v3272 = vmul.f32 %v3269, %v3271
          %v3273 = vadd.f32 %v3269, %v3272
          %vm3274 = vweird.f32 %v3261
          %vm3275 = vweird.f32 %v3269
          %vm3276 = vmor %vm3274, %vm3275
          %v3277 = vsel %vm3276, %v3269, %v3273
          %v3278 = vand.u32 2147483647, %v3261
          %vm3279 = vcmp.eq.f32.partialorder %v3278, 8.507059e+37
          %v3280 = vand.u32 %v3261, 2147483648
          %v3281 = vor.u32 1.1754944e-38, %v3280
          %v3282 = vsel %vm3279, %v3281, %v3277
          %v3283 = vmul.f32 1.0, %v3282
          %v3284 = vrcp.pop %v3262
          %v3285 = vmul.f32 %v3262, %v3284
          %v3286 = vsub.f32 1.0, %v3285
          %v3287 = vmul.f32 %v3284, %v3286
          %v3288 = vadd.f32 %v3284, %v3287
          %vm3289 = vweird.f32 %v3262
          %vm3290 = vweird.f32 %v3284
          %vm3291 = vmor %vm3289, %vm3290
          %v3292 = vsel %vm3291, %v3284, %v3288
          %v3293 = vand.u32 2147483647, %v3262
          %vm3294 = vcmp.eq.f32.partialorder %v3293, 8.507059e+37
          %v3295 = vand.u32 %v3262, 2147483648
          %v3296 = vor.u32 1.1754944e-38, %v3295
          %v3297 = vsel %vm3294, %v3296, %v3292
          %v3298 = vmul.f32 1.0, %v3297
          %v3299 = vrcp.pop %v3263
          %v3300 = vmul.f32 %v3263, %v3299
          %v3301 = vsub.f32 1.0, %v3300
          %v3302 = vmul.f32 %v3299, %v3301
          %v3303 = vadd.f32 %v3299, %v3302
          %vm3304 = vweird.f32 %v3263
          %vm3305 = vweird.f32 %v3299
          %vm3306 = vmor %vm3304, %vm3305
          %v3307 = vsel %vm3306, %v3299, %v3303
          %v3308 = vand.u32 2147483647, %v3263
          %vm3309 = vcmp.eq.f32.partialorder %v3308, 8.507059e+37
          %v3310 = vand.u32 %v3263, 2147483648
          %v3311 = vor.u32 1.1754944e-38, %v3310
          %v3312 = vsel %vm3309, %v3311, %v3307
          %v3313 = vmul.f32 1.0, %v3312
          %v3314 = vrcp.pop %v3264
          %v3315 = vmul.f32 %v3264, %v3314
          %v3316 = vsub.f32 1.0, %v3315
          %v3317 = vmul.f32 %v3314, %v3316
          %v3318 = vadd.f32 %v3314, %v3317
          %vm3319 = vweird.f32 %v3264
          %vm3320 = vweird.f32 %v3314
          %vm3321 = vmor %vm3319, %vm3320
          %v3322 = vsel %vm3321, %v3314, %v3318
          %v3323 = vand.u32 2147483647, %v3264
          %vm3324 = vcmp.eq.f32.partialorder %v3323, 8.507059e+37
          %v3325 = vand.u32 %v3264, 2147483648
          %v3326 = vor.u32 1.1754944e-38, %v3325
          %v3327 = vsel %vm3324, %v3326, %v3322
          %v3328 = vmul.f32 1.0, %v3327
          %v3329 = vrcp.pop %v3265
          %v3330 = vmul.f32 %v3265, %v3329
          %v3331 = vsub.f32 1.0, %v3330
          %v3332 = vmul.f32 %v3329, %v3331
          %v3333 = vadd.f32 %v3329, %v3332
          %vm3334 = vweird.f32 %v3265
          %vm3335 = vweird.f32 %v3329
          %vm3336 = vmor %vm3334, %vm3335
          %v3337 = vsel %vm3336, %v3329, %v3333
          %v3338 = vand.u32 2147483647, %v3265
          %vm3339 = vcmp.eq.f32.partialorder %v3338, 8.507059e+37
          %v3340 = vand.u32 %v3265, 2147483648
          %v3341 = vor.u32 1.1754944e-38, %v3340
          %v3342 = vsel %vm3339, %v3341, %v3337
          %v3343 = vmul.f32 1.0, %v3342
          %v3344 = vrcp.pop %v3266
          %v3345 = vmul.f32 %v3266, %v3344
          %v3346 = vsub.f32 1.0, %v3345
          %v3347 = vmul.f32 %v3344, %v3346
          %v3348 = vadd.f32 %v3344, %v3347
          %vm3349 = vweird.f32 %v3266
          %vm3350 = vweird.f32 %v3344
          %vm3351 = vmor %vm3349, %vm3350
          %v3352 = vsel %vm3351, %v3344, %v3348
          %v3353 = vand.u32 2147483647, %v3266
          %vm3354 = vcmp.eq.f32.partialorder %v3353, 8.507059e+37
          %v3355 = vand.u32 %v3266, 2147483648
          %v3356 = vor.u32 1.1754944e-38, %v3355
          %v3357 = vsel %vm3354, %v3356, %v3352
          %v3358 = vmul.f32 1.0, %v3357
          %v3359 = vrcp.pop %v3267
          %v3360 = vmul.f32 %v3267, %v3359
          %v3361 = vsub.f32 1.0, %v3360
          %v3362 = vmul.f32 %v3359, %v3361
          %v3363 = vadd.f32 %v3359, %v3362
          %vm3364 = vweird.f32 %v3267
          %vm3365 = vweird.f32 %v3359
          %vm3366 = vmor %vm3364, %vm3365
          %v3367 = vsel %vm3366, %v3359, %v3363
          %v3368 = vand.u32 2147483647, %v3267
          %vm3369 = vcmp.eq.f32.partialorder %v3368, 8.507059e+37
          %v3370 = vand.u32 %v3267, 2147483648
          %v3371 = vor.u32 1.1754944e-38, %v3370
          %v3372 = vsel %vm3369, %v3371, %v3367
          %v3373 = vmul.f32 1.0, %v3372
          %v3374 = vrcp.pop %v3268
          %v3375 = vmul.f32 %v3268, %v3374
          %v3376 = vsub.f32 1.0, %v3375
          %v3377 = vmul.f32 %v3374, %v3376
          %v3378 = vadd.f32 %v3374, %v3377
          %vm3379 = vweird.f32 %v3268
          %vm3380 = vweird.f32 %v3374
          %vm3381 = vmor %vm3379, %vm3380
          %v3382 = vsel %vm3381, %v3374, %v3378
          %v3383 = vand.u32 2147483647, %v3268
          %vm3384 = vcmp.eq.f32.partialorder %v3383, 8.507059e+37
          %v3385 = vand.u32 %v3268, 2147483648
          %v3386 = vor.u32 1.1754944e-38, %v3385
          %v3387 = vsel %vm3384, %v3386, %v3382
          %v3388 = vmul.f32 1.0, %v3387
          %v3389 = vmul.f32 %v3221, %v3283
          %v3390 = vmul.f32 %v3222, %v3298
          %v3391 = vmul.f32 %v3223, %v3313
          %v3392 = vmul.f32 %v3224, %v3328
          %v3393 = vmul.f32 %v3225, %v3343
          %v3394 = vmul.f32 %v3226, %v3358
          %v3395 = vmul.f32 %v3227, %v3373
          %v3396 = vmul.f32 %v3228, %v3388
          %v3397 = vadd.f32 %v3229, %v3389
          %v3398 = vadd.f32 %v3230, %v3390
          %v3399 = vadd.f32 %v3231, %v3391
          %v3400 = vadd.f32 %v3232, %v3392
          %v3401 = vadd.f32 %v3233, %v3393
          %v3402 = vadd.f32 %v3234, %v3394
          %v3403 = vadd.f32 %v3235, %v3395
          %v3404 = vadd.f32 %v3236, %v3396
          %3405 = vst.msk [vmem:[#allocation2] sm:$0xff] %vm2137, %v3397
          %3406 = vst.msk [vmem:[#allocation2 + $0x8] sm:$0xff] %vm2137, %v3398
          %3407 = vst.msk [vmem:[#allocation2 + $0x10] sm:$0xff] %vm2137, %v3399
          %3408 = vst.msk [vmem:[#allocation2 + $0x18] sm:$0xff] %vm2137, %v3400
          %3409 = vst.msk [vmem:[#allocation2 + $0x20] sm:$0xff] %vm2137, %v3401
          %3410 = vst.msk [vmem:[#allocation2 + $0x28] sm:$0xff] %vm2137, %v3402
          %3411 = vst.msk [vmem:[#allocation2 + $0x30] sm:$0xff] %vm2137, %v3403
          %3412 = vst.msk [vmem:[#allocation2 + $0x38] sm:$0xff] %vm2137, %v3404
        $region120: #{tpu_custom_call.1} parent=103 // pred_fallthru
          _
        %p3413 = scmp.eq.s32.totalorder %s41, 2
        // Predicated region
        $region121: #{tpu_custom_call.1} parent=103 // pred_check
          %p3414 = pneg %p3413
        $region122: #{tpu_custom_call.1} parent=103 // pred_check_branch
          %3416 = sbr.rel (%p3414) target = $region124
        $region123: #{tpu_custom_call.1} parent=103 // pred_region
          %v3417 = vpack.c.bf16 %v3146, %v3145
          %v3418 = vpack.c.bf16 %v3148, %v3147
          %v3419 = vpack.c.bf16 %v3150, %v3149
          %v3420 = vpack.c.bf16 %v3152, %v3151
          %v3421 = vpack.c.bf16 %v3154, %v3153
          %v3422 = vpack.c.bf16 %v3156, %v3155
          %v3423 = vpack.c.bf16 %v3158, %v3157
          %v3424 = vpack.c.bf16 %v3160, %v3159
          %v3425 = vld [vmem:[%s17] sm:$0xf]
          %v3426 = vld [vmem:[%s17 + $0x4] sm:$0xf]
          %v3427 = vld [vmem:[%s17 + $0x8] sm:$0xf]
          %v3428 = vld [vmem:[%s17 + $0xc] sm:$0xf]
          %v3429 = vld [vmem:[%s18] sm:$0x1]
          %v3431 = vperm.slane %v3429, 0
          %v3437 = vunpack.c.l.b16 %v3425
          %v3438 = vunpack.c.l.b16 %v3426
          %v3439 = vunpack.c.l.b16 %v3427
          %v3440 = vunpack.c.l.b16 %v3428
          %v3441 = vpack.c.b16 %v3438, %v3437
          %v3442 = vpack.c.b16 %v3440, %v3439
          %v3446 = vsel %vm2137, %v3417, 0
          %v3449 = vsel %vm2137, %v3418, 0
          %v3452 = vsel %vm2137, %v3419, 0
          %v3455 = vsel %vm2137, %v3420, 0
          %v3458 = vsel %vm2137, %v3421, 0
          %v3461 = vsel %vm2137, %v3422, 0
          %v3464 = vsel %vm2137, %v3423, 0
          %v3467 = vsel %vm2137, %v3424, 0
          %3469 = vmatpush.bf16.msra.mxu0 0
          %3470 = vmatpush.bf16.msra.mxu0 0
          %3471 = vmatpush.bf16.msra.mxu0 0
          %3472 = vmatpush.bf16.msra.mxu0 0
          %3473 = vmatpush.bf16.msra.mxu0 0
          %3474 = vmatpush.bf16.msra.mxu0 0
          %3475 = vmatpush.bf16.msra.mxu0 %v3442
          %3476 = vmatpush.bf16.msra.mxu0 %v3441
          %3477 = vmatmul.bf16.gmra.mxu0 %v3446
          %v3478 = vpop.f32.mrf.mxu0
          %v3479 = vadd.f32 %v3431, %v3478
          %v3480 = vpop.f32.mrf.mxu0
          %v3481 = vadd.f32 %v3431, %v3480
          %3482 = vmatmul.bf16.gmra.mxu0 %v3449
          %v3483 = vpop.f32.mrf.mxu0
          %v3484 = vadd.f32 %v3431, %v3483
          %v3485 = vpop.f32.mrf.mxu0
          %v3486 = vadd.f32 %v3431, %v3485
          %3487 = vmatmul.bf16.gmra.mxu0 %v3452
          %v3488 = vpop.f32.mrf.mxu0
          %v3489 = vadd.f32 %v3431, %v3488
          %v3490 = vpop.f32.mrf.mxu0
          %v3491 = vadd.f32 %v3431, %v3490
          %3492 = vmatmul.bf16.gmra.mxu0 %v3455
          %v3493 = vpop.f32.mrf.mxu0
          %v3494 = vadd.f32 %v3431, %v3493
          %v3495 = vpop.f32.mrf.mxu0
          %v3496 = vadd.f32 %v3431, %v3495
          %3497 = vmatmul.bf16.gmra.mxu0 %v3458
          %v3498 = vpop.f32.mrf.mxu0
          %v3499 = vadd.f32 %v3431, %v3498
          %v3500 = vpop.f32.mrf.mxu0
          %v3501 = vadd.f32 %v3431, %v3500
          %3502 = vmatmul.bf16.gmra.mxu0 %v3461
          %v3503 = vpop.f32.mrf.mxu0
          %v3504 = vadd.f32 %v3431, %v3503
          %v3505 = vpop.f32.mrf.mxu0
          %v3506 = vadd.f32 %v3431, %v3505
          %3507 = vmatmul.bf16.gmra.mxu0 %v3464
          %v3508 = vpop.f32.mrf.mxu0
          %v3509 = vadd.f32 %v3431, %v3508
          %v3510 = vpop.f32.mrf.mxu0
          %v3511 = vadd.f32 %v3431, %v3510
          %3512 = vmatmul.bf16.gmra.mxu0 %v3467
          %v3513 = vpop.f32.mrf.mxu0
          %v3514 = vadd.f32 %v3431, %v3513
          %v3515 = vpop.f32.mrf.mxu0
          %v3516 = vadd.f32 %v3431, %v3515
          %3517 = vdwg.mxu0
          %v3518 = vxor.u32 %v3479, 2147483648
          %v3519 = vxor.u32 %v3481, 2147483648
          %v3520 = vxor.u32 %v3484, 2147483648
          %v3521 = vxor.u32 %v3486, 2147483648
          %v3522 = vxor.u32 %v3489, 2147483648
          %v3523 = vxor.u32 %v3491, 2147483648
          %v3524 = vxor.u32 %v3494, 2147483648
          %v3525 = vxor.u32 %v3496, 2147483648
          %v3526 = vxor.u32 %v3499, 2147483648
          %v3527 = vxor.u32 %v3501, 2147483648
          %v3528 = vxor.u32 %v3504, 2147483648
          %v3529 = vxor.u32 %v3506, 2147483648
          %v3530 = vxor.u32 %v3509, 2147483648
          %v3531 = vxor.u32 %v3511, 2147483648
          %v3532 = vxor.u32 %v3514, 2147483648
          %v3533 = vxor.u32 %v3516, 2147483648
          %v3534 = vmul.f32 %v3518, 1.442695
          %v3535 = vpow.pop %v3534
          %v3536 = vmul.f32 %v3519, 1.442695
          %v3537 = vpow.pop %v3536
          %v3538 = vmul.f32 %v3520, 1.442695
          %v3539 = vpow.pop %v3538
          %v3540 = vmul.f32 %v3521, 1.442695
          %v3541 = vpow.pop %v3540
          %v3542 = vmul.f32 %v3522, 1.442695
          %v3543 = vpow.pop %v3542
          %v3544 = vmul.f32 %v3523, 1.442695
          %v3545 = vpow.pop %v3544
          %v3546 = vmul.f32 %v3524, 1.442695
          %v3547 = vpow.pop %v3546
          %v3548 = vmul.f32 %v3525, 1.442695
          %v3549 = vpow.pop %v3548
          %v3550 = vmul.f32 %v3526, 1.442695
          %v3551 = vpow.pop %v3550
          %v3552 = vmul.f32 %v3527, 1.442695
          %v3553 = vpow.pop %v3552
          %v3554 = vmul.f32 %v3528, 1.442695
          %v3555 = vpow.pop %v3554
          %v3556 = vmul.f32 %v3529, 1.442695
          %v3557 = vpow.pop %v3556
          %v3558 = vmul.f32 %v3530, 1.442695
          %v3559 = vpow.pop %v3558
          %v3560 = vmul.f32 %v3531, 1.442695
          %v3561 = vpow.pop %v3560
          %v3562 = vmul.f32 %v3532, 1.442695
          %v3563 = vpow.pop %v3562
          %v3564 = vmul.f32 %v3533, 1.442695
          %v3565 = vpow.pop %v3564
          %v3566 = vadd.f32 %v3535, 1.0
          %v3567 = vadd.f32 %v3537, 1.0
          %v3568 = vadd.f32 %v3539, 1.0
          %v3569 = vadd.f32 %v3541, 1.0
          %v3570 = vadd.f32 %v3543, 1.0
          %v3571 = vadd.f32 %v3545, 1.0
          %v3572 = vadd.f32 %v3547, 1.0
          %v3573 = vadd.f32 %v3549, 1.0
          %v3574 = vadd.f32 %v3551, 1.0
          %v3575 = vadd.f32 %v3553, 1.0
          %v3576 = vadd.f32 %v3555, 1.0
          %v3577 = vadd.f32 %v3557, 1.0
          %v3578 = vadd.f32 %v3559, 1.0
          %v3579 = vadd.f32 %v3561, 1.0
          %v3580 = vadd.f32 %v3563, 1.0
          %v3581 = vadd.f32 %v3565, 1.0
          %v3582 = vrcp.pop %v3566
          %v3583 = vmul.f32 %v3566, %v3582
          %v3584 = vsub.f32 1.0, %v3583
          %v3585 = vmul.f32 %v3582, %v3584
          %v3586 = vadd.f32 %v3582, %v3585
          %vm3587 = vweird.f32 %v3566
          %vm3588 = vweird.f32 %v3582
          %vm3589 = vmor %vm3587, %vm3588
          %v3590 = vsel %vm3589, %v3582, %v3586
          %v3591 = vand.u32 2147483647, %v3566
          %vm3592 = vcmp.eq.f32.partialorder %v3591, 8.507059e+37
          %v3593 = vand.u32 %v3566, 2147483648
          %v3594 = vor.u32 1.1754944e-38, %v3593
          %v3595 = vsel %vm3592, %v3594, %v3590
          %v3596 = vmul.f32 1.0, %v3595
          %v3597 = vrcp.pop %v3567
          %v3598 = vmul.f32 %v3567, %v3597
          %v3599 = vsub.f32 1.0, %v3598
          %v3600 = vmul.f32 %v3597, %v3599
          %v3601 = vadd.f32 %v3597, %v3600
          %vm3602 = vweird.f32 %v3567
          %vm3603 = vweird.f32 %v3597
          %vm3604 = vmor %vm3602, %vm3603
          %v3605 = vsel %vm3604, %v3597, %v3601
          %v3606 = vand.u32 2147483647, %v3567
          %vm3607 = vcmp.eq.f32.partialorder %v3606, 8.507059e+37
          %v3608 = vand.u32 %v3567, 2147483648
          %v3609 = vor.u32 1.1754944e-38, %v3608
          %v3610 = vsel %vm3607, %v3609, %v3605
          %v3611 = vmul.f32 1.0, %v3610
          %v3612 = vrcp.pop %v3568
          %v3613 = vmul.f32 %v3568, %v3612
          %v3614 = vsub.f32 1.0, %v3613
          %v3615 = vmul.f32 %v3612, %v3614
          %v3616 = vadd.f32 %v3612, %v3615
          %vm3617 = vweird.f32 %v3568
          %vm3618 = vweird.f32 %v3612
          %vm3619 = vmor %vm3617, %vm3618
          %v3620 = vsel %vm3619, %v3612, %v3616
          %v3621 = vand.u32 2147483647, %v3568
          %vm3622 = vcmp.eq.f32.partialorder %v3621, 8.507059e+37
          %v3623 = vand.u32 %v3568, 2147483648
          %v3624 = vor.u32 1.1754944e-38, %v3623
          %v3625 = vsel %vm3622, %v3624, %v3620
          %v3626 = vmul.f32 1.0, %v3625
          %v3627 = vrcp.pop %v3569
          %v3628 = vmul.f32 %v3569, %v3627
          %v3629 = vsub.f32 1.0, %v3628
          %v3630 = vmul.f32 %v3627, %v3629
          %v3631 = vadd.f32 %v3627, %v3630
          %vm3632 = vweird.f32 %v3569
          %vm3633 = vweird.f32 %v3627
          %vm3634 = vmor %vm3632, %vm3633
          %v3635 = vsel %vm3634, %v3627, %v3631
          %v3636 = vand.u32 2147483647, %v3569
          %vm3637 = vcmp.eq.f32.partialorder %v3636, 8.507059e+37
          %v3638 = vand.u32 %v3569, 2147483648
          %v3639 = vor.u32 1.1754944e-38, %v3638
          %v3640 = vsel %vm3637, %v3639, %v3635
          %v3641 = vmul.f32 1.0, %v3640
          %v3642 = vrcp.pop %v3570
          %v3643 = vmul.f32 %v3570, %v3642
          %v3644 = vsub.f32 1.0, %v3643
          %v3645 = vmul.f32 %v3642, %v3644
          %v3646 = vadd.f32 %v3642, %v3645
          %vm3647 = vweird.f32 %v3570
          %vm3648 = vweird.f32 %v3642
          %vm3649 = vmor %vm3647, %vm3648
          %v3650 = vsel %vm3649, %v3642, %v3646
          %v3651 = vand.u32 2147483647, %v3570
          %vm3652 = vcmp.eq.f32.partialorder %v3651, 8.507059e+37
          %v3653 = vand.u32 %v3570, 2147483648
          %v3654 = vor.u32 1.1754944e-38, %v3653
          %v3655 = vsel %vm3652, %v3654, %v3650
          %v3656 = vmul.f32 1.0, %v3655
          %v3657 = vrcp.pop %v3571
          %v3658 = vmul.f32 %v3571, %v3657
          %v3659 = vsub.f32 1.0, %v3658
          %v3660 = vmul.f32 %v3657, %v3659
          %v3661 = vadd.f32 %v3657, %v3660
          %vm3662 = vweird.f32 %v3571
          %vm3663 = vweird.f32 %v3657
          %vm3664 = vmor %vm3662, %vm3663
          %v3665 = vsel %vm3664, %v3657, %v3661
          %v3666 = vand.u32 2147483647, %v3571
          %vm3667 = vcmp.eq.f32.partialorder %v3666, 8.507059e+37
          %v3668 = vand.u32 %v3571, 2147483648
          %v3669 = vor.u32 1.1754944e-38, %v3668
          %v3670 = vsel %vm3667, %v3669, %v3665
          %v3671 = vmul.f32 1.0, %v3670
          %v3672 = vrcp.pop %v3572
          %v3673 = vmul.f32 %v3572, %v3672
          %v3674 = vsub.f32 1.0, %v3673
          %v3675 = vmul.f32 %v3672, %v3674
          %v3676 = vadd.f32 %v3672, %v3675
          %vm3677 = vweird.f32 %v3572
          %vm3678 = vweird.f32 %v3672
          %vm3679 = vmor %vm3677, %vm3678
          %v3680 = vsel %vm3679, %v3672, %v3676
          %v3681 = vand.u32 2147483647, %v3572
          %vm3682 = vcmp.eq.f32.partialorder %v3681, 8.507059e+37
          %v3683 = vand.u32 %v3572, 2147483648
          %v3684 = vor.u32 1.1754944e-38, %v3683
          %v3685 = vsel %vm3682, %v3684, %v3680
          %v3686 = vmul.f32 1.0, %v3685
          %v3687 = vrcp.pop %v3573
          %v3688 = vmul.f32 %v3573, %v3687
          %v3689 = vsub.f32 1.0, %v3688
          %v3690 = vmul.f32 %v3687, %v3689
          %v3691 = vadd.f32 %v3687, %v3690
          %vm3692 = vweird.f32 %v3573
          %vm3693 = vweird.f32 %v3687
          %vm3694 = vmor %vm3692, %vm3693
          %v3695 = vsel %vm3694, %v3687, %v3691
          %v3696 = vand.u32 2147483647, %v3573
          %vm3697 = vcmp.eq.f32.partialorder %v3696, 8.507059e+37
          %v3698 = vand.u32 %v3573, 2147483648
          %v3699 = vor.u32 1.1754944e-38, %v3698
          %v3700 = vsel %vm3697, %v3699, %v3695
          %v3701 = vmul.f32 1.0, %v3700
          %v3702 = vrcp.pop %v3574
          %v3703 = vmul.f32 %v3574, %v3702
          %v3704 = vsub.f32 1.0, %v3703
          %v3705 = vmul.f32 %v3702, %v3704
          %v3706 = vadd.f32 %v3702, %v3705
          %vm3707 = vweird.f32 %v3574
          %vm3708 = vweird.f32 %v3702
          %vm3709 = vmor %vm3707, %vm3708
          %v3710 = vsel %vm3709, %v3702, %v3706
          %v3711 = vand.u32 2147483647, %v3574
          %vm3712 = vcmp.eq.f32.partialorder %v3711, 8.507059e+37
          %v3713 = vand.u32 %v3574, 2147483648
          %v3714 = vor.u32 1.1754944e-38, %v3713
          %v3715 = vsel %vm3712, %v3714, %v3710
          %v3716 = vmul.f32 1.0, %v3715
          %v3717 = vrcp.pop %v3575
          %v3718 = vmul.f32 %v3575, %v3717
          %v3719 = vsub.f32 1.0, %v3718
          %v3720 = vmul.f32 %v3717, %v3719
          %v3721 = vadd.f32 %v3717, %v3720
          %vm3722 = vweird.f32 %v3575
          %vm3723 = vweird.f32 %v3717
          %vm3724 = vmor %vm3722, %vm3723
          %v3725 = vsel %vm3724, %v3717, %v3721
          %v3726 = vand.u32 2147483647, %v3575
          %vm3727 = vcmp.eq.f32.partialorder %v3726, 8.507059e+37
          %v3728 = vand.u32 %v3575, 2147483648
          %v3729 = vor.u32 1.1754944e-38, %v3728
          %v3730 = vsel %vm3727, %v3729, %v3725
          %v3731 = vmul.f32 1.0, %v3730
          %v3732 = vrcp.pop %v3576
          %v3733 = vmul.f32 %v3576, %v3732
          %v3734 = vsub.f32 1.0, %v3733
          %v3735 = vmul.f32 %v3732, %v3734
          %v3736 = vadd.f32 %v3732, %v3735
          %vm3737 = vweird.f32 %v3576
          %vm3738 = vweird.f32 %v3732
          %vm3739 = vmor %vm3737, %vm3738
          %v3740 = vsel %vm3739, %v3732, %v3736
          %v3741 = vand.u32 2147483647, %v3576
          %vm3742 = vcmp.eq.f32.partialorder %v3741, 8.507059e+37
          %v3743 = vand.u32 %v3576, 2147483648
          %v3744 = vor.u32 1.1754944e-38, %v3743
          %v3745 = vsel %vm3742, %v3744, %v3740
          %v3746 = vmul.f32 1.0, %v3745
          %v3747 = vrcp.pop %v3577
          %v3748 = vmul.f32 %v3577, %v3747
          %v3749 = vsub.f32 1.0, %v3748
          %v3750 = vmul.f32 %v3747, %v3749
          %v3751 = vadd.f32 %v3747, %v3750
          %vm3752 = vweird.f32 %v3577
          %vm3753 = vweird.f32 %v3747
          %vm3754 = vmor %vm3752, %vm3753
          %v3755 = vsel %vm3754, %v3747, %v3751
          %v3756 = vand.u32 2147483647, %v3577
          %vm3757 = vcmp.eq.f32.partialorder %v3756, 8.507059e+37
          %v3758 = vand.u32 %v3577, 2147483648
          %v3759 = vor.u32 1.1754944e-38, %v3758
          %v3760 = vsel %vm3757, %v3759, %v3755
          %v3761 = vmul.f32 1.0, %v3760
          %v3762 = vrcp.pop %v3578
          %v3763 = vmul.f32 %v3578, %v3762
          %v3764 = vsub.f32 1.0, %v3763
          %v3765 = vmul.f32 %v3762, %v3764
          %v3766 = vadd.f32 %v3762, %v3765
          %vm3767 = vweird.f32 %v3578
          %vm3768 = vweird.f32 %v3762
          %vm3769 = vmor %vm3767, %vm3768
          %v3770 = vsel %vm3769, %v3762, %v3766
          %v3771 = vand.u32 2147483647, %v3578
          %vm3772 = vcmp.eq.f32.partialorder %v3771, 8.507059e+37
          %v3773 = vand.u32 %v3578, 2147483648
          %v3774 = vor.u32 1.1754944e-38, %v3773
          %v3775 = vsel %vm3772, %v3774, %v3770
          %v3776 = vmul.f32 1.0, %v3775
          %v3777 = vrcp.pop %v3579
          %v3778 = vmul.f32 %v3579, %v3777
          %v3779 = vsub.f32 1.0, %v3778
          %v3780 = vmul.f32 %v3777, %v3779
          %v3781 = vadd.f32 %v3777, %v3780
          %vm3782 = vweird.f32 %v3579
          %vm3783 = vweird.f32 %v3777
          %vm3784 = vmor %vm3782, %vm3783
          %v3785 = vsel %vm3784, %v3777, %v3781
          %v3786 = vand.u32 2147483647, %v3579
          %vm3787 = vcmp.eq.f32.partialorder %v3786, 8.507059e+37
          %v3788 = vand.u32 %v3579, 2147483648
          %v3789 = vor.u32 1.1754944e-38, %v3788
          %v3790 = vsel %vm3787, %v3789, %v3785
          %v3791 = vmul.f32 1.0, %v3790
          %v3792 = vrcp.pop %v3580
          %v3793 = vmul.f32 %v3580, %v3792
          %v3794 = vsub.f32 1.0, %v3793
          %v3795 = vmul.f32 %v3792, %v3794
          %v3796 = vadd.f32 %v3792, %v3795
          %vm3797 = vweird.f32 %v3580
          %vm3798 = vweird.f32 %v3792
          %vm3799 = vmor %vm3797, %vm3798
          %v3800 = vsel %vm3799, %v3792, %v3796
          %v3801 = vand.u32 2147483647, %v3580
          %vm3802 = vcmp.eq.f32.partialorder %v3801, 8.507059e+37
          %v3803 = vand.u32 %v3580, 2147483648
          %v3804 = vor.u32 1.1754944e-38, %v3803
          %v3805 = vsel %vm3802, %v3804, %v3800
          %v3806 = vmul.f32 1.0, %v3805
          %v3807 = vrcp.pop %v3581
          %v3808 = vmul.f32 %v3581, %v3807
          %v3809 = vsub.f32 1.0, %v3808
          %v3810 = vmul.f32 %v3807, %v3809
          %v3811 = vadd.f32 %v3807, %v3810
          %vm3812 = vweird.f32 %v3581
          %vm3813 = vweird.f32 %v3807
          %vm3814 = vmor %vm3812, %vm3813
          %v3815 = vsel %vm3814, %v3807, %v3811
          %v3816 = vand.u32 2147483647, %v3581
          %vm3817 = vcmp.eq.f32.partialorder %v3816, 8.507059e+37
          %v3818 = vand.u32 %v3581, 2147483648
          %v3819 = vor.u32 1.1754944e-38, %v3818
          %v3820 = vsel %vm3817, %v3819, %v3815
          %v3821 = vmul.f32 1.0, %v3820
          %v3822 = vmul.f32 %v3479, %v3596
          %v3823 = vmul.f32 %v3481, %v3611
          %v3824 = vmul.f32 %v3484, %v3626
          %v3825 = vmul.f32 %v3486, %v3641
          %v3826 = vmul.f32 %v3489, %v3656
          %v3827 = vmul.f32 %v3491, %v3671
          %v3828 = vmul.f32 %v3494, %v3686
          %v3829 = vmul.f32 %v3496, %v3701
          %v3830 = vmul.f32 %v3499, %v3716
          %v3831 = vmul.f32 %v3501, %v3731
          %v3832 = vmul.f32 %v3504, %v3746
          %v3833 = vmul.f32 %v3506, %v3761
          %v3834 = vmul.f32 %v3509, %v3776
          %v3835 = vmul.f32 %v3511, %v3791
          %v3836 = vmul.f32 %v3514, %v3806
          %v3837 = vmul.f32 %v3516, %v3821
          %v3838 = vpack.c.bf16 %v3823, %v3822
          %v3839 = vpack.c.bf16 %v3825, %v3824
          %v3840 = vpack.c.bf16 %v3827, %v3826
          %v3841 = vpack.c.bf16 %v3829, %v3828
          %v3842 = vpack.c.bf16 %v3831, %v3830
          %v3843 = vpack.c.bf16 %v3833, %v3832
          %v3844 = vpack.c.bf16 %v3835, %v3834
          %v3845 = vpack.c.bf16 %v3837, %v3836
          %s3846 = scalar_lea.vmem %s17, 16
          %v3847 = vld [vmem:[%s3846] sm:$0xf]
          %v3848 = vld [vmem:[%s3846 + $0x4] sm:$0xf]
          %v3849 = vld [vmem:[%s3846 + $0x8] sm:$0xf]
          %v3850 = vld [vmem:[%s3846 + $0xc] sm:$0xf]
          %s3851 = scalar_lea.vmem %s18, 1
          %v3852 = vld [vmem:[%s3851] sm:$0x1]
          %v3854 = vperm.slane %v3852, 0
          %v3860 = vunpack.c.l.b16 %v3847
          %v3861 = vunpack.c.l.b16 %v3848
          %v3862 = vunpack.c.l.b16 %v3849
          %v3863 = vunpack.c.l.b16 %v3850
          %v3864 = vpack.c.b16 %v3861, %v3860
          %v3865 = vpack.c.b16 %v3863, %v3862
          %v3869 = vsel %vm2137, %v3838, 0
          %v3872 = vsel %vm2137, %v3839, 0
          %v3875 = vsel %vm2137, %v3840, 0
          %v3878 = vsel %vm2137, %v3841, 0
          %v3881 = vsel %vm2137, %v3842, 0
          %v3884 = vsel %vm2137, %v3843, 0
          %v3887 = vsel %vm2137, %v3844, 0
          %v3890 = vsel %vm2137, %v3845, 0
          %3892 = vmatpush.bf16.msra.mxu0 0
          %3893 = vmatpush.bf16.msra.mxu0 0
          %3894 = vmatpush.bf16.msra.mxu0 0
          %3895 = vmatpush.bf16.msra.mxu0 0
          %3896 = vmatpush.bf16.msra.mxu0 0
          %3897 = vmatpush.bf16.msra.mxu0 0
          %3898 = vmatpush.bf16.msra.mxu0 %v3865
          %3899 = vmatpush.bf16.msra.mxu0 %v3864
          %3900 = vmatmul.bf16.gmra.mxu0 %v3869
          %v3901 = vpop.f32.mrf.mxu0
          %v3902 = vadd.f32 %v3854, %v3901
          %v3903 = vpop.f32.mrf.mxu0
          %v3904 = vadd.f32 %v3854, %v3903
          %3905 = vmatmul.bf16.gmra.mxu0 %v3872
          %v3906 = vpop.f32.mrf.mxu0
          %v3907 = vadd.f32 %v3854, %v3906
          %v3908 = vpop.f32.mrf.mxu0
          %v3909 = vadd.f32 %v3854, %v3908
          %3910 = vmatmul.bf16.gmra.mxu0 %v3875
          %v3911 = vpop.f32.mrf.mxu0
          %v3912 = vadd.f32 %v3854, %v3911
          %v3913 = vpop.f32.mrf.mxu0
          %v3914 = vadd.f32 %v3854, %v3913
          %3915 = vmatmul.bf16.gmra.mxu0 %v3878
          %v3916 = vpop.f32.mrf.mxu0
          %v3917 = vadd.f32 %v3854, %v3916
          %v3918 = vpop.f32.mrf.mxu0
          %v3919 = vadd.f32 %v3854, %v3918
          %3920 = vmatmul.bf16.gmra.mxu0 %v3881
          %v3921 = vpop.f32.mrf.mxu0
          %v3922 = vadd.f32 %v3854, %v3921
          %v3923 = vpop.f32.mrf.mxu0
          %v3924 = vadd.f32 %v3854, %v3923
          %3925 = vmatmul.bf16.gmra.mxu0 %v3884
          %v3926 = vpop.f32.mrf.mxu0
          %v3927 = vadd.f32 %v3854, %v3926
          %v3928 = vpop.f32.mrf.mxu0
          %v3929 = vadd.f32 %v3854, %v3928
          %3930 = vmatmul.bf16.gmra.mxu0 %v3887
          %v3931 = vpop.f32.mrf.mxu0
          %v3932 = vadd.f32 %v3854, %v3931
          %v3933 = vpop.f32.mrf.mxu0
          %v3934 = vadd.f32 %v3854, %v3933
          %3935 = vmatmul.bf16.gmra.mxu0 %v3890
          %v3936 = vpop.f32.mrf.mxu0
          %v3937 = vadd.f32 %v3854, %v3936
          %v3938 = vpop.f32.mrf.mxu0
          %v3939 = vadd.f32 %v3854, %v3938
          %3940 = vdwg.mxu0
          %v3941 = vxor.u32 %v3902, 2147483648
          %v3942 = vxor.u32 %v3904, 2147483648
          %v3943 = vxor.u32 %v3907, 2147483648
          %v3944 = vxor.u32 %v3909, 2147483648
          %v3945 = vxor.u32 %v3912, 2147483648
          %v3946 = vxor.u32 %v3914, 2147483648
          %v3947 = vxor.u32 %v3917, 2147483648
          %v3948 = vxor.u32 %v3919, 2147483648
          %v3949 = vxor.u32 %v3922, 2147483648
          %v3950 = vxor.u32 %v3924, 2147483648
          %v3951 = vxor.u32 %v3927, 2147483648
          %v3952 = vxor.u32 %v3929, 2147483648
          %v3953 = vxor.u32 %v3932, 2147483648
          %v3954 = vxor.u32 %v3934, 2147483648
          %v3955 = vxor.u32 %v3937, 2147483648
          %v3956 = vxor.u32 %v3939, 2147483648
          %v3957 = vmul.f32 %v3941, 1.442695
          %v3958 = vpow.pop %v3957
          %v3959 = vmul.f32 %v3942, 1.442695
          %v3960 = vpow.pop %v3959
          %v3961 = vmul.f32 %v3943, 1.442695
          %v3962 = vpow.pop %v3961
          %v3963 = vmul.f32 %v3944, 1.442695
          %v3964 = vpow.pop %v3963
          %v3965 = vmul.f32 %v3945, 1.442695
          %v3966 = vpow.pop %v3965
          %v3967 = vmul.f32 %v3946, 1.442695
          %v3968 = vpow.pop %v3967
          %v3969 = vmul.f32 %v3947, 1.442695
          %v3970 = vpow.pop %v3969
          %v3971 = vmul.f32 %v3948, 1.442695
          %v3972 = vpow.pop %v3971
          %v3973 = vmul.f32 %v3949, 1.442695
          %v3974 = vpow.pop %v3973
          %v3975 = vmul.f32 %v3950, 1.442695
          %v3976 = vpow.pop %v3975
          %v3977 = vmul.f32 %v3951, 1.442695
          %v3978 = vpow.pop %v3977
          %v3979 = vmul.f32 %v3952, 1.442695
          %v3980 = vpow.pop %v3979
          %v3981 = vmul.f32 %v3953, 1.442695
          %v3982 = vpow.pop %v3981
          %v3983 = vmul.f32 %v3954, 1.442695
          %v3984 = vpow.pop %v3983
          %v3985 = vmul.f32 %v3955, 1.442695
          %v3986 = vpow.pop %v3985
          %v3987 = vmul.f32 %v3956, 1.442695
          %v3988 = vpow.pop %v3987
          %v3989 = vadd.f32 %v3958, 1.0
          %v3990 = vadd.f32 %v3960, 1.0
          %v3991 = vadd.f32 %v3962, 1.0
          %v3992 = vadd.f32 %v3964, 1.0
          %v3993 = vadd.f32 %v3966, 1.0
          %v3994 = vadd.f32 %v3968, 1.0
          %v3995 = vadd.f32 %v3970, 1.0
          %v3996 = vadd.f32 %v3972, 1.0
          %v3997 = vadd.f32 %v3974, 1.0
          %v3998 = vadd.f32 %v3976, 1.0
          %v3999 = vadd.f32 %v3978, 1.0
          %v4000 = vadd.f32 %v3980, 1.0
          %v4001 = vadd.f32 %v3982, 1.0
          %v4002 = vadd.f32 %v3984, 1.0
          %v4003 = vadd.f32 %v3986, 1.0
          %v4004 = vadd.f32 %v3988, 1.0
          %v4005 = vrcp.pop %v3989
          %v4006 = vmul.f32 %v3989, %v4005
          %v4007 = vsub.f32 1.0, %v4006
          %v4008 = vmul.f32 %v4005, %v4007
          %v4009 = vadd.f32 %v4005, %v4008
          %vm4010 = vweird.f32 %v3989
          %vm4011 = vweird.f32 %v4005
          %vm4012 = vmor %vm4010, %vm4011
          %v4013 = vsel %vm4012, %v4005, %v4009
          %v4014 = vand.u32 2147483647, %v3989
          %vm4015 = vcmp.eq.f32.partialorder %v4014, 8.507059e+37
          %v4016 = vand.u32 %v3989, 2147483648
          %v4017 = vor.u32 1.1754944e-38, %v4016
          %v4018 = vsel %vm4015, %v4017, %v4013
          %v4019 = vmul.f32 1.0, %v4018
          %v4020 = vrcp.pop %v3990
          %v4021 = vmul.f32 %v3990, %v4020
          %v4022 = vsub.f32 1.0, %v4021
          %v4023 = vmul.f32 %v4020, %v4022
          %v4024 = vadd.f32 %v4020, %v4023
          %vm4025 = vweird.f32 %v3990
          %vm4026 = vweird.f32 %v4020
          %vm4027 = vmor %vm4025, %vm4026
          %v4028 = vsel %vm4027, %v4020, %v4024
          %v4029 = vand.u32 2147483647, %v3990
          %vm4030 = vcmp.eq.f32.partialorder %v4029, 8.507059e+37
          %v4031 = vand.u32 %v3990, 2147483648
          %v4032 = vor.u32 1.1754944e-38, %v4031
          %v4033 = vsel %vm4030, %v4032, %v4028
          %v4034 = vmul.f32 1.0, %v4033
          %v4035 = vrcp.pop %v3991
          %v4036 = vmul.f32 %v3991, %v4035
          %v4037 = vsub.f32 1.0, %v4036
          %v4038 = vmul.f32 %v4035, %v4037
          %v4039 = vadd.f32 %v4035, %v4038
          %vm4040 = vweird.f32 %v3991
          %vm4041 = vweird.f32 %v4035
          %vm4042 = vmor %vm4040, %vm4041
          %v4043 = vsel %vm4042, %v4035, %v4039
          %v4044 = vand.u32 2147483647, %v3991
          %vm4045 = vcmp.eq.f32.partialorder %v4044, 8.507059e+37
          %v4046 = vand.u32 %v3991, 2147483648
          %v4047 = vor.u32 1.1754944e-38, %v4046
          %v4048 = vsel %vm4045, %v4047, %v4043
          %v4049 = vmul.f32 1.0, %v4048
          %v4050 = vrcp.pop %v3992
          %v4051 = vmul.f32 %v3992, %v4050
          %v4052 = vsub.f32 1.0, %v4051
          %v4053 = vmul.f32 %v4050, %v4052
          %v4054 = vadd.f32 %v4050, %v4053
          %vm4055 = vweird.f32 %v3992
          %vm4056 = vweird.f32 %v4050
          %vm4057 = vmor %vm4055, %vm4056
          %v4058 = vsel %vm4057, %v4050, %v4054
          %v4059 = vand.u32 2147483647, %v3992
          %vm4060 = vcmp.eq.f32.partialorder %v4059, 8.507059e+37
          %v4061 = vand.u32 %v3992, 2147483648
          %v4062 = vor.u32 1.1754944e-38, %v4061
          %v4063 = vsel %vm4060, %v4062, %v4058
          %v4064 = vmul.f32 1.0, %v4063
          %v4065 = vrcp.pop %v3993
          %v4066 = vmul.f32 %v3993, %v4065
          %v4067 = vsub.f32 1.0, %v4066
          %v4068 = vmul.f32 %v4065, %v4067
          %v4069 = vadd.f32 %v4065, %v4068
          %vm4070 = vweird.f32 %v3993
          %vm4071 = vweird.f32 %v4065
          %vm4072 = vmor %vm4070, %vm4071
          %v4073 = vsel %vm4072, %v4065, %v4069
          %v4074 = vand.u32 2147483647, %v3993
          %vm4075 = vcmp.eq.f32.partialorder %v4074, 8.507059e+37
          %v4076 = vand.u32 %v3993, 2147483648
          %v4077 = vor.u32 1.1754944e-38, %v4076
          %v4078 = vsel %vm4075, %v4077, %v4073
          %v4079 = vmul.f32 1.0, %v4078
          %v4080 = vrcp.pop %v3994
          %v4081 = vmul.f32 %v3994, %v4080
          %v4082 = vsub.f32 1.0, %v4081
          %v4083 = vmul.f32 %v4080, %v4082
          %v4084 = vadd.f32 %v4080, %v4083
          %vm4085 = vweird.f32 %v3994
          %vm4086 = vweird.f32 %v4080
          %vm4087 = vmor %vm4085, %vm4086
          %v4088 = vsel %vm4087, %v4080, %v4084
          %v4089 = vand.u32 2147483647, %v3994
          %vm4090 = vcmp.eq.f32.partialorder %v4089, 8.507059e+37
          %v4091 = vand.u32 %v3994, 2147483648
          %v4092 = vor.u32 1.1754944e-38, %v4091
          %v4093 = vsel %vm4090, %v4092, %v4088
          %v4094 = vmul.f32 1.0, %v4093
          %v4095 = vrcp.pop %v3995
          %v4096 = vmul.f32 %v3995, %v4095
          %v4097 = vsub.f32 1.0, %v4096
          %v4098 = vmul.f32 %v4095, %v4097
          %v4099 = vadd.f32 %v4095, %v4098
          %vm4100 = vweird.f32 %v3995
          %vm4101 = vweird.f32 %v4095
          %vm4102 = vmor %vm4100, %vm4101
          %v4103 = vsel %vm4102, %v4095, %v4099
          %v4104 = vand.u32 2147483647, %v3995
          %vm4105 = vcmp.eq.f32.partialorder %v4104, 8.507059e+37
          %v4106 = vand.u32 %v3995, 2147483648
          %v4107 = vor.u32 1.1754944e-38, %v4106
          %v4108 = vsel %vm4105, %v4107, %v4103
          %v4109 = vmul.f32 1.0, %v4108
          %v4110 = vrcp.pop %v3996
          %v4111 = vmul.f32 %v3996, %v4110
          %v4112 = vsub.f32 1.0, %v4111
          %v4113 = vmul.f32 %v4110, %v4112
          %v4114 = vadd.f32 %v4110, %v4113
          %vm4115 = vweird.f32 %v3996
          %vm4116 = vweird.f32 %v4110
          %vm4117 = vmor %vm4115, %vm4116
          %v4118 = vsel %vm4117, %v4110, %v4114
          %v4119 = vand.u32 2147483647, %v3996
          %vm4120 = vcmp.eq.f32.partialorder %v4119, 8.507059e+37
          %v4121 = vand.u32 %v3996, 2147483648
          %v4122 = vor.u32 1.1754944e-38, %v4121
          %v4123 = vsel %vm4120, %v4122, %v4118
          %v4124 = vmul.f32 1.0, %v4123
          %v4125 = vrcp.pop %v3997
          %v4126 = vmul.f32 %v3997, %v4125
          %v4127 = vsub.f32 1.0, %v4126
          %v4128 = vmul.f32 %v4125, %v4127
          %v4129 = vadd.f32 %v4125, %v4128
          %vm4130 = vweird.f32 %v3997
          %vm4131 = vweird.f32 %v4125
          %vm4132 = vmor %vm4130, %vm4131
          %v4133 = vsel %vm4132, %v4125, %v4129
          %v4134 = vand.u32 2147483647, %v3997
          %vm4135 = vcmp.eq.f32.partialorder %v4134, 8.507059e+37
          %v4136 = vand.u32 %v3997, 2147483648
          %v4137 = vor.u32 1.1754944e-38, %v4136
          %v4138 = vsel %vm4135, %v4137, %v4133
          %v4139 = vmul.f32 1.0, %v4138
          %v4140 = vrcp.pop %v3998
          %v4141 = vmul.f32 %v3998, %v4140
          %v4142 = vsub.f32 1.0, %v4141
          %v4143 = vmul.f32 %v4140, %v4142
          %v4144 = vadd.f32 %v4140, %v4143
          %vm4145 = vweird.f32 %v3998
          %vm4146 = vweird.f32 %v4140
          %vm4147 = vmor %vm4145, %vm4146
          %v4148 = vsel %vm4147, %v4140, %v4144
          %v4149 = vand.u32 2147483647, %v3998
          %vm4150 = vcmp.eq.f32.partialorder %v4149, 8.507059e+37
          %v4151 = vand.u32 %v3998, 2147483648
          %v4152 = vor.u32 1.1754944e-38, %v4151
          %v4153 = vsel %vm4150, %v4152, %v4148
          %v4154 = vmul.f32 1.0, %v4153
          %v4155 = vrcp.pop %v3999
          %v4156 = vmul.f32 %v3999, %v4155
          %v4157 = vsub.f32 1.0, %v4156
          %v4158 = vmul.f32 %v4155, %v4157
          %v4159 = vadd.f32 %v4155, %v4158
          %vm4160 = vweird.f32 %v3999
          %vm4161 = vweird.f32 %v4155
          %vm4162 = vmor %vm4160, %vm4161
          %v4163 = vsel %vm4162, %v4155, %v4159
          %v4164 = vand.u32 2147483647, %v3999
          %vm4165 = vcmp.eq.f32.partialorder %v4164, 8.507059e+37
          %v4166 = vand.u32 %v3999, 2147483648
          %v4167 = vor.u32 1.1754944e-38, %v4166
          %v4168 = vsel %vm4165, %v4167, %v4163
          %v4169 = vmul.f32 1.0, %v4168
          %v4170 = vrcp.pop %v4000
          %v4171 = vmul.f32 %v4000, %v4170
          %v4172 = vsub.f32 1.0, %v4171
          %v4173 = vmul.f32 %v4170, %v4172
          %v4174 = vadd.f32 %v4170, %v4173
          %vm4175 = vweird.f32 %v4000
          %vm4176 = vweird.f32 %v4170
          %vm4177 = vmor %vm4175, %vm4176
          %v4178 = vsel %vm4177, %v4170, %v4174
          %v4179 = vand.u32 2147483647, %v4000
          %vm4180 = vcmp.eq.f32.partialorder %v4179, 8.507059e+37
          %v4181 = vand.u32 %v4000, 2147483648
          %v4182 = vor.u32 1.1754944e-38, %v4181
          %v4183 = vsel %vm4180, %v4182, %v4178
          %v4184 = vmul.f32 1.0, %v4183
          %v4185 = vrcp.pop %v4001
          %v4186 = vmul.f32 %v4001, %v4185
          %v4187 = vsub.f32 1.0, %v4186
          %v4188 = vmul.f32 %v4185, %v4187
          %v4189 = vadd.f32 %v4185, %v4188
          %vm4190 = vweird.f32 %v4001
          %vm4191 = vweird.f32 %v4185
          %vm4192 = vmor %vm4190, %vm4191
          %v4193 = vsel %vm4192, %v4185, %v4189
          %v4194 = vand.u32 2147483647, %v4001
          %vm4195 = vcmp.eq.f32.partialorder %v4194, 8.507059e+37
          %v4196 = vand.u32 %v4001, 2147483648
          %v4197 = vor.u32 1.1754944e-38, %v4196
          %v4198 = vsel %vm4195, %v4197, %v4193
          %v4199 = vmul.f32 1.0, %v4198
          %v4200 = vrcp.pop %v4002
          %v4201 = vmul.f32 %v4002, %v4200
          %v4202 = vsub.f32 1.0, %v4201
          %v4203 = vmul.f32 %v4200, %v4202
          %v4204 = vadd.f32 %v4200, %v4203
          %vm4205 = vweird.f32 %v4002
          %vm4206 = vweird.f32 %v4200
          %vm4207 = vmor %vm4205, %vm4206
          %v4208 = vsel %vm4207, %v4200, %v4204
          %v4209 = vand.u32 2147483647, %v4002
          %vm4210 = vcmp.eq.f32.partialorder %v4209, 8.507059e+37
          %v4211 = vand.u32 %v4002, 2147483648
          %v4212 = vor.u32 1.1754944e-38, %v4211
          %v4213 = vsel %vm4210, %v4212, %v4208
          %v4214 = vmul.f32 1.0, %v4213
          %v4215 = vrcp.pop %v4003
          %v4216 = vmul.f32 %v4003, %v4215
          %v4217 = vsub.f32 1.0, %v4216
          %v4218 = vmul.f32 %v4215, %v4217
          %v4219 = vadd.f32 %v4215, %v4218
          %vm4220 = vweird.f32 %v4003
          %vm4221 = vweird.f32 %v4215
          %vm4222 = vmor %vm4220, %vm4221
          %v4223 = vsel %vm4222, %v4215, %v4219
          %v4224 = vand.u32 2147483647, %v4003
          %vm4225 = vcmp.eq.f32.partialorder %v4224, 8.507059e+37
          %v4226 = vand.u32 %v4003, 2147483648
          %v4227 = vor.u32 1.1754944e-38, %v4226
          %v4228 = vsel %vm4225, %v4227, %v4223
          %v4229 = vmul.f32 1.0, %v4228
          %v4230 = vrcp.pop %v4004
          %v4231 = vmul.f32 %v4004, %v4230
          %v4232 = vsub.f32 1.0, %v4231
          %v4233 = vmul.f32 %v4230, %v4232
          %v4234 = vadd.f32 %v4230, %v4233
          %vm4235 = vweird.f32 %v4004
          %vm4236 = vweird.f32 %v4230
          %vm4237 = vmor %vm4235, %vm4236
          %v4238 = vsel %vm4237, %v4230, %v4234
          %v4239 = vand.u32 2147483647, %v4004
          %vm4240 = vcmp.eq.f32.partialorder %v4239, 8.507059e+37
          %v4241 = vand.u32 %v4004, 2147483648
          %v4242 = vor.u32 1.1754944e-38, %v4241
          %v4243 = vsel %vm4240, %v4242, %v4238
          %v4244 = vmul.f32 1.0, %v4243
          %v4245 = vmul.f32 %v3902, %v4019
          %v4246 = vmul.f32 %v3904, %v4034
          %v4247 = vmul.f32 %v3907, %v4049
          %v4248 = vmul.f32 %v3909, %v4064
          %v4249 = vmul.f32 %v3912, %v4079
          %v4250 = vmul.f32 %v3914, %v4094
          %v4251 = vmul.f32 %v3917, %v4109
          %v4252 = vmul.f32 %v3919, %v4124
          %v4253 = vmul.f32 %v3922, %v4139
          %v4254 = vmul.f32 %v3924, %v4154
          %v4255 = vmul.f32 %v3927, %v4169
          %v4256 = vmul.f32 %v3929, %v4184
          %v4257 = vmul.f32 %v3932, %v4199
          %v4258 = vmul.f32 %v3934, %v4214
          %v4259 = vmul.f32 %v3937, %v4229
          %v4260 = vmul.f32 %v3939, %v4244
          %v4261 = vld [vmem:[%s19] sm:$0x1]
          %v4262 = vpack.c.bf16 %v4246, %v4245
          %v4263 = vpack.c.bf16 %v4248, %v4247
          %v4264 = vpack.c.bf16 %v4250, %v4249
          %v4265 = vpack.c.bf16 %v4252, %v4251
          %v4266 = vpack.c.bf16 %v4254, %v4253
          %v4267 = vpack.c.bf16 %v4256, %v4255
          %v4268 = vpack.c.bf16 %v4258, %v4257
          %v4269 = vpack.c.bf16 %v4260, %v4259
          %v4270 = vld [vmem:[#allocation7] sm:$0x1]
          %4272 = vset.pattern.permute.xlu0 0
          %4273 = vperm.xlu0 %4272, %v4270
          %v4274 = vpop.permute.xlu0 %4273
          %v4276 = vperm.slane %v4274, 0
          %v4278 = vsel %vm2137, %v4261, 0
          %v4281 = vsel %vm2137, %v4262, 0
          %v4284 = vsel %vm2137, %v4263, 0
          %v4287 = vsel %vm2137, %v4264, 0
          %v4290 = vsel %vm2137, %v4265, 0
          %v4293 = vsel %vm2137, %v4266, 0
          %v4296 = vsel %vm2137, %v4267, 0
          %v4299 = vsel %vm2137, %v4268, 0
          %v4302 = vsel %vm2137, %v4269, 0
          %4304 = vmatpush.bf16.xpose.msra.mxu0 %v4302
          %4305 = vmatpush.bf16.xpose.msra.mxu0 %v4299
          %4306 = vmatpush.bf16.xpose.msra.mxu0 %v4296
          %4307 = vmatpush.bf16.xpose.msra.mxu0 %v4293
          %4308 = vmatpush.bf16.xpose.msra.mxu0 %v4290
          %4309 = vmatpush.bf16.xpose.msra.mxu0 %v4287
          %4310 = vmatpush.bf16.xpose.msra.mxu0 %v4284
          %4311 = vmatpush.bf16.xpose.msra.mxu0 %v4281
          %4312 = vmatmul.bf16.gmra.mxu0 %v4278
          %v4313 = vpop.f32.mrf.mxu0
          %v4314 = vadd.f32 %v4276, %v4313
          %v4315 = vpop.f32.mrf.mxu0
          %4316 = vdwg.mxu0
          %4317 = vst [vmem:[%s804] sm:$0x1] %v4314
        $region124: #{tpu_custom_call.1} parent=103 // pred_fallthru
          _
        %p4318 = scmp.lt.s32.totalorder %s41, 2
        // Predicated region
        $region125: #{tpu_custom_call.1} parent=103 // pred_check
          %p4319 = pneg %p4318
        $region126: #{tpu_custom_call.1} parent=103 // pred_check_branch
          %4321 = sbr.rel (%p4319) target = $region128
        $region127: #{tpu_custom_call.1} parent=103 // pred_region
          %4322 = vst [vmem:[%s804] sm:$0x1] 0.0
        $region128: #{tpu_custom_call.1} parent=103 // pred_fallthru
          _
        %s4323 = sand.u32 %s558, 1
        %s4324 = scalar_lea.sflag [#allocation9], %s4323
        %s4325 = sand.u32 %s558, 1
        %s4326 = scalar_lea.vmem [#allocation8], %s4325
        // Predicated region
        $region129: #{tpu_custom_call.1} parent=103 // pred_check
          %p4327 = pneg %p568
        $region130: #{tpu_custom_call.1} parent=103 // pred_check_branch
          %4329 = sbr.rel (%p4327) target = $region132
        $region131: #{tpu_custom_call.1} parent=103 // pred_region
          %4331 = vsyncadd %s4324, 0
          %s4332 = scalar_lea.hbm %s21, %s42
          %s4334 = sshll.u32 %s4326, 4
          %s4335 = int_to_ptr.vmem [resolvable:$true] %s4334
          %s4336 = sshll.u32 %s4332, 4
          %s4337 = int_to_ptr.hbm [resolvable:$true] %s4336
          %4339 = dma.vmem_to_hbm [thread:$0]  %s4335, 16, %s4337, %s4324
        $region132: #{tpu_custom_call.1} parent=103 // pred_fallthru
          _
      $region104: #{tpu_custom_call.1} parent=5 // pred_fallthru
        _
      %p4340 = scmp.le.s32.totalorder 2, %s32
      // Predicated region
      $region133: #{tpu_custom_call.1} parent=5 // pred_check
        %p4341 = pneg %p4340
      $region134: #{tpu_custom_call.1} parent=5 // pred_check_branch
        %4343 = sbr.rel (%p4341) target = $region136
      $region135: #{tpu_custom_call.1} parent=5 // pred_region
        %s4344 = ssub.s32 %s32, 2
        // Predicated region
        $region137: #{tpu_custom_call.1} parent=135 // pred_check
          %p4345 = pneg %p574
        $region138: #{tpu_custom_call.1} parent=135 // pred_check_branch
          %4347 = sbr.rel (%p4345) target = $region140
        $region139: #{tpu_custom_call.1} parent=135 // pred_region
          %s4348 = sand.u32 %s559, 1
          %s4349 = scalar_lea.sflag [#allocation9], %s4348
          %s4350 = sand.u32 %s559, 1
          %s4351 = scalar_lea.vmem [#allocation8], %s4350
          %4353 = dma.done %s4349, 16
        $region140: #{tpu_custom_call.1} parent=135 // pred_fallthru
          _
      $region136: #{tpu_custom_call.1} parent=5 // pred_fallthru
        _
    $region6: #{tpu_custom_call.1} parent=1 // loop_footer
      %s36 = sadd.s32 1, %s32
    $region7: #{tpu_custom_call.1} parent=1 // loop_footer_branch
      %31 = sbr.rel target = $region3
    $region8: #{tpu_custom_call.1} parent=1 // loop_exit
      _
    %4354 = vsyncpa [#allocation9], 1
    %s4355 = scalar_lea.sflag [#allocation9], 1
    %4356 = vsyncpa %s4355, 1

</llo_original>
